<compile_context>
chip_gen: v7x
topology: tpu7x:2x2x1
jax: 0.10.0
libtpu: 0.0.40
codegen_flags: <defaults>
</compile_context>

<pallas_src>
import numpy as np
import jax
import jax.numpy as jnp
from jax.experimental import pallas as pl

EPS = 1e-5


def _stable_sigmoid(z):
    z = jnp.clip(z, -30.0, 30.0)
    return 1.0 / (1.0 + jnp.exp(-z))


# ----------------------------------------------------------------------------
# The single fused Pallas kernel
# ----------------------------------------------------------------------------
def dnn_kernel(x1_ref, b1_ref, bn1_ref, s1_ref, st1_ref,
               b2_ref, bn2_ref, s2_ref, st2_ref,
               w1p_ref, fb1_ref, w2r_ref, fb2_ref, out_ref):
    f32 = jnp.float32
    n = x1_ref.shape[0] // 28            # batch size
    n14, n7, n5 = 14 * n, 7 * n, 5 * n

    # ---------------- layer 1: conv(3->6,5) + bias + ReLU + maxpool(2) + BN ----
    # x1 rows: i*14n + hp*7n + hh*n + b   (oh1 = 2*(2*hh+hp) + i)
    # x1 cols: kh*96 + w*3 + c
    x1 = x1_ref[...]                                                   # (28n, 480)
    z0 = jnp.dot(x1, b1_ref[0, :, :], preferred_element_type=f32)      # ow parity j=0
    z1 = jnp.dot(x1, b1_ref[1, :, :], preferred_element_type=f32)      # ow parity j=1
    zj = jnp.maximum(z0, z1)                                           # pool over ow parity
    zi = jnp.maximum(zj[0:n14, :], zj[n14:2 * n14, :])                 # pool over oh parity
    p1 = jnp.maximum(zi + bn1_ref[0:1, :], 0.0)                        # bias + ReLU, (14n, 84)

    # BatchNorm2d(6), training statistics over (N, H, W).  Columns are
    # (pw*6 + c); selector matmuls reduce / broadcast over the pw groups.
    cnt1 = float(p1.shape[0] * 14)
    csum = jnp.dot(jnp.sum(p1, axis=0, keepdims=True), s1_ref[...],
                   preferred_element_type=f32)                          # (1, 6)
    mean_t = jnp.dot(csum * (1.0 / cnt1), st1_ref[...],
                     preferred_element_type=f32)                        # (1, 84)
    cen = p1 - mean_t
    cvar = jnp.dot(jnp.sum(cen * cen, axis=0, keepdims=True), s1_ref[...],
                   preferred_element_type=f32) * (1.0 / cnt1)           # (1, 6) biased var
    inv_t = jnp.dot(jax.lax.rsqrt(cvar + EPS), st1_ref[...],
                    preferred_element_type=f32)                         # (1, 84)
    y1 = cen * inv_t * bn1_ref[1:2, :] + bn1_ref[2:3, :]                # (14n, 84)

    # ---------------- layer 2: conv(6->16,5) + bias + ReLU + maxpool(2) + BN ---
    # y1 rows: hp*7n + hh*n + b  (h1 = 2*hh + hp), cols: pw1*6 + c.
    # For output-row parity i and kernel row kh, the needed input rows
    # h1 = 2*ph2 + i + kh form a contiguous slice (parity-split row order).
    lhs = []
    for t in range(6):                                   # t = i + kh in [0, 5]
        off = (t % 2) * n7 + (t // 2) * n
        lhs.append(y1[off:off + n5, :])                  # (5n, 84), rows (ph2, b)

    pooled2 = None
    for i in range(2):                                   # oh2 parity
        for j in range(2):                               # ow2 parity
            acc = jnp.dot(lhs[i], b2_ref[j, 0, :, :], preferred_element_type=f32)
            for kh in range(1, 5):
                acc = acc + jnp.dot(lhs[i + kh], b2_ref[j, kh, :, :],
                                    preferred_element_type=f32)
            pooled2 = acc if pooled2 is None else jnp.maximum(pooled2, acc)
    p2 = jnp.maximum(pooled2 + bn2_ref[0:1, :], 0.0)                    # (5n, 80)

    cnt2 = float(p2.shape[0] * 5)
    csum2 = jnp.dot(jnp.sum(p2, axis=0, keepdims=True), s2_ref[...],
                    preferred_element_type=f32)                          # (1, 16)
    mean2_t = jnp.dot(csum2 * (1.0 / cnt2), st2_ref[...],
                      preferred_element_type=f32)                        # (1, 80)
    cen2 = p2 - mean2_t
    cvar2 = jnp.dot(jnp.sum(cen2 * cen2, axis=0, keepdims=True), s2_ref[...],
                    preferred_element_type=f32) * (1.0 / cnt2)
    inv2_t = jnp.dot(jax.lax.rsqrt(cvar2 + EPS), st2_ref[...],
                     preferred_element_type=f32)
    y2 = cen2 * inv2_t * bn2_ref[1:2, :] + bn2_ref[2:3, :]               # (5n, 80)

    # ---------------- FC head: Linear(400,120)+ReLU, Linear(120,1)+Sigmoid ----
    # y2 rows are (ph2, b) so rows [hh*n : hh*n+n] are the batch for h==hh;
    # fc1 weight is pre-permuted per hh -> no activation flatten needed.
    h = jnp.dot(y2[0:n, :], w1p_ref[0, :, :], preferred_element_type=f32)
    for hh in range(1, 5):
        h = h + jnp.dot(y2[hh * n:(hh + 1) * n, :], w1p_ref[hh, :, :],
                        preferred_element_type=f32)
    h = jnp.maximum(h + fb1_ref[...], 0.0)                               # (n, 120)
    # Linear(120, 1) as a VPU multiply + lane reduction (avoids an N=1 matmul).
    logits = jnp.sum(h * w2r_ref[...], axis=-1, keepdims=True) + fb2_ref[...]
    out_ref[...] = _stable_sigmoid(logits)                               # (n, 1)


# ----------------------------------------------------------------------------
# Wrapper: weight preprocessing + input slabbing (cheap XLA glue, one launch)
# ----------------------------------------------------------------------------
def _band_weights(w_conv, j, w_in, pw_out, cin, cout):
    """w_conv: (5, 5, cin, cout) HWIO.  Returns (5, w_in*cin, pw_out*cout):
    per kernel-row kh, a banded matrix mapping slab columns (w*cin + c) to
    pooled output columns (pw*cout + co) for width-pool offset j."""
    kw = jnp.arange(w_in)[:, None] - 2 * jnp.arange(pw_out)[None, :] - j     # (w_in, pw)
    valid = (kw >= 0) & (kw < 5)
    g = w_conv[:, jnp.clip(kw, 0, 4), :, :]                  # (5, w_in, pw, cin, cout)
    g = jnp.where(valid[None, :, :, None, None], g, 0.0)
    g = jnp.transpose(g, (0, 1, 3, 2, 4))                    # (kh, w, cin, pw, cout)
    return g.reshape(5, w_in * cin, pw_out * cout)


def _prep_inputs(x_nchw, p):
    f32 = jnp.float32
    n = x_nchw.shape[0]
    x = jnp.transpose(x_nchw, (0, 2, 3, 1)).astype(f32)      # NHWC (n, 32, 32, 3)
    xs = x.reshape(n, 32, 96)                                # slab: (n, h, w*3+c)

    # Row-only im2col over the 5 kernel rows; columns kh*96 + w*3 + c.
    xc = jnp.concatenate([xs[:, kh:kh + 28, :] for kh in range(5)], axis=-1)  # (n,28,480)
    # Reorder rows to (i, hp, hh, n) with oh1 = 2*(2*hh + hp) + i, so both
    # pooling parities become contiguous row blocks for the kernel.
    xc = xc.reshape(n, 14, 2, 480)                            # (n, ph1, i, :)
    xc = jnp.transpose(xc, (2, 1, 0, 3))                      # (i, ph1, n, :)
    xc = xc.reshape(2, 7, 2, n, 480)                          # (i, hh, hp, n, :)
    x1 = jnp.transpose(xc, (0, 2, 1, 3, 4)).reshape(28 * n, 480)

    w1 = p["cw1"].reshape(5, 5, 3, 6)                         # (kh, kw, cin, cout)
    w2 = p["cw2"].reshape(5, 5, 6, 16)
    b1 = jnp.stack([_band_weights(w1, j, 32, 14, 3, 6).reshape(480, 84)
                    for j in range(2)])                       # (2, 480, 84)
    b2 = jnp.stack([_band_weights(w2, j, 14, 5, 6, 16)
                    for j in range(2)])                       # (2, 5, 84, 80)

    # Per-layer (bias, gamma, beta) tiled to the slab column layout.
    bn1 = jnp.stack([jnp.tile(p["cb1"], 14), jnp.tile(p["g1"], 14),
                     jnp.tile(p["be1"], 14)]).astype(f32)     # (3, 84)
    bn2 = jnp.stack([jnp.tile(p["cb2"], 5), jnp.tile(p["g2"], 5),
                     jnp.tile(p["be2"], 5)]).astype(f32)      # (3, 80)
    s1 = jnp.tile(jnp.eye(6, dtype=f32), (14, 1))             # (84, 6) channel selector
    s2 = jnp.tile(jnp.eye(16, dtype=f32), (5, 1))             # (80, 16)

    # fc1 weight permuted from PyTorch's NCHW flatten order (c*25 + h*5 + w)
    # to the kernel layout (h, w*16 + c): no runtime activation transpose.
    w1p = jnp.transpose(p["fw1"].reshape(16, 5, 5, 120),
                        (1, 2, 0, 3)).reshape(5, 80, 120)

    return (x1, b1, bn1, s1, s1.T, b2, bn2, s2, s2.T, w1p,
            p["fb1"].reshape(1, 120), p["fw2"].reshape(1, 120),
            p["fb2"].reshape(1, 1))


def dnn_forward(x_nchw, p):
    n = x_nchw.shape[0]
    args = _prep_inputs(x_nchw, p)
    return pl.pallas_call(
        dnn_kernel,
        out_shape=jax.ShapeDtypeStruct((n, 1), jnp.float32),
    )(*args)


# ----------------------------------------------------------------------------
# Deterministic parameter init (mirrors initialize_weights())
# ----------------------------------------------------------------------------
def _xavier_uniform(key, shape, fan_in, fan_out):
    bound = float(np.sqrt(6.0 / (fan_in + fan_out)))
    return jax.random.uniform(key, shape, jnp.float32, -bound, bound)


def init_params(key):
    ks = jax.random.split(key, 8)
    p = {}
    # Conv1: (6, 3, 5, 5) stored as im2col weight (75, 6), row order (kh, kw, cin).
    p["cw1"] = _xavier_uniform(ks[0], (5 * 5 * 3, 6), fan_in=3 * 25, fan_out=6 * 25)
    p["cb1"] = jnp.full((6,), 0.01, jnp.float32)
    p["g1"] = 0.02 * jax.random.normal(ks[1], (6,), jnp.float32)
    p["be1"] = jnp.full((6,), 0.01, jnp.float32)
    # Conv2: (16, 6, 5, 5) -> (150, 16)
    p["cw2"] = _xavier_uniform(ks[2], (5 * 5 * 6, 16), fan_in=6 * 25, fan_out=16 * 25)
    p["cb2"] = jnp.full((16,), 0.01, jnp.float32)
    p["g2"] = 0.02 * jax.random.normal(ks[3], (16,), jnp.float32)
    p["be2"] = jnp.full((16,), 0.01, jnp.float32)
    # Linear(400, 120) stored transposed (400, 120); Linear(120, 1) -> (120, 1)
    p["fw1"] = _xavier_uniform(ks[4], (400, 120), fan_in=400, fan_out=120)
    p["fb1"] = jnp.full((120,), 0.01, jnp.float32)
    p["fw2"] = _xavier_uniform(ks[5], (120, 1), fan_in=120, fan_out=1)
    p["fb2"] = jnp.full((1,), 0.01, jnp.float32)
    return p


# ----------------------------------------------------------------------------
# Pure-JAX reference (correctness sanity check)
# ----------------------------------------------------------------------------
def ref_forward(x_nchw, p):
    x = jnp.transpose(x_nchw, (0, 2, 3, 1)).astype(jnp.float32)

    def layer(x, w_mat, b, g, be, cin, cout):
        w = w_mat.reshape(5, 5, cin, cout)  # HWIO
        y = jax.lax.conv_general_dilated(
            x, w, (1, 1), "VALID", dimension_numbers=("NHWC", "HWIO", "NHWC"))
        y = jnp.maximum(y + b.reshape(1, 1, 1, -1), 0.0)
        y = jax.lax.reduce_window(y, -jnp.inf, jax.lax.max,
                                  (1, 2, 2, 1), (1, 2, 2, 1), "VALID")
        mean = jnp.mean(y, axis=(0, 1, 2), keepdims=True)
        var = jnp.mean((y - mean) ** 2, axis=(0, 1, 2), keepdims=True)
        return ((y - mean) * jax.lax.rsqrt(var + EPS) * g.reshape(1, 1, 1, -1)
                + be.reshape(1, 1, 1, -1))

    y = layer(x, p["cw1"], p["cb1"], p["g1"], p["be1"], 3, 6)
    y = layer(y, p["cw2"], p["cb2"], p["g2"], p["be2"], 6, 16)
    flat = jnp.transpose(y, (0, 3, 1, 2)).reshape(y.shape[0], -1)
    h = jnp.maximum(flat @ p["fw1"] + p["fb1"], 0.0)
    z = h @ p["fw2"] + p["fb2"]
    return jax.nn.sigmoid(z)


if __name__ == "__main__":
    key = jax.random.PRNGKey(0)
    k_param, k_x = jax.random.split(key)
    params = init_params(k_param)

    # Input implied by the module: 16*5*5 flatten => 3x32x32 images, batch=2.
    x = jax.random.normal(k_x, (2, 3, 32, 32), jnp.float32)

    out = jax.jit(dnn_forward)(x, params)
    out = jax.block_until_ready(out)
    assert out.shape == (2, 1), out.shape

    ref = jax.block_until_ready(ref_forward(x, params))
    np.testing.assert_allclose(np.asarray(out), np.asarray(ref),
                               rtol=1e-2, atol=1e-2)

    print("KERNEL_OK")
</pallas_src>

<mosaic_0001>
module attributes {stable_mosaic.version = 11 : i64} {
  func.func @dnn_kernel(%arg0: memref<56x480xf32, #tpu.memory_space<vmem>>, %arg1: memref<2x480x84xf32, #tpu.memory_space<vmem>>, %arg2: memref<3x84xf32, #tpu.memory_space<vmem>>, %arg3: memref<84x6xf32, #tpu.memory_space<vmem>>, %arg4: memref<6x84xf32, #tpu.memory_space<vmem>>, %arg5: memref<2x5x84x80xf32, #tpu.memory_space<vmem>>, %arg6: memref<3x80xf32, #tpu.memory_space<vmem>>, %arg7: memref<80x16xf32, #tpu.memory_space<vmem>>, %arg8: memref<16x80xf32, #tpu.memory_space<vmem>>, %arg9: memref<5x80x120xf32, #tpu.memory_space<vmem>>, %arg10: memref<1x120xf32, #tpu.memory_space<vmem>>, %arg11: memref<1x120xf32, #tpu.memory_space<vmem>>, %arg12: memref<1x1xf32, #tpu.memory_space<vmem>>, %arg13: memref<2x1xf32, #tpu.memory_space<vmem>>) attributes {dimension_semantics = [], scalar_prefetch = 0 : i64, scratch_operands = 0 : i64, tpu.core_type = #tpu.core_type<tc>} {
    %c0 = arith.constant 0 : index
    %c0_0 = arith.constant 0 : index
    %0 = vector.load %arg0[%c0, %c0_0] : memref<56x480xf32, #tpu.memory_space<vmem>>, vector<56x480xf32>
    %c0_1 = arith.constant 0 : index
    %c0_2 = arith.constant 0 : index
    %c0_3 = arith.constant 0 : index
    %1 = vector.load %arg1[%c0_1, %c0_2, %c0_3] : memref<2x480x84xf32, #tpu.memory_space<vmem>>, vector<1x480x84xf32>
    %2 = vector.shape_cast %1 : vector<1x480x84xf32> to vector<480x84xf32>
    %cst = arith.constant dense<0.000000e+00> : vector<56x84xf32>
    %3 = tpu.matmul %0, %2, %cst {dimension_numbers = #tpu.dot_dimension_numbers<[1], [0], [0], [1], [0, 0, 1, 1], [], []>} : vector<56x480xf32>, vector<480x84xf32>, vector<56x84xf32> -> vector<56x84xf32>
    %c1 = arith.constant 1 : index
    %c0_4 = arith.constant 0 : index
    %c0_5 = arith.constant 0 : index
    %4 = vector.load %arg1[%c1, %c0_4, %c0_5] : memref<2x480x84xf32, #tpu.memory_space<vmem>>, vector<1x480x84xf32>
    %5 = vector.shape_cast %4 : vector<1x480x84xf32> to vector<480x84xf32>
    %cst_6 = arith.constant dense<0.000000e+00> : vector<56x84xf32>
    %6 = tpu.matmul %0, %5, %cst_6 {dimension_numbers = #tpu.dot_dimension_numbers<[1], [0], [0], [1], [0, 0, 1, 1], [], []>} : vector<56x480xf32>, vector<480x84xf32>, vector<56x84xf32> -> vector<56x84xf32>
    %7 = arith.maximumf %3, %6 : vector<56x84xf32>
    %8 = vector.extract_strided_slice %7 {offsets = [0, 0], sizes = [28, 84], strides = [1, 1]} : vector<56x84xf32> to vector<28x84xf32>
    %9 = vector.extract_strided_slice %7 {offsets = [28, 0], sizes = [28, 84], strides = [1, 1]} : vector<56x84xf32> to vector<28x84xf32>
    %10 = arith.maximumf %8, %9 : vector<28x84xf32>
    %c0_7 = arith.constant 0 : index
    %c0_8 = arith.constant 0 : index
    %11 = vector.load %arg2[%c0_7, %c0_8] : memref<3x84xf32, #tpu.memory_space<vmem>>, vector<1x84xf32>
    %12 = vector.broadcast %11 : vector<1x84xf32> to vector<28x84xf32>
    %13 = arith.addf %10, %12 : vector<28x84xf32>
    %cst_9 = arith.constant 0.000000e+00 : f32
    %14 = vector.broadcast %cst_9 : f32 to vector<28x84xf32>
    %15 = arith.maximumf %13, %14 : vector<28x84xf32>
    %cst_10 = arith.constant dense<0.000000e+00> : vector<84xf32>
    %16 = vector.multi_reduction <add>, %15, %cst_10 [0] : vector<28x84xf32> to vector<84xf32>
    %17 = vector.shape_cast %16 : vector<84xf32> to vector<1x84xf32>
    %c0_11 = arith.constant 0 : index
    %c0_12 = arith.constant 0 : index
    %18 = vector.load %arg3[%c0_11, %c0_12] : memref<84x6xf32, #tpu.memory_space<vmem>>, vector<84x6xf32>
    %cst_13 = arith.constant dense<0.000000e+00> : vector<1x6xf32>
    %19 = tpu.matmul %17, %18, %cst_13 {dimension_numbers = #tpu.dot_dimension_numbers<[1], [0], [0], [1], [0, 0, 1, 1], [], []>} : vector<1x84xf32>, vector<84x6xf32>, vector<1x6xf32> -> vector<1x6xf32>
    %cst_14 = arith.constant 0.00255102036 : f32
    %20 = vector.broadcast %cst_14 : f32 to vector<1x6xf32>
    %21 = arith.mulf %19, %20 : vector<1x6xf32>
    %c0_15 = arith.constant 0 : index
    %c0_16 = arith.constant 0 : index
    %22 = vector.load %arg4[%c0_15, %c0_16] : memref<6x84xf32, #tpu.memory_space<vmem>>, vector<6x84xf32>
    %cst_17 = arith.constant dense<0.000000e+00> : vector<1x84xf32>
    %23 = tpu.matmul %21, %22, %cst_17 {dimension_numbers = #tpu.dot_dimension_numbers<[1], [0], [0], [1], [0, 0, 1, 1], [], []>} : vector<1x6xf32>, vector<6x84xf32>, vector<1x84xf32> -> vector<1x84xf32>
    %24 = vector.broadcast %23 : vector<1x84xf32> to vector<28x84xf32>
    %25 = arith.subf %15, %24 : vector<28x84xf32>
    %26 = arith.mulf %25, %25 : vector<28x84xf32>
    %cst_18 = arith.constant dense<0.000000e+00> : vector<84xf32>
    %27 = vector.multi_reduction <add>, %26, %cst_18 [0] : vector<28x84xf32> to vector<84xf32>
    %28 = vector.shape_cast %27 : vector<84xf32> to vector<1x84xf32>
    %c0_19 = arith.constant 0 : index
    %c0_20 = arith.constant 0 : index
    %29 = vector.load %arg3[%c0_19, %c0_20] : memref<84x6xf32, #tpu.memory_space<vmem>>, vector<84x6xf32>
    %cst_21 = arith.constant dense<0.000000e+00> : vector<1x6xf32>
    %30 = tpu.matmul %28, %29, %cst_21 {dimension_numbers = #tpu.dot_dimension_numbers<[1], [0], [0], [1], [0, 0, 1, 1], [], []>} : vector<1x84xf32>, vector<84x6xf32>, vector<1x6xf32> -> vector<1x6xf32>
    %cst_22 = arith.constant 0.00255102036 : f32
    %31 = vector.broadcast %cst_22 : f32 to vector<1x6xf32>
    %32 = arith.mulf %30, %31 : vector<1x6xf32>
    %cst_23 = arith.constant 9.99999974E-6 : f32
    %33 = vector.broadcast %cst_23 : f32 to vector<1x6xf32>
    %34 = arith.addf %32, %33 : vector<1x6xf32>
    %35 = math.rsqrt %34 : vector<1x6xf32>
    %c0_24 = arith.constant 0 : index
    %c0_25 = arith.constant 0 : index
    %36 = vector.load %arg4[%c0_24, %c0_25] : memref<6x84xf32, #tpu.memory_space<vmem>>, vector<6x84xf32>
    %cst_26 = arith.constant dense<0.000000e+00> : vector<1x84xf32>
    %37 = tpu.matmul %35, %36, %cst_26 {dimension_numbers = #tpu.dot_dimension_numbers<[1], [0], [0], [1], [0, 0, 1, 1], [], []>} : vector<1x6xf32>, vector<6x84xf32>, vector<1x84xf32> -> vector<1x84xf32>
    %38 = vector.broadcast %37 : vector<1x84xf32> to vector<28x84xf32>
    %39 = arith.mulf %25, %38 : vector<28x84xf32>
    %c1_27 = arith.constant 1 : index
    %c0_28 = arith.constant 0 : index
    %40 = vector.load %arg2[%c1_27, %c0_28] : memref<3x84xf32, #tpu.memory_space<vmem>>, vector<1x84xf32>
    %41 = vector.broadcast %40 : vector<1x84xf32> to vector<28x84xf32>
    %42 = arith.mulf %39, %41 : vector<28x84xf32>
    %c2 = arith.constant 2 : index
    %c0_29 = arith.constant 0 : index
    %43 = vector.load %arg2[%c2, %c0_29] : memref<3x84xf32, #tpu.memory_space<vmem>>, vector<1x84xf32>
    %44 = vector.broadcast %43 : vector<1x84xf32> to vector<28x84xf32>
    %45 = arith.addf %42, %44 : vector<28x84xf32>
    %46 = vector.extract_strided_slice %45 {offsets = [0, 0], sizes = [10, 84], strides = [1, 1]} : vector<28x84xf32> to vector<10x84xf32>
    %47 = vector.extract_strided_slice %45 {offsets = [14, 0], sizes = [10, 84], strides = [1, 1]} : vector<28x84xf32> to vector<10x84xf32>
    %48 = vector.extract_strided_slice %45 {offsets = [2, 0], sizes = [10, 84], strides = [1, 1]} : vector<28x84xf32> to vector<10x84xf32>
    %49 = vector.extract_strided_slice %45 {offsets = [16, 0], sizes = [10, 84], strides = [1, 1]} : vector<28x84xf32> to vector<10x84xf32>
    %50 = vector.extract_strided_slice %45 {offsets = [4, 0], sizes = [10, 84], strides = [1, 1]} : vector<28x84xf32> to vector<10x84xf32>
    %51 = vector.extract_strided_slice %45 {offsets = [18, 0], sizes = [10, 84], strides = [1, 1]} : vector<28x84xf32> to vector<10x84xf32>
    %c0_30 = arith.constant 0 : index
    %c0_31 = arith.constant 0 : index
    %c0_32 = arith.constant 0 : index
    %c0_33 = arith.constant 0 : index
    %52 = vector.load %arg5[%c0_30, %c0_31, %c0_32, %c0_33] : memref<2x5x84x80xf32, #tpu.memory_space<vmem>>, vector<1x1x84x80xf32>
    %53 = vector.shape_cast %52 : vector<1x1x84x80xf32> to vector<84x80xf32>
    %cst_34 = arith.constant dense<0.000000e+00> : vector<10x80xf32>
    %54 = tpu.matmul %46, %53, %cst_34 {dimension_numbers = #tpu.dot_dimension_numbers<[1], [0], [0], [1], [0, 0, 1, 1], [], []>} : vector<10x84xf32>, vector<84x80xf32>, vector<10x80xf32> -> vector<10x80xf32>
    %c0_35 = arith.constant 0 : index
    %c1_36 = arith.constant 1 : index
    %c0_37 = arith.constant 0 : index
    %c0_38 = arith.constant 0 : index
    %55 = vector.load %arg5[%c0_35, %c1_36, %c0_37, %c0_38] : memref<2x5x84x80xf32, #tpu.memory_space<vmem>>, vector<1x1x84x80xf32>
    %56 = vector.shape_cast %55 : vector<1x1x84x80xf32> to vector<84x80xf32>
    %cst_39 = arith.constant dense<0.000000e+00> : vector<10x80xf32>
    %57 = tpu.matmul %47, %56, %cst_39 {dimension_numbers = #tpu.dot_dimension_numbers<[1], [0], [0], [1], [0, 0, 1, 1], [], []>} : vector<10x84xf32>, vector<84x80xf32>, vector<10x80xf32> -> vector<10x80xf32>
    %58 = arith.addf %54, %57 : vector<10x80xf32>
    %c0_40 = arith.constant 0 : index
    %c2_41 = arith.constant 2 : index
    %c0_42 = arith.constant 0 : index
    %c0_43 = arith.constant 0 : index
    %59 = vector.load %arg5[%c0_40, %c2_41, %c0_42, %c0_43] : memref<2x5x84x80xf32, #tpu.memory_space<vmem>>, vector<1x1x84x80xf32>
    %60 = vector.shape_cast %59 : vector<1x1x84x80xf32> to vector<84x80xf32>
    %cst_44 = arith.constant dense<0.000000e+00> : vector<10x80xf32>
    %61 = tpu.matmul %48, %60, %cst_44 {dimension_numbers = #tpu.dot_dimension_numbers<[1], [0], [0], [1], [0, 0, 1, 1], [], []>} : vector<10x84xf32>, vector<84x80xf32>, vector<10x80xf32> -> vector<10x80xf32>
    %62 = arith.addf %58, %61 : vector<10x80xf32>
    %c0_45 = arith.constant 0 : index
    %c3 = arith.constant 3 : index
    %c0_46 = arith.constant 0 : index
    %c0_47 = arith.constant 0 : index
    %63 = vector.load %arg5[%c0_45, %c3, %c0_46, %c0_47] : memref<2x5x84x80xf32, #tpu.memory_space<vmem>>, vector<1x1x84x80xf32>
    %64 = vector.shape_cast %63 : vector<1x1x84x80xf32> to vector<84x80xf32>
    %cst_48 = arith.constant dense<0.000000e+00> : vector<10x80xf32>
    %65 = tpu.matmul %49, %64, %cst_48 {dimension_numbers = #tpu.dot_dimension_numbers<[1], [0], [0], [1], [0, 0, 1, 1], [], []>} : vector<10x84xf32>, vector<84x80xf32>, vector<10x80xf32> -> vector<10x80xf32>
    %66 = arith.addf %62, %65 : vector<10x80xf32>
    %c0_49 = arith.constant 0 : index
    %c4 = arith.constant 4 : index
    %c0_50 = arith.constant 0 : index
    %c0_51 = arith.constant 0 : index
    %67 = vector.load %arg5[%c0_49, %c4, %c0_50, %c0_51] : memref<2x5x84x80xf32, #tpu.memory_space<vmem>>, vector<1x1x84x80xf32>
    %68 = vector.shape_cast %67 : vector<1x1x84x80xf32> to vector<84x80xf32>
    %cst_52 = arith.constant dense<0.000000e+00> : vector<10x80xf32>
    %69 = tpu.matmul %50, %68, %cst_52 {dimension_numbers = #tpu.dot_dimension_numbers<[1], [0], [0], [1], [0, 0, 1, 1], [], []>} : vector<10x84xf32>, vector<84x80xf32>, vector<10x80xf32> -> vector<10x80xf32>
    %70 = arith.addf %66, %69 : vector<10x80xf32>
    %c1_53 = arith.constant 1 : index
    %c0_54 = arith.constant 0 : index
    %c0_55 = arith.constant 0 : index
    %c0_56 = arith.constant 0 : index
    %71 = vector.load %arg5[%c1_53, %c0_54, %c0_55, %c0_56] : memref<2x5x84x80xf32, #tpu.memory_space<vmem>>, vector<1x1x84x80xf32>
    %72 = vector.shape_cast %71 : vector<1x1x84x80xf32> to vector<84x80xf32>
    %cst_57 = arith.constant dense<0.000000e+00> : vector<10x80xf32>
    %73 = tpu.matmul %46, %72, %cst_57 {dimension_numbers = #tpu.dot_dimension_numbers<[1], [0], [0], [1], [0, 0, 1, 1], [], []>} : vector<10x84xf32>, vector<84x80xf32>, vector<10x80xf32> -> vector<10x80xf32>
    %c1_58 = arith.constant 1 : index
    %c1_59 = arith.constant 1 : index
    %c0_60 = arith.constant 0 : index
    %c0_61 = arith.constant 0 : index
    %74 = vector.load %arg5[%c1_58, %c1_59, %c0_60, %c0_61] : memref<2x5x84x80xf32, #tpu.memory_space<vmem>>, vector<1x1x84x80xf32>
    %75 = vector.shape_cast %74 : vector<1x1x84x80xf32> to vector<84x80xf32>
    %cst_62 = arith.constant dense<0.000000e+00> : vector<10x80xf32>
    %76 = tpu.matmul %47, %75, %cst_62 {dimension_numbers = #tpu.dot_dimension_numbers<[1], [0], [0], [1], [0, 0, 1, 1], [], []>} : vector<10x84xf32>, vector<84x80xf32>, vector<10x80xf32> -> vector<10x80xf32>
    %77 = arith.addf %73, %76 : vector<10x80xf32>
    %c1_63 = arith.constant 1 : index
    %c2_64 = arith.constant 2 : index
    %c0_65 = arith.constant 0 : index
    %c0_66 = arith.constant 0 : index
    %78 = vector.load %arg5[%c1_63, %c2_64, %c0_65, %c0_66] : memref<2x5x84x80xf32, #tpu.memory_space<vmem>>, vector<1x1x84x80xf32>
    %79 = vector.shape_cast %78 : vector<1x1x84x80xf32> to vector<84x80xf32>
    %cst_67 = arith.constant dense<0.000000e+00> : vector<10x80xf32>
    %80 = tpu.matmul %48, %79, %cst_67 {dimension_numbers = #tpu.dot_dimension_numbers<[1], [0], [0], [1], [0, 0, 1, 1], [], []>} : vector<10x84xf32>, vector<84x80xf32>, vector<10x80xf32> -> vector<10x80xf32>
    %81 = arith.addf %77, %80 : vector<10x80xf32>
    %c1_68 = arith.constant 1 : index
    %c3_69 = arith.constant 3 : index
    %c0_70 = arith.constant 0 : index
    %c0_71 = arith.constant 0 : index
    %82 = vector.load %arg5[%c1_68, %c3_69, %c0_70, %c0_71] : memref<2x5x84x80xf32, #tpu.memory_space<vmem>>, vector<1x1x84x80xf32>
    %83 = vector.shape_cast %82 : vector<1x1x84x80xf32> to vector<84x80xf32>
    %cst_72 = arith.constant dense<0.000000e+00> : vector<10x80xf32>
    %84 = tpu.matmul %49, %83, %cst_72 {dimension_numbers = #tpu.dot_dimension_numbers<[1], [0], [0], [1], [0, 0, 1, 1], [], []>} : vector<10x84xf32>, vector<84x80xf32>, vector<10x80xf32> -> vector<10x80xf32>
    %85 = arith.addf %81, %84 : vector<10x80xf32>
    %c1_73 = arith.constant 1 : index
    %c4_74 = arith.constant 4 : index
    %c0_75 = arith.constant 0 : index
    %c0_76 = arith.constant 0 : index
    %86 = vector.load %arg5[%c1_73, %c4_74, %c0_75, %c0_76] : memref<2x5x84x80xf32, #tpu.memory_space<vmem>>, vector<1x1x84x80xf32>
    %87 = vector.shape_cast %86 : vector<1x1x84x80xf32> to vector<84x80xf32>
    %cst_77 = arith.constant dense<0.000000e+00> : vector<10x80xf32>
    %88 = tpu.matmul %50, %87, %cst_77 {dimension_numbers = #tpu.dot_dimension_numbers<[1], [0], [0], [1], [0, 0, 1, 1], [], []>} : vector<10x84xf32>, vector<84x80xf32>, vector<10x80xf32> -> vector<10x80xf32>
    %89 = arith.addf %85, %88 : vector<10x80xf32>
    %90 = arith.maximumf %70, %89 : vector<10x80xf32>
    %c0_78 = arith.constant 0 : index
    %c0_79 = arith.constant 0 : index
    %c0_80 = arith.constant 0 : index
    %c0_81 = arith.constant 0 : index
    %91 = vector.load %arg5[%c0_78, %c0_79, %c0_80, %c0_81] : memref<2x5x84x80xf32, #tpu.memory_space<vmem>>, vector<1x1x84x80xf32>
    %92 = vector.shape_cast %91 : vector<1x1x84x80xf32> to vector<84x80xf32>
    %cst_82 = arith.constant dense<0.000000e+00> : vector<10x80xf32>
    %93 = tpu.matmul %47, %92, %cst_82 {dimension_numbers = #tpu.dot_dimension_numbers<[1], [0], [0], [1], [0, 0, 1, 1], [], []>} : vector<10x84xf32>, vector<84x80xf32>, vector<10x80xf32> -> vector<10x80xf32>
    %c0_83 = arith.constant 0 : index
    %c1_84 = arith.constant 1 : index
    %c0_85 = arith.constant 0 : index
    %c0_86 = arith.constant 0 : index
    %94 = vector.load %arg5[%c0_83, %c1_84, %c0_85, %c0_86] : memref<2x5x84x80xf32, #tpu.memory_space<vmem>>, vector<1x1x84x80xf32>
    %95 = vector.shape_cast %94 : vector<1x1x84x80xf32> to vector<84x80xf32>
    %cst_87 = arith.constant dense<0.000000e+00> : vector<10x80xf32>
    %96 = tpu.matmul %48, %95, %cst_87 {dimension_numbers = #tpu.dot_dimension_numbers<[1], [0], [0], [1], [0, 0, 1, 1], [], []>} : vector<10x84xf32>, vector<84x80xf32>, vector<10x80xf32> -> vector<10x80xf32>
    %97 = arith.addf %93, %96 : vector<10x80xf32>
    %c0_88 = arith.constant 0 : index
    %c2_89 = arith.constant 2 : index
    %c0_90 = arith.constant 0 : index
    %c0_91 = arith.constant 0 : index
    %98 = vector.load %arg5[%c0_88, %c2_89, %c0_90, %c0_91] : memref<2x5x84x80xf32, #tpu.memory_space<vmem>>, vector<1x1x84x80xf32>
    %99 = vector.shape_cast %98 : vector<1x1x84x80xf32> to vector<84x80xf32>
    %cst_92 = arith.constant dense<0.000000e+00> : vector<10x80xf32>
    %100 = tpu.matmul %49, %99, %cst_92 {dimension_numbers = #tpu.dot_dimension_numbers<[1], [0], [0], [1], [0, 0, 1, 1], [], []>} : vector<10x84xf32>, vector<84x80xf32>, vector<10x80xf32> -> vector<10x80xf32>
    %101 = arith.addf %97, %100 : vector<10x80xf32>
    %c0_93 = arith.constant 0 : index
    %c3_94 = arith.constant 3 : index
    %c0_95 = arith.constant 0 : index
    %c0_96 = arith.constant 0 : index
    %102 = vector.load %arg5[%c0_93, %c3_94, %c0_95, %c0_96] : memref<2x5x84x80xf32, #tpu.memory_space<vmem>>, vector<1x1x84x80xf32>
    %103 = vector.shape_cast %102 : vector<1x1x84x80xf32> to vector<84x80xf32>
    %cst_97 = arith.constant dense<0.000000e+00> : vector<10x80xf32>
    %104 = tpu.matmul %50, %103, %cst_97 {dimension_numbers = #tpu.dot_dimension_numbers<[1], [0], [0], [1], [0, 0, 1, 1], [], []>} : vector<10x84xf32>, vector<84x80xf32>, vector<10x80xf32> -> vector<10x80xf32>
    %105 = arith.addf %101, %104 : vector<10x80xf32>
    %c0_98 = arith.constant 0 : index
    %c4_99 = arith.constant 4 : index
    %c0_100 = arith.constant 0 : index
    %c0_101 = arith.constant 0 : index
    %106 = vector.load %arg5[%c0_98, %c4_99, %c0_100, %c0_101] : memref<2x5x84x80xf32, #tpu.memory_space<vmem>>, vector<1x1x84x80xf32>
    %107 = vector.shape_cast %106 : vector<1x1x84x80xf32> to vector<84x80xf32>
    %cst_102 = arith.constant dense<0.000000e+00> : vector<10x80xf32>
    %108 = tpu.matmul %51, %107, %cst_102 {dimension_numbers = #tpu.dot_dimension_numbers<[1], [0], [0], [1], [0, 0, 1, 1], [], []>} : vector<10x84xf32>, vector<84x80xf32>, vector<10x80xf32> -> vector<10x80xf32>
    %109 = arith.addf %105, %108 : vector<10x80xf32>
    %110 = arith.maximumf %90, %109 : vector<10x80xf32>
    %c1_103 = arith.constant 1 : index
    %c0_104 = arith.constant 0 : index
    %c0_105 = arith.constant 0 : index
    %c0_106 = arith.constant 0 : index
    %111 = vector.load %arg5[%c1_103, %c0_104, %c0_105, %c0_106] : memref<2x5x84x80xf32, #tpu.memory_space<vmem>>, vector<1x1x84x80xf32>
    %112 = vector.shape_cast %111 : vector<1x1x84x80xf32> to vector<84x80xf32>
    %cst_107 = arith.constant dense<0.000000e+00> : vector<10x80xf32>
    %113 = tpu.matmul %47, %112, %cst_107 {dimension_numbers = #tpu.dot_dimension_numbers<[1], [0], [0], [1], [0, 0, 1, 1], [], []>} : vector<10x84xf32>, vector<84x80xf32>, vector<10x80xf32> -> vector<10x80xf32>
    %c1_108 = arith.constant 1 : index
    %c1_109 = arith.constant 1 : index
    %c0_110 = arith.constant 0 : index
    %c0_111 = arith.constant 0 : index
    %114 = vector.load %arg5[%c1_108, %c1_109, %c0_110, %c0_111] : memref<2x5x84x80xf32, #tpu.memory_space<vmem>>, vector<1x1x84x80xf32>
    %115 = vector.shape_cast %114 : vector<1x1x84x80xf32> to vector<84x80xf32>
    %cst_112 = arith.constant dense<0.000000e+00> : vector<10x80xf32>
    %116 = tpu.matmul %48, %115, %cst_112 {dimension_numbers = #tpu.dot_dimension_numbers<[1], [0], [0], [1], [0, 0, 1, 1], [], []>} : vector<10x84xf32>, vector<84x80xf32>, vector<10x80xf32> -> vector<10x80xf32>
    %117 = arith.addf %113, %116 : vector<10x80xf32>
    %c1_113 = arith.constant 1 : index
    %c2_114 = arith.constant 2 : index
    %c0_115 = arith.constant 0 : index
    %c0_116 = arith.constant 0 : index
    %118 = vector.load %arg5[%c1_113, %c2_114, %c0_115, %c0_116] : memref<2x5x84x80xf32, #tpu.memory_space<vmem>>, vector<1x1x84x80xf32>
    %119 = vector.shape_cast %118 : vector<1x1x84x80xf32> to vector<84x80xf32>
    %cst_117 = arith.constant dense<0.000000e+00> : vector<10x80xf32>
    %120 = tpu.matmul %49, %119, %cst_117 {dimension_numbers = #tpu.dot_dimension_numbers<[1], [0], [0], [1], [0, 0, 1, 1], [], []>} : vector<10x84xf32>, vector<84x80xf32>, vector<10x80xf32> -> vector<10x80xf32>
    %121 = arith.addf %117, %120 : vector<10x80xf32>
    %c1_118 = arith.constant 1 : index
    %c3_119 = arith.constant 3 : index
    %c0_120 = arith.constant 0 : index
    %c0_121 = arith.constant 0 : index
    %122 = vector.load %arg5[%c1_118, %c3_119, %c0_120, %c0_121] : memref<2x5x84x80xf32, #tpu.memory_space<vmem>>, vector<1x1x84x80xf32>
    %123 = vector.shape_cast %122 : vector<1x1x84x80xf32> to vector<84x80xf32>
    %cst_122 = arith.constant dense<0.000000e+00> : vector<10x80xf32>
    %124 = tpu.matmul %50, %123, %cst_122 {dimension_numbers = #tpu.dot_dimension_numbers<[1], [0], [0], [1], [0, 0, 1, 1], [], []>} : vector<10x84xf32>, vector<84x80xf32>, vector<10x80xf32> -> vector<10x80xf32>
    %125 = arith.addf %121, %124 : vector<10x80xf32>
    %c1_123 = arith.constant 1 : index
    %c4_124 = arith.constant 4 : index
    %c0_125 = arith.constant 0 : index
    %c0_126 = arith.constant 0 : index
    %126 = vector.load %arg5[%c1_123, %c4_124, %c0_125, %c0_126] : memref<2x5x84x80xf32, #tpu.memory_space<vmem>>, vector<1x1x84x80xf32>
    %127 = vector.shape_cast %126 : vector<1x1x84x80xf32> to vector<84x80xf32>
    %cst_127 = arith.constant dense<0.000000e+00> : vector<10x80xf32>
    %128 = tpu.matmul %51, %127, %cst_127 {dimension_numbers = #tpu.dot_dimension_numbers<[1], [0], [0], [1], [0, 0, 1, 1], [], []>} : vector<10x84xf32>, vector<84x80xf32>, vector<10x80xf32> -> vector<10x80xf32>
    %129 = arith.addf %125, %128 : vector<10x80xf32>
    %130 = arith.maximumf %110, %129 : vector<10x80xf32>
    %c0_128 = arith.constant 0 : index
    %c0_129 = arith.constant 0 : index
    %131 = vector.load %arg6[%c0_128, %c0_129] : memref<3x80xf32, #tpu.memory_space<vmem>>, vector<1x80xf32>
    %132 = vector.broadcast %131 : vector<1x80xf32> to vector<10x80xf32>
    %133 = arith.addf %130, %132 : vector<10x80xf32>
    %cst_130 = arith.constant 0.000000e+00 : f32
    %134 = vector.broadcast %cst_130 : f32 to vector<10x80xf32>
    %135 = arith.maximumf %133, %134 : vector<10x80xf32>
    %cst_131 = arith.constant dense<0.000000e+00> : vector<80xf32>
    %136 = vector.multi_reduction <add>, %135, %cst_131 [0] : vector<10x80xf32> to vector<80xf32>
    %137 = vector.shape_cast %136 : vector<80xf32> to vector<1x80xf32>
    %c0_132 = arith.constant 0 : index
    %c0_133 = arith.constant 0 : index
    %138 = vector.load %arg7[%c0_132, %c0_133] : memref<80x16xf32, #tpu.memory_space<vmem>>, vector<80x16xf32>
    %cst_134 = arith.constant dense<0.000000e+00> : vector<1x16xf32>
    %139 = tpu.matmul %137, %138, %cst_134 {dimension_numbers = #tpu.dot_dimension_numbers<[1], [0], [0], [1], [0, 0, 1, 1], [], []>} : vector<1x80xf32>, vector<80x16xf32>, vector<1x16xf32> -> vector<1x16xf32>
    %cst_135 = arith.constant 2.000000e-02 : f32
    %140 = vector.broadcast %cst_135 : f32 to vector<1x16xf32>
    %141 = arith.mulf %139, %140 : vector<1x16xf32>
    %c0_136 = arith.constant 0 : index
    %c0_137 = arith.constant 0 : index
    %142 = vector.load %arg8[%c0_136, %c0_137] : memref<16x80xf32, #tpu.memory_space<vmem>>, vector<16x80xf32>
    %cst_138 = arith.constant dense<0.000000e+00> : vector<1x80xf32>
    %143 = tpu.matmul %141, %142, %cst_138 {dimension_numbers = #tpu.dot_dimension_numbers<[1], [0], [0], [1], [0, 0, 1, 1], [], []>} : vector<1x16xf32>, vector<16x80xf32>, vector<1x80xf32> -> vector<1x80xf32>
    %144 = vector.broadcast %143 : vector<1x80xf32> to vector<10x80xf32>
    %145 = arith.subf %135, %144 : vector<10x80xf32>
    %146 = arith.mulf %145, %145 : vector<10x80xf32>
    %cst_139 = arith.constant dense<0.000000e+00> : vector<80xf32>
    %147 = vector.multi_reduction <add>, %146, %cst_139 [0] : vector<10x80xf32> to vector<80xf32>
    %148 = vector.shape_cast %147 : vector<80xf32> to vector<1x80xf32>
    %c0_140 = arith.constant 0 : index
    %c0_141 = arith.constant 0 : index
    %149 = vector.load %arg7[%c0_140, %c0_141] : memref<80x16xf32, #tpu.memory_space<vmem>>, vector<80x16xf32>
    %cst_142 = arith.constant dense<0.000000e+00> : vector<1x16xf32>
    %150 = tpu.matmul %148, %149, %cst_142 {dimension_numbers = #tpu.dot_dimension_numbers<[1], [0], [0], [1], [0, 0, 1, 1], [], []>} : vector<1x80xf32>, vector<80x16xf32>, vector<1x16xf32> -> vector<1x16xf32>
    %cst_143 = arith.constant 2.000000e-02 : f32
    %151 = vector.broadcast %cst_143 : f32 to vector<1x16xf32>
    %152 = arith.mulf %150, %151 : vector<1x16xf32>
    %cst_144 = arith.constant 9.99999974E-6 : f32
    %153 = vector.broadcast %cst_144 : f32 to vector<1x16xf32>
    %154 = arith.addf %152, %153 : vector<1x16xf32>
    %155 = math.rsqrt %154 : vector<1x16xf32>
    %c0_145 = arith.constant 0 : index
    %c0_146 = arith.constant 0 : index
    %156 = vector.load %arg8[%c0_145, %c0_146] : memref<16x80xf32, #tpu.memory_space<vmem>>, vector<16x80xf32>
    %cst_147 = arith.constant dense<0.000000e+00> : vector<1x80xf32>
    %157 = tpu.matmul %155, %156, %cst_147 {dimension_numbers = #tpu.dot_dimension_numbers<[1], [0], [0], [1], [0, 0, 1, 1], [], []>} : vector<1x16xf32>, vector<16x80xf32>, vector<1x80xf32> -> vector<1x80xf32>
    %158 = vector.broadcast %157 : vector<1x80xf32> to vector<10x80xf32>
    %159 = arith.mulf %145, %158 : vector<10x80xf32>
    %c1_148 = arith.constant 1 : index
    %c0_149 = arith.constant 0 : index
    %160 = vector.load %arg6[%c1_148, %c0_149] : memref<3x80xf32, #tpu.memory_space<vmem>>, vector<1x80xf32>
    %161 = vector.broadcast %160 : vector<1x80xf32> to vector<10x80xf32>
    %162 = arith.mulf %159, %161 : vector<10x80xf32>
    %c2_150 = arith.constant 2 : index
    %c0_151 = arith.constant 0 : index
    %163 = vector.load %arg6[%c2_150, %c0_151] : memref<3x80xf32, #tpu.memory_space<vmem>>, vector<1x80xf32>
    %164 = vector.broadcast %163 : vector<1x80xf32> to vector<10x80xf32>
    %165 = arith.addf %162, %164 : vector<10x80xf32>
    %166 = vector.extract_strided_slice %165 {offsets = [0, 0], sizes = [2, 80], strides = [1, 1]} : vector<10x80xf32> to vector<2x80xf32>
    %c0_152 = arith.constant 0 : index
    %c0_153 = arith.constant 0 : index
    %c0_154 = arith.constant 0 : index
    %167 = vector.load %arg9[%c0_152, %c0_153, %c0_154] : memref<5x80x120xf32, #tpu.memory_space<vmem>>, vector<1x80x120xf32>
    %168 = vector.shape_cast %167 : vector<1x80x120xf32> to vector<80x120xf32>
    %cst_155 = arith.constant dense<0.000000e+00> : vector<2x120xf32>
    %169 = tpu.matmul %166, %168, %cst_155 {dimension_numbers = #tpu.dot_dimension_numbers<[1], [0], [0], [1], [0, 0, 1, 1], [], []>} : vector<2x80xf32>, vector<80x120xf32>, vector<2x120xf32> -> vector<2x120xf32>
    %170 = vector.extract_strided_slice %165 {offsets = [2, 0], sizes = [2, 80], strides = [1, 1]} : vector<10x80xf32> to vector<2x80xf32>
    %c1_156 = arith.constant 1 : index
    %c0_157 = arith.constant 0 : index
    %c0_158 = arith.constant 0 : index
    %171 = vector.load %arg9[%c1_156, %c0_157, %c0_158] : memref<5x80x120xf32, #tpu.memory_space<vmem>>, vector<1x80x120xf32>
    %172 = vector.shape_cast %171 : vector<1x80x120xf32> to vector<80x120xf32>
    %cst_159 = arith.constant dense<0.000000e+00> : vector<2x120xf32>
    %173 = tpu.matmul %170, %172, %cst_159 {dimension_numbers = #tpu.dot_dimension_numbers<[1], [0], [0], [1], [0, 0, 1, 1], [], []>} : vector<2x80xf32>, vector<80x120xf32>, vector<2x120xf32> -> vector<2x120xf32>
    %174 = arith.addf %169, %173 : vector<2x120xf32>
    %175 = vector.extract_strided_slice %165 {offsets = [4, 0], sizes = [2, 80], strides = [1, 1]} : vector<10x80xf32> to vector<2x80xf32>
    %c2_160 = arith.constant 2 : index
    %c0_161 = arith.constant 0 : index
    %c0_162 = arith.constant 0 : index
    %176 = vector.load %arg9[%c2_160, %c0_161, %c0_162] : memref<5x80x120xf32, #tpu.memory_space<vmem>>, vector<1x80x120xf32>
    %177 = vector.shape_cast %176 : vector<1x80x120xf32> to vector<80x120xf32>
    %cst_163 = arith.constant dense<0.000000e+00> : vector<2x120xf32>
    %178 = tpu.matmul %175, %177, %cst_163 {dimension_numbers = #tpu.dot_dimension_numbers<[1], [0], [0], [1], [0, 0, 1, 1], [], []>} : vector<2x80xf32>, vector<80x120xf32>, vector<2x120xf32> -> vector<2x120xf32>
    %179 = arith.addf %174, %178 : vector<2x120xf32>
    %180 = vector.extract_strided_slice %165 {offsets = [6, 0], sizes = [2, 80], strides = [1, 1]} : vector<10x80xf32> to vector<2x80xf32>
    %c3_164 = arith.constant 3 : index
    %c0_165 = arith.constant 0 : index
    %c0_166 = arith.constant 0 : index
    %181 = vector.load %arg9[%c3_164, %c0_165, %c0_166] : memref<5x80x120xf32, #tpu.memory_space<vmem>>, vector<1x80x120xf32>
    %182 = vector.shape_cast %181 : vector<1x80x120xf32> to vector<80x120xf32>
    %cst_167 = arith.constant dense<0.000000e+00> : vector<2x120xf32>
    %183 = tpu.matmul %180, %182, %cst_167 {dimension_numbers = #tpu.dot_dimension_numbers<[1], [0], [0], [1], [0, 0, 1, 1], [], []>} : vector<2x80xf32>, vector<80x120xf32>, vector<2x120xf32> -> vector<2x120xf32>
    %184 = arith.addf %179, %183 : vector<2x120xf32>
    %185 = vector.extract_strided_slice %165 {offsets = [8, 0], sizes = [2, 80], strides = [1, 1]} : vector<10x80xf32> to vector<2x80xf32>
    %c4_168 = arith.constant 4 : index
    %c0_169 = arith.constant 0 : index
    %c0_170 = arith.constant 0 : index
    %186 = vector.load %arg9[%c4_168, %c0_169, %c0_170] : memref<5x80x120xf32, #tpu.memory_space<vmem>>, vector<1x80x120xf32>
    %187 = vector.shape_cast %186 : vector<1x80x120xf32> to vector<80x120xf32>
    %cst_171 = arith.constant dense<0.000000e+00> : vector<2x120xf32>
    %188 = tpu.matmul %185, %187, %cst_171 {dimension_numbers = #tpu.dot_dimension_numbers<[1], [0], [0], [1], [0, 0, 1, 1], [], []>} : vector<2x80xf32>, vector<80x120xf32>, vector<2x120xf32> -> vector<2x120xf32>
    %189 = arith.addf %184, %188 : vector<2x120xf32>
    %c0_172 = arith.constant 0 : index
    %c0_173 = arith.constant 0 : index
    %190 = vector.load %arg10[%c0_172, %c0_173] : memref<1x120xf32, #tpu.memory_space<vmem>>, vector<1x120xf32>
    %191 = vector.broadcast %190 : vector<1x120xf32> to vector<2x120xf32>
    %192 = arith.addf %189, %191 : vector<2x120xf32>
    %cst_174 = arith.constant 0.000000e+00 : f32
    %193 = vector.broadcast %cst_174 : f32 to vector<2x120xf32>
    %194 = arith.maximumf %192, %193 : vector<2x120xf32>
    %c0_175 = arith.constant 0 : index
    %c0_176 = arith.constant 0 : index
    %195 = vector.load %arg11[%c0_175, %c0_176] : memref<1x120xf32, #tpu.memory_space<vmem>>, vector<1x120xf32>
    %196 = vector.broadcast %195 : vector<1x120xf32> to vector<2x120xf32>
    %197 = arith.mulf %194, %196 : vector<2x120xf32>
    %cst_177 = arith.constant dense<0.000000e+00> : vector<2xf32>
    %198 = vector.multi_reduction <add>, %197, %cst_177 [1] : vector<2x120xf32> to vector<2xf32>
    %199 = vector.shape_cast %198 : vector<2xf32> to vector<2x1xf32>
    %c0_178 = arith.constant 0 : index
    %c0_179 = arith.constant 0 : index
    %200 = vector.load %arg12[%c0_178, %c0_179] : memref<1x1xf32, #tpu.memory_space<vmem>>, vector<1x1xf32>
    %201 = vector.broadcast %200 : vector<1x1xf32> to vector<2x1xf32>
    %202 = arith.addf %199, %201 : vector<2x1xf32>
    %cst_180 = arith.constant -3.000000e+01 : f32
    %cst_181 = arith.constant 3.000000e+01 : f32
    %203 = vector.broadcast %cst_180 : f32 to vector<2x1xf32>
    %204 = arith.maximumf %203, %202 : vector<2x1xf32>
    %205 = vector.broadcast %cst_181 : f32 to vector<2x1xf32>
    %206 = arith.minimumf %205, %204 : vector<2x1xf32>
    %cst_182 = arith.constant 0.000000e+00 : f32
    %207 = vector.broadcast %cst_182 : f32 to vector<2x1xf32>
    %208 = arith.subf %207, %206 : vector<2x1xf32>
    %209 = math.exp %208 : vector<2x1xf32>
    %cst_183 = arith.constant 1.000000e+00 : f32
    %210 = vector.broadcast %cst_183 : f32 to vector<2x1xf32>
    %211 = arith.addf %210, %209 : vector<2x1xf32>
    %cst_184 = arith.constant 1.000000e+00 : f32
    %212 = vector.broadcast %cst_184 : f32 to vector<2x1xf32>
    %213 = arith.divf %212, %211 : vector<2x1xf32>
    %c0_185 = arith.constant 0 : index
    %c0_186 = arith.constant 0 : index
    %214 = vector.load %arg13[%c0_185, %c0_186] : memref<2x1xf32, #tpu.memory_space<vmem>>, vector<2x1xf32>
    tpu.vector_store %arg13[%c0_185, %c0_186], %213 {strides = array<i32>} : memref<2x1xf32, #tpu.memory_space<vmem>>, vector<2x1xf32>,
    return
  }
}

</mosaic_0001>

<llo_original>
// kernel: tile.79
$region0: #{tile.79}
  %s0 = inlined_call_operand.vmem [shape: f32[5,16,16], index: 0, kind: input, shape index: {}]
  %s1 = inlined_call_operand.vmem [shape: f32[80,16], index: 1, kind: output, shape index: {}]
  %v2 = vld [vmem:[%s0] ss:$8 sm:$0xf]
  %v3 = vld [vmem:[%s0] ss:$8 sm:$0xf0]
  %vm4 = vcmask 1047556
  %v5 = vsel %vm4, %v3, %v2
  %vm6 = vcmask 130048
  %7 = vst.msk [vmem:[%s1] sm:$0xff] %vm6, %v5
  %s8 = scalar_lea.vmem %s0, 64
  %v9 = vld [vmem:[%s8] ss:$8 sm:$0xf]
  %s10 = scalar_lea.vmem %s0, 64
  %v11 = vld [vmem:[%s10] ss:$8 sm:$0xf0]
  %vm12 = vcmask 1047556
  %v13 = vsel %vm12, %v11, %v9
  %vm14 = vcmask 130048
  %s15 = scalar_lea.vmem %s1, 8
  %16 = vst.msk [vmem:[%s15] sm:$0xff] %vm14, %v13
  %s17 = scalar_lea.vmem %s0, 4
  %v18 = vld [vmem:[%s17] ss:$8 sm:$0xf]
  %s19 = scalar_lea.vmem %s0, 4
  %v20 = vld [vmem:[%s19] ss:$8 sm:$0xf0]
  %vm21 = vcmask 1047556
  %v22 = vsel %vm21, %v20, %v18
  %23 = vrot.lane.b32.xlu0 %v22, 64
  %v24 = vpop.permute.xlu0 %23
  %vm25 = vcmask 654848
  %26 = vst.msk [vmem:[%s1] sm:$0xff] %vm25, %v24
  %s27 = scalar_lea.vmem %s0, 68
  %v28 = vld [vmem:[%s27] ss:$8 sm:$0xf]
  %s29 = scalar_lea.vmem %s0, 68
  %v30 = vld [vmem:[%s29] ss:$8 sm:$0xf0]
  %vm31 = vcmask 1047556
  %v32 = vsel %vm31, %v30, %v28
  %33 = vrot.lane.b32.xlu0 %v32, 64
  %v34 = vpop.permute.xlu0 %33
  %vm35 = vcmask 654848
  %s36 = scalar_lea.vmem %s1, 8
  %37 = vst.msk [vmem:[%s36] sm:$0xff] %vm35, %v34
  %s38 = scalar_lea.vmem %s0, 3
  %v39 = vld [vmem:[%s38] ss:$8 sm:$0xf]
  %s40 = scalar_lea.vmem %s0, 3
  %v41 = vld [vmem:[%s40] ss:$8 sm:$0xf0]
  %vm42 = vcmask 1047556
  %v43 = vsel %vm42, %v41, %v39
  %44 = vrot.lane.b32.xlu0 %v43, 48
  %v45 = vpop.permute.xlu0 %44
  %vm46 = vcmask 523648
  %47 = vst.msk [vmem:[%s1] sm:$0xff] %vm46, %v45
  %s48 = scalar_lea.vmem %s0, 67
  %v49 = vld [vmem:[%s48] ss:$8 sm:$0xf]
  %s50 = scalar_lea.vmem %s0, 67
  %v51 = vld [vmem:[%s50] ss:$8 sm:$0xf0]
  %vm52 = vcmask 1047556
  %v53 = vsel %vm52, %v51, %v49
  %54 = vrot.lane.b32.xlu0 %v53, 48
  %v55 = vpop.permute.xlu0 %54
  %vm56 = vcmask 523648
  %s57 = scalar_lea.vmem %s1, 8
  %58 = vst.msk [vmem:[%s57] sm:$0xff] %vm56, %v55
  %s59 = scalar_lea.vmem %s0, 2
  %v60 = vld [vmem:[%s59] ss:$8 sm:$0xf]
  %s61 = scalar_lea.vmem %s0, 2
  %v62 = vld [vmem:[%s61] ss:$8 sm:$0xf0]
  %vm63 = vcmask 1047556
  %v64 = vsel %vm63, %v62, %v60
  %65 = vrot.lane.b32.xlu0 %v64, 32
  %v66 = vpop.permute.xlu0 %65
  %vm67 = vcmask 392448
  %68 = vst.msk [vmem:[%s1] sm:$0xff] %vm67, %v66
  %s69 = scalar_lea.vmem %s0, 66
  %v70 = vld [vmem:[%s69] ss:$8 sm:$0xf]
  %s71 = scalar_lea.vmem %s0, 66
  %v72 = vld [vmem:[%s71] ss:$8 sm:$0xf0]
  %vm73 = vcmask 1047556
  %v74 = vsel %vm73, %v72, %v70
  %75 = vrot.lane.b32.xlu0 %v74, 32
  %v76 = vpop.permute.xlu0 %75
  %vm77 = vcmask 392448
  %s78 = scalar_lea.vmem %s1, 8
  %79 = vst.msk [vmem:[%s78] sm:$0xff] %vm77, %v76
  %s80 = scalar_lea.vmem %s0, 1
  %v81 = vld [vmem:[%s80] ss:$8 sm:$0xf]
  %s82 = scalar_lea.vmem %s0, 1
  %v83 = vld [vmem:[%s82] ss:$8 sm:$0xf0]
  %vm84 = vcmask 1047556
  %v85 = vsel %vm84, %v83, %v81
  %86 = vrot.lane.b32.xlu0 %v85, 16
  %v87 = vpop.permute.xlu0 %86
  %vm88 = vcmask 261248
  %89 = vst.msk [vmem:[%s1] sm:$0xff] %vm88, %v87
  %s90 = scalar_lea.vmem %s0, 65
  %v91 = vld [vmem:[%s90] ss:$8 sm:$0xf]
  %s92 = scalar_lea.vmem %s0, 65
  %v93 = vld [vmem:[%s92] ss:$8 sm:$0xf0]
  %vm94 = vcmask 1047556
  %v95 = vsel %vm94, %v93, %v91
  %96 = vrot.lane.b32.xlu0 %v95, 16
  %v97 = vpop.permute.xlu0 %96
  %vm98 = vcmask 261248
  %s99 = scalar_lea.vmem %s1, 8
  %100 = vst.msk [vmem:[%s99] sm:$0xff] %vm98, %v97

// kernel: tile.74
$region0: #{tile.74}
  %s0 = inlined_call_operand.vmem [shape: f32[14,6,6], index: 0, kind: input, shape index: {}]
  %s1 = inlined_call_operand.vmem [shape: f32[84,6], index: 1, kind: output, shape index: {}]
  %s2 = smov 3
  %v3 = vld [vmem:[%s0] ss:$16 sm:%s2]
  %s4 = smov 12
  %v5 = vld [vmem:[%s0] ss:$16 sm:%s4]
  %vm6 = vcmask 1043458
  %v7 = vsel %vm6, %v5, %v3
  %s8 = smov 48
  %v9 = vld [vmem:[%s0] ss:$16 sm:%s8]
  %vm10 = vcmask 1045508
  %v11 = vsel %vm10, %v9, %v7
  %vm12 = vcmask 48128
  %13 = vst.msk [vmem:[%s1] sm:$0x3f] %vm12, %v11
  %s14 = scalar_lea.vmem %s0, 13
  %s15 = smov 3
  %v16 = vld [vmem:[%s14] ss:$16 sm:%s15]
  %s17 = scalar_lea.vmem %s0, 13
  %s18 = smov 12
  %v19 = vld [vmem:[%s17] ss:$16 sm:%s18]
  %vm20 = vcmask 1043458
  %v21 = vsel %vm20, %v19, %v16
  %s22 = scalar_lea.vmem %s0, 13
  %s23 = smov 48
  %v24 = vld [vmem:[%s22] ss:$16 sm:%s23]
  %vm25 = vcmask 1045508
  %v26 = vsel %vm25, %v24, %v21
  %27 = vrot.lane.b32.xlu0 %v26, 78
  %v28 = vpop.permute.xlu0 %27
  %vm29 = vcmask 687728
  %30 = vst.msk [vmem:[%s1] sm:$0x3f] %vm29, %v28
  %s31 = scalar_lea.vmem %s0, 12
  %s32 = smov 3
  %v33 = vld [vmem:[%s31] ss:$16 sm:%s32]
  %s34 = scalar_lea.vmem %s0, 12
  %s35 = smov 12
  %v36 = vld [vmem:[%s34] ss:$16 sm:%s35]
  %vm37 = vcmask 1043458
  %v38 = vsel %vm37, %v36, %v33
  %s39 = scalar_lea.vmem %s0, 12
  %s40 = smov 48
  %v41 = vld [vmem:[%s39] ss:$16 sm:%s40]
  %vm42 = vcmask 1045508
  %v43 = vsel %vm42, %v41, %v38
  %44 = vrot.lane.b32.xlu0 %v43, 72
  %v45 = vpop.permute.xlu0 %44
  %vm46 = vcmask 638528
  %47 = vst.msk [vmem:[%s1] sm:$0x3f] %vm46, %v45
  %s48 = scalar_lea.vmem %s0, 11
  %s49 = smov 3
  %v50 = vld [vmem:[%s48] ss:$16 sm:%s49]
  %s51 = scalar_lea.vmem %s0, 11
  %s52 = smov 12
  %v53 = vld [vmem:[%s51] ss:$16 sm:%s52]
  %vm54 = vcmask 1043458
  %v55 = vsel %vm54, %v53, %v50
  %s56 = scalar_lea.vmem %s0, 11
  %s57 = smov 48
  %v58 = vld [vmem:[%s56] ss:$16 sm:%s57]
  %vm59 = vcmask 1045508
  %v60 = vsel %vm59, %v58, %v55
  %61 = vrot.lane.b32.xlu0 %v60, 66
  %v62 = vpop.permute.xlu0 %61
  %vm63 = vcmask 589328
  %64 = vst.msk [vmem:[%s1] sm:$0x3f] %vm63, %v62
  %s65 = scalar_lea.vmem %s0, 10
  %s66 = smov 3
  %v67 = vld [vmem:[%s65] ss:$16 sm:%s66]
  %s68 = scalar_lea.vmem %s0, 10
  %s69 = smov 12
  %v70 = vld [vmem:[%s68] ss:$16 sm:%s69]
  %vm71 = vcmask 1043458
  %v72 = vsel %vm71, %v70, %v67
  %s73 = scalar_lea.vmem %s0, 10
  %s74 = smov 48
  %v75 = vld [vmem:[%s73] ss:$16 sm:%s74]
  %vm76 = vcmask 1045508
  %v77 = vsel %vm76, %v75, %v72
  %78 = vrot.lane.b32.xlu0 %v77, 60
  %v79 = vpop.permute.xlu0 %78
  %vm80 = vcmask 540128
  %81 = vst.msk [vmem:[%s1] sm:$0x3f] %vm80, %v79
  %s82 = scalar_lea.vmem %s0, 9
  %s83 = smov 3
  %v84 = vld [vmem:[%s82] ss:$16 sm:%s83]
  %s85 = scalar_lea.vmem %s0, 9
  %s86 = smov 12
  %v87 = vld [vmem:[%s85] ss:$16 sm:%s86]
  %vm88 = vcmask 1043458
  %v89 = vsel %vm88, %v87, %v84
  %s90 = scalar_lea.vmem %s0, 9
  %s91 = smov 48
  %v92 = vld [vmem:[%s90] ss:$16 sm:%s91]
  %vm93 = vcmask 1045508
  %v94 = vsel %vm93, %v92, %v89
  %95 = vrot.lane.b32.xlu0 %v94, 54
  %v96 = vpop.permute.xlu0 %95
  %vm97 = vcmask 490928
  %98 = vst.msk [vmem:[%s1] sm:$0x3f] %vm97, %v96
  %s99 = scalar_lea.vmem %s0, 8
  %s100 = smov 3
  %v101 = vld [vmem:[%s99] ss:$16 sm:%s100]
  %s102 = scalar_lea.vmem %s0, 8
  %s103 = smov 12
  %v104 = vld [vmem:[%s102] ss:$16 sm:%s103]
  %vm105 = vcmask 1043458
  %v106 = vsel %vm105, %v104, %v101
  %s107 = scalar_lea.vmem %s0, 8
  %s108 = smov 48
  %v109 = vld [vmem:[%s107] ss:$16 sm:%s108]
  %vm110 = vcmask 1045508
  %v111 = vsel %vm110, %v109, %v106
  %112 = vrot.lane.b32.xlu0 %v111, 48
  %v113 = vpop.permute.xlu0 %112
  %vm114 = vcmask 441728
  %115 = vst.msk [vmem:[%s1] sm:$0x3f] %vm114, %v113
  %s116 = scalar_lea.vmem %s0, 7
  %s117 = smov 3
  %v118 = vld [vmem:[%s116] ss:$16 sm:%s117]
  %s119 = scalar_lea.vmem %s0, 7
  %s120 = smov 12
  %v121 = vld [vmem:[%s119] ss:$16 sm:%s120]
  %vm122 = vcmask 1043458
  %v123 = vsel %vm122, %v121, %v118
  %s124 = scalar_lea.vmem %s0, 7
  %s125 = smov 48
  %v126 = vld [vmem:[%s124] ss:$16 sm:%s125]
  %vm127 = vcmask 1045508
  %v128 = vsel %vm127, %v126, %v123
  %129 = vrot.lane.b32.xlu0 %v128, 42
  %v130 = vpop.permute.xlu0 %129
  %vm131 = vcmask 392528
  %132 = vst.msk [vmem:[%s1] sm:$0x3f] %vm131, %v130
  %s133 = scalar_lea.vmem %s0, 6
  %s134 = smov 3
  %v135 = vld [vmem:[%s133] ss:$16 sm:%s134]
  %s136 = scalar_lea.vmem %s0, 6
  %s137 = smov 12
  %v138 = vld [vmem:[%s136] ss:$16 sm:%s137]
  %vm139 = vcmask 1043458
  %v140 = vsel %vm139, %v138, %v135
  %s141 = scalar_lea.vmem %s0, 6
  %s142 = smov 48
  %v143 = vld [vmem:[%s141] ss:$16 sm:%s142]
  %vm144 = vcmask 1045508
  %v145 = vsel %vm144, %v143, %v140
  %146 = vrot.lane.b32.xlu0 %v145, 36
  %v147 = vpop.permute.xlu0 %146
  %vm148 = vcmask 343328
  %149 = vst.msk [vmem:[%s1] sm:$0x3f] %vm148, %v147
  %s150 = scalar_lea.vmem %s0, 5
  %s151 = smov 3
  %v152 = vld [vmem:[%s150] ss:$16 sm:%s151]
  %s153 = scalar_lea.vmem %s0, 5
  %s154 = smov 12
  %v155 = vld [vmem:[%s153] ss:$16 sm:%s154]
  %vm156 = vcmask 1043458
  %v157 = vsel %vm156, %v155, %v152
  %s158 = scalar_lea.vmem %s0, 5
  %s159 = smov 48
  %v160 = vld [vmem:[%s158] ss:$16 sm:%s159]
  %vm161 = vcmask 1045508
  %v162 = vsel %vm161, %v160, %v157
  %163 = vrot.lane.b32.xlu0 %v162, 30
  %v164 = vpop.permute.xlu0 %163
  %vm165 = vcmask 294128
  %166 = vst.msk [vmem:[%s1] sm:$0x3f] %vm165, %v164
  %s167 = scalar_lea.vmem %s0, 4
  %s168 = smov 3
  %v169 = vld [vmem:[%s167] ss:$16 sm:%s168]
  %s170 = scalar_lea.vmem %s0, 4
  %s171 = smov 12
  %v172 = vld [vmem:[%s170] ss:$16 sm:%s171]
  %vm173 = vcmask 1043458
  %v174 = vsel %vm173, %v172, %v169
  %s175 = scalar_lea.vmem %s0, 4
  %s176 = smov 48
  %v177 = vld [vmem:[%s175] ss:$16 sm:%s176]
  %vm178 = vcmask 1045508
  %v179 = vsel %vm178, %v177, %v174
  %180 = vrot.lane.b32.xlu0 %v179, 24
  %v181 = vpop.permute.xlu0 %180
  %vm182 = vcmask 244928
  %183 = vst.msk [vmem:[%s1] sm:$0x3f] %vm182, %v181
  %s184 = scalar_lea.vmem %s0, 3
  %s185 = smov 3
  %v186 = vld [vmem:[%s184] ss:$16 sm:%s185]
  %s187 = scalar_lea.vmem %s0, 3
  %s188 = smov 12
  %v189 = vld [vmem:[%s187] ss:$16 sm:%s188]
  %vm190 = vcmask 1043458
  %v191 = vsel %vm190, %v189, %v186
  %s192 = scalar_lea.vmem %s0, 3
  %s193 = smov 48
  %v194 = vld [vmem:[%s192] ss:$16 sm:%s193]
  %vm195 = vcmask 1045508
  %v196 = vsel %vm195, %v194, %v191
  %197 = vrot.lane.b32.xlu0 %v196, 18
  %v198 = vpop.permute.xlu0 %197
  %vm199 = vcmask 195728
  %200 = vst.msk [vmem:[%s1] sm:$0x3f] %vm199, %v198
  %s201 = scalar_lea.vmem %s0, 2
  %s202 = smov 3
  %v203 = vld [vmem:[%s201] ss:$16 sm:%s202]
  %s204 = scalar_lea.vmem %s0, 2
  %s205 = smov 12
  %v206 = vld [vmem:[%s204] ss:$16 sm:%s205]
  %vm207 = vcmask 1043458
  %v208 = vsel %vm207, %v206, %v203
  %s209 = scalar_lea.vmem %s0, 2
  %s210 = smov 48
  %v211 = vld [vmem:[%s209] ss:$16 sm:%s210]
  %vm212 = vcmask 1045508
  %v213 = vsel %vm212, %v211, %v208
  %214 = vrot.lane.b32.xlu0 %v213, 12
  %v215 = vpop.permute.xlu0 %214
  %vm216 = vcmask 146528
  %217 = vst.msk [vmem:[%s1] sm:$0x3f] %vm216, %v215
  %s218 = scalar_lea.vmem %s0, 1
  %s219 = smov 3
  %v220 = vld [vmem:[%s218] ss:$16 sm:%s219]
  %s221 = scalar_lea.vmem %s0, 1
  %s222 = smov 12
  %v223 = vld [vmem:[%s221] ss:$16 sm:%s222]
  %vm224 = vcmask 1043458
  %v225 = vsel %vm224, %v223, %v220
  %s226 = scalar_lea.vmem %s0, 1
  %s227 = smov 48
  %v228 = vld [vmem:[%s226] ss:$16 sm:%s227]
  %vm229 = vcmask 1045508
  %v230 = vsel %vm229, %v228, %v225
  %231 = vrot.lane.b32.xlu0 %v230, 6
  %v232 = vpop.permute.xlu0 %231
  %vm233 = vcmask 97328
  %234 = vst.msk [vmem:[%s1] sm:$0x3f] %vm233, %v232

// kernel: tile.43
$region0: #{tile.43}
  #allocation0 [shape = 's32[1]{0}', space=sflag, size = 0x4, scoped, tag = 'scoped memory for tile.43']
  %s0 = inlined_call_operand.vmem [shape: f32[6], index: 0, kind: input, shape index: {}]
  %s1 = inlined_call_operand.vmem [shape: f32[14,6], index: 1, kind: output, shape index: {}]
  // Predicated region
  $region2: #{tile.43} parent=0 // pred_check
    _
  $region3: #{tile.43} parent=0 // pred_check_branch
    %3 = sbr.rel (0) target = $region5
  $region4: #{tile.43} parent=0 // pred_region
    _
  $region5: #{tile.43} parent=0 // pred_fallthru
    _
  %v4 = vld [vmem:[%s0] ss:$0 sm:$0xff]
  %5 = vst [vmem:[%s1] sm:$0xff] %v4
  %s6 = scalar_lea.vmem %s1, 8
  %7 = vst [vmem:[%s6] sm:$0xff] %v4

// kernel: tile.52
$region0: #{tile.52}
  %s0 = inlined_call_operand.vmem [shape: f32[14,6], index: 0, kind: input, shape index: {}]
  %s1 = inlined_call_operand.vmem [shape: f32[1,84], index: 1, kind: output, shape index: {}]
  $region1: #{tile.52} parent=0
    #allocation0 [shape = 'u8[4096]{0}', space=vmem, size = 0x1000, scoped, tag = 'scoped mem for output reshape']
    %v2 = vld [vmem:[%s0] sm:$0x1]
    %vm3 = vcmask 48128
    %4 = vst.msk [vmem:[#allocation0] sm:$0x1] %vm3, %v2
    %s5 = scalar_lea.vmem %s0, 13
    %v6 = vld [vmem:[%s5] sm:$0x1]
    %7 = vrot.lane.b32.xlu0 %v6, 78
    %v8 = vpop.permute.xlu0 %7
    %vm9 = vcmask 687728
    %10 = vst.msk [vmem:[#allocation0] sm:$0x1] %vm9, %v8
    %s11 = scalar_lea.vmem %s0, 12
    %v12 = vld [vmem:[%s11] sm:$0x1]
    %13 = vrot.lane.b32.xlu0 %v12, 72
    %v14 = vpop.permute.xlu0 %13
    %vm15 = vcmask 638528
    %16 = vst.msk [vmem:[#allocation0] sm:$0x1] %vm15, %v14
    %s17 = scalar_lea.vmem %s0, 11
    %v18 = vld [vmem:[%s17] sm:$0x1]
    %19 = vrot.lane.b32.xlu0 %v18, 66
    %v20 = vpop.permute.xlu0 %19
    %vm21 = vcmask 589328
    %22 = vst.msk [vmem:[#allocation0] sm:$0x1] %vm21, %v20
    %s23 = scalar_lea.vmem %s0, 10
    %v24 = vld [vmem:[%s23] sm:$0x1]
    %25 = vrot.lane.b32.xlu0 %v24, 60
    %v26 = vpop.permute.xlu0 %25
    %vm27 = vcmask 540128
    %28 = vst.msk [vmem:[#allocation0] sm:$0x1] %vm27, %v26
    %s29 = scalar_lea.vmem %s0, 9
    %v30 = vld [vmem:[%s29] sm:$0x1]
    %31 = vrot.lane.b32.xlu0 %v30, 54
    %v32 = vpop.permute.xlu0 %31
    %vm33 = vcmask 490928
    %34 = vst.msk [vmem:[#allocation0] sm:$0x1] %vm33, %v32
    %s35 = scalar_lea.vmem %s0, 8
    %v36 = vld [vmem:[%s35] sm:$0x1]
    %37 = vrot.lane.b32.xlu0 %v36, 48
    %v38 = vpop.permute.xlu0 %37
    %vm39 = vcmask 441728
    %40 = vst.msk [vmem:[#allocation0] sm:$0x1] %vm39, %v38
    %s41 = scalar_lea.vmem %s0, 7
    %v42 = vld [vmem:[%s41] sm:$0x1]
    %43 = vrot.lane.b32.xlu0 %v42, 42
    %v44 = vpop.permute.xlu0 %43
    %vm45 = vcmask 392528
    %46 = vst.msk [vmem:[#allocation0] sm:$0x1] %vm45, %v44
    %s47 = scalar_lea.vmem %s0, 6
    %v48 = vld [vmem:[%s47] sm:$0x1]
    %49 = vrot.lane.b32.xlu0 %v48, 36
    %v50 = vpop.permute.xlu0 %49
    %vm51 = vcmask 343328
    %52 = vst.msk [vmem:[#allocation0] sm:$0x1] %vm51, %v50
    %s53 = scalar_lea.vmem %s0, 5
    %v54 = vld [vmem:[%s53] sm:$0x1]
    %55 = vrot.lane.b32.xlu0 %v54, 30
    %v56 = vpop.permute.xlu0 %55
    %vm57 = vcmask 294128
    %58 = vst.msk [vmem:[#allocation0] sm:$0x1] %vm57, %v56
    %s59 = scalar_lea.vmem %s0, 4
    %v60 = vld [vmem:[%s59] sm:$0x1]
    %61 = vrot.lane.b32.xlu0 %v60, 24
    %v62 = vpop.permute.xlu0 %61
    %vm63 = vcmask 244928
    %64 = vst.msk [vmem:[#allocation0] sm:$0x1] %vm63, %v62
    %s65 = scalar_lea.vmem %s0, 3
    %v66 = vld [vmem:[%s65] sm:$0x1]
    %67 = vrot.lane.b32.xlu0 %v66, 18
    %v68 = vpop.permute.xlu0 %67
    %vm69 = vcmask 195728
    %70 = vst.msk [vmem:[#allocation0] sm:$0x1] %vm69, %v68
    %s71 = scalar_lea.vmem %s0, 2
    %v72 = vld [vmem:[%s71] sm:$0x1]
    %73 = vrot.lane.b32.xlu0 %v72, 12
    %v74 = vpop.permute.xlu0 %73
    %vm75 = vcmask 146528
    %76 = vst.msk [vmem:[#allocation0] sm:$0x1] %vm75, %v74
    %s77 = scalar_lea.vmem %s0, 1
    %v78 = vld [vmem:[%s77] sm:$0x1]
    %79 = vrot.lane.b32.xlu0 %v78, 6
    %v80 = vpop.permute.xlu0 %79
    %vm81 = vcmask 97328
    %82 = vst.msk [vmem:[#allocation0] sm:$0x1] %vm81, %v80
    %s84 = sshllo.u32 0, 1
    %v86 = vld [vmem:[#allocation0] sm:%s84]
    %s87 = sshllo.u32 0, 1
    %88 = vst [vmem:[%s1] sm:%s87] %v86

// kernel: tile.58
$region0: #{tile.58}
  #allocation0 [shape = 's32[1]{0}', space=sflag, size = 0x4, scoped, tag = 'scoped memory for tile.58']
  %s0 = inlined_call_operand.vmem [shape: f32[16], index: 0, kind: input, shape index: {}]
  %s1 = inlined_call_operand.vmem [shape: f32[5,16], index: 1, kind: output, shape index: {}]
  // Predicated region
  $region2: #{tile.58} parent=0 // pred_check
    _
  $region3: #{tile.58} parent=0 // pred_check_branch
    %3 = sbr.rel (0) target = $region5
  $region4: #{tile.58} parent=0 // pred_region
    _
  $region5: #{tile.58} parent=0 // pred_fallthru
    _
  %v4 = vld [vmem:[%s0] ss:$0 sm:$0xff]
  %5 = vst [vmem:[%s1] sm:$0xff] %v4

// kernel: tile.67
$region0: #{tile.67}
  %s0 = inlined_call_operand.vmem [shape: f32[5,16], index: 0, kind: input, shape index: {}]
  %s1 = inlined_call_operand.vmem [shape: f32[1,80], index: 1, kind: output, shape index: {}]
  $region1: #{tile.67} parent=0
    #allocation0 [shape = 'u8[4096]{0}', space=vmem, size = 0x1000, scoped, tag = 'scoped mem for output reshape']
    %v2 = vld [vmem:[%s0] sm:$0x1]
    %vm3 = vcmask 130048
    %4 = vst.msk [vmem:[#allocation0] sm:$0x1] %vm3, %v2
    %s5 = scalar_lea.vmem %s0, 4
    %v6 = vld [vmem:[%s5] sm:$0x1]
    %7 = vrot.lane.b32.xlu0 %v6, 64
    %v8 = vpop.permute.xlu0 %7
    %vm9 = vcmask 654848
    %10 = vst.msk [vmem:[#allocation0] sm:$0x1] %vm9, %v8
    %s11 = scalar_lea.vmem %s0, 3
    %v12 = vld [vmem:[%s11] sm:$0x1]
    %13 = vrot.lane.b32.xlu0 %v12, 48
    %v14 = vpop.permute.xlu0 %13
    %vm15 = vcmask 523648
    %16 = vst.msk [vmem:[#allocation0] sm:$0x1] %vm15, %v14
    %s17 = scalar_lea.vmem %s0, 2
    %v18 = vld [vmem:[%s17] sm:$0x1]
    %19 = vrot.lane.b32.xlu0 %v18, 32
    %v20 = vpop.permute.xlu0 %19
    %vm21 = vcmask 392448
    %22 = vst.msk [vmem:[#allocation0] sm:$0x1] %vm21, %v20
    %s23 = scalar_lea.vmem %s0, 1
    %v24 = vld [vmem:[%s23] sm:$0x1]
    %25 = vrot.lane.b32.xlu0 %v24, 16
    %v26 = vpop.permute.xlu0 %25
    %vm27 = vcmask 261248
    %28 = vst.msk [vmem:[#allocation0] sm:$0x1] %vm27, %v26
    %s30 = sshllo.u32 0, 1
    %v32 = vld [vmem:[#allocation0] sm:%s30]
    %s33 = sshllo.u32 0, 1
    %34 = vst [vmem:[%s1] sm:%s33] %v32

// kernel: dnn_forward.1
$region0: #{dnn_forward.1}
  #allocation0 [shape = 'u32[]', space=smem, size = 0x4, offset = 0x4, fixed_abs, tag = 'smem constant byte address 0x4 - core index']
  #allocation1 [shape = 'u32[144,128]{1,0:T(1,128)}', space=vmem, size = 0x12000, scoped, tag = 'internal scratch']
  #allocation2 [shape = 'f32[1,1]{1,0:T(1,128)S(1)}', space=vmem, size = 0x200, scoped, tag = 'scoped memory for dnn_forward.1']
  %s0 = inlined_call_operand.vmem [shape: f32[56,480], index: 0, kind: input, shape index: {}]
  %s1 = inlined_call_operand.vmem [shape: f32[2,480,84], index: 1, kind: input, shape index: {}]
  %s2 = inlined_call_operand.vmem [shape: f32[3,84], index: 2, kind: input, shape index: {}]
  %s3 = inlined_call_operand.vmem [shape: f32[84,6], index: 3, kind: input, shape index: {}]
  %s4 = inlined_call_operand.vmem [shape: f32[6,84], index: 4, kind: input, shape index: {}]
  %s5 = inlined_call_operand.vmem [shape: f32[2,5,84,80], index: 5, kind: input, shape index: {}]
  %s6 = inlined_call_operand.vmem [shape: f32[3,80], index: 6, kind: input, shape index: {}]
  %s7 = inlined_call_operand.vmem [shape: f32[80,16], index: 7, kind: input, shape index: {}]
  %s8 = inlined_call_operand.vmem [shape: f32[16,80], index: 8, kind: input, shape index: {}]
  %s9 = inlined_call_operand.vmem [shape: f32[5,80,120], index: 9, kind: input, shape index: {}]
  %s10 = inlined_call_operand.vmem [shape: f32[1,120], index: 10, kind: input, shape index: {}]
  %s11 = inlined_call_operand.vmem [shape: f32[1,120], index: 11, kind: input, shape index: {}]
  %s12 = inlined_call_operand.<no memory space> [shape: f32[1,1], index: 12, kind: input, shape index: {}]
  %s13 = inlined_call_operand.vmem [shape: f32[2,1], index: 13, kind: output, shape index: {}]
  %s14 = sld [smem:[#allocation0]]
  $region62: #{dnn_forward.1} parent=0
    _
  %s16 = ssub.s32 1, %s14
  %s17 = scalar_select 0, %s16, %s14
  %v18 = vstv %s12
  %19 = vst [vmem:[#allocation2] sm:$0x1] %v18
  // Predicated region
  $region2: #{dnn_forward.1} parent=0 // pred_check
    _
  $region3: #{dnn_forward.1} parent=0 // pred_check_branch
    %21 = sbr.rel (0) target = $region5
  $region4: #{dnn_forward.1} parent=0 // pred_region
    _
  $region5: #{dnn_forward.1} parent=0 // pred_fallthru
    _
  // Predicated region
  $region6: #{dnn_forward.1} parent=0 // pred_check
    _
  $region7: #{dnn_forward.1} parent=0 // pred_check_branch
    %23 = sbr.rel (0) target = $region9
  $region8: #{dnn_forward.1} parent=0 // pred_region
    _
  $region9: #{dnn_forward.1} parent=0 // pred_fallthru
    _
  // Predicated region
  $region10: #{dnn_forward.1} parent=0 // pred_check
    _
  $region11: #{dnn_forward.1} parent=0 // pred_check_branch
    %25 = sbr.rel (0) target = $region13
  $region12: #{dnn_forward.1} parent=0 // pred_region
    _
  $region13: #{dnn_forward.1} parent=0 // pred_fallthru
    _
  // Predicated region
  $region14: #{dnn_forward.1} parent=0 // pred_check
    _
  $region15: #{dnn_forward.1} parent=0 // pred_check_branch
    %27 = sbr.rel (0) target = $region17
  $region16: #{dnn_forward.1} parent=0 // pred_region
    _
  $region17: #{dnn_forward.1} parent=0 // pred_fallthru
    _
  // Predicated region
  $region18: #{dnn_forward.1} parent=0 // pred_check
    _
  $region19: #{dnn_forward.1} parent=0 // pred_check_branch
    %29 = sbr.rel (0) target = $region21
  $region20: #{dnn_forward.1} parent=0 // pred_region
    _
  $region21: #{dnn_forward.1} parent=0 // pred_fallthru
    _
  // Predicated region
  $region22: #{dnn_forward.1} parent=0 // pred_check
    _
  $region23: #{dnn_forward.1} parent=0 // pred_check_branch
    %31 = sbr.rel (0) target = $region25
  $region24: #{dnn_forward.1} parent=0 // pred_region
    _
  $region25: #{dnn_forward.1} parent=0 // pred_fallthru
    _
  // Predicated region
  $region26: #{dnn_forward.1} parent=0 // pred_check
    _
  $region27: #{dnn_forward.1} parent=0 // pred_check_branch
    %33 = sbr.rel (0) target = $region29
  $region28: #{dnn_forward.1} parent=0 // pred_region
    _
  $region29: #{dnn_forward.1} parent=0 // pred_fallthru
    _
  // Predicated region
  $region30: #{dnn_forward.1} parent=0 // pred_check
    _
  $region31: #{dnn_forward.1} parent=0 // pred_check_branch
    %35 = sbr.rel (0) target = $region33
  $region32: #{dnn_forward.1} parent=0 // pred_region
    _
  $region33: #{dnn_forward.1} parent=0 // pred_fallthru
    _
  // Predicated region
  $region34: #{dnn_forward.1} parent=0 // pred_check
    _
  $region35: #{dnn_forward.1} parent=0 // pred_check_branch
    %37 = sbr.rel (0) target = $region37
  $region36: #{dnn_forward.1} parent=0 // pred_region
    _
  $region37: #{dnn_forward.1} parent=0 // pred_fallthru
    _
  // Predicated region
  $region38: #{dnn_forward.1} parent=0 // pred_check
    _
  $region39: #{dnn_forward.1} parent=0 // pred_check_branch
    %39 = sbr.rel (0) target = $region41
  $region40: #{dnn_forward.1} parent=0 // pred_region
    _
  $region41: #{dnn_forward.1} parent=0 // pred_fallthru
    _
  // Predicated region
  $region42: #{dnn_forward.1} parent=0 // pred_check
    _
  $region43: #{dnn_forward.1} parent=0 // pred_check_branch
    %41 = sbr.rel (0) target = $region45
  $region44: #{dnn_forward.1} parent=0 // pred_region
    _
  $region45: #{dnn_forward.1} parent=0 // pred_fallthru
    _
  // Predicated region
  $region46: #{dnn_forward.1} parent=0 // pred_check
    _
  $region47: #{dnn_forward.1} parent=0 // pred_check_branch
    %43 = sbr.rel (0) target = $region49
  $region48: #{dnn_forward.1} parent=0 // pred_region
    _
  $region49: #{dnn_forward.1} parent=0 // pred_fallthru
    _
  // Predicated region
  $region50: #{dnn_forward.1} parent=0 // pred_check
    _
  $region51: #{dnn_forward.1} parent=0 // pred_check_branch
    %45 = sbr.rel (0) target = $region53
  $region52: #{dnn_forward.1} parent=0 // pred_region
    _
  $region53: #{dnn_forward.1} parent=0 // pred_fallthru
    _
  %v46 = vld [vmem:[%s0] sm:$0xff]
  %v47 = vld [vmem:[%s0 + $0x8] sm:$0xff]
  %v48 = vld [vmem:[%s0 + $0x10] sm:$0xff]
  %v49 = vld [vmem:[%s0 + $0x18] sm:$0xff]
  %v50 = vld [vmem:[%s0 + $0x20] sm:$0xff]
  %v51 = vld [vmem:[%s0 + $0x28] sm:$0xff]
  %v52 = vld [vmem:[%s0 + $0x30] sm:$0xff]
  %v53 = vld [vmem:[%s0 + $0x38] sm:$0xff]
  %v54 = vld [vmem:[%s0 + $0x40] sm:$0xff]
  %v55 = vld [vmem:[%s0 + $0x48] sm:$0xff]
  %v56 = vld [vmem:[%s0 + $0x50] sm:$0xff]
  %v57 = vld [vmem:[%s0 + $0x58] sm:$0xff]
  %v58 = vld [vmem:[%s0 + $0x60] sm:$0xff]
  %v59 = vld [vmem:[%s0 + $0x68] sm:$0xff]
  %v60 = vld [vmem:[%s0 + $0x70] sm:$0xff]
  %v61 = vld [vmem:[%s0 + $0x78] sm:$0xff]
  %v62 = vld [vmem:[%s0 + $0x80] sm:$0xff]
  %v63 = vld [vmem:[%s0 + $0x88] sm:$0xff]
  %v64 = vld [vmem:[%s0 + $0x90] sm:$0xff]
  %v65 = vld [vmem:[%s0 + $0x98] sm:$0xff]
  %v66 = vld [vmem:[%s0 + $0xa0] sm:$0xff]
  %v67 = vld [vmem:[%s0 + $0xa8] sm:$0xff]
  %v68 = vld [vmem:[%s0 + $0xb0] sm:$0xff]
  %v69 = vld [vmem:[%s0 + $0xb8] sm:$0xff]
  %v70 = vld [vmem:[%s0 + $0xc0] sm:$0xff]
  %v71 = vld [vmem:[%s0 + $0xc8] sm:$0xff]
  %v72 = vld [vmem:[%s0 + $0xd0] sm:$0xff]
  %v73 = vld [vmem:[%s0 + $0xd8] sm:$0xff]
  %v74 = vld [vmem:[%s1] sm:$0xff]
  %v75 = vld [vmem:[%s1 + $0x8] sm:$0xff]
  %v76 = vld [vmem:[%s1 + $0x10] sm:$0xff]
  %v77 = vld [vmem:[%s1 + $0x18] sm:$0xff]
  %v78 = vld [vmem:[%s1 + $0x20] sm:$0xff]
  %v79 = vld [vmem:[%s1 + $0x28] sm:$0xff]
  %v80 = vld [vmem:[%s1 + $0x30] sm:$0xff]
  %v81 = vld [vmem:[%s1 + $0x38] sm:$0xff]
  %v82 = vld [vmem:[%s1 + $0x40] sm:$0xff]
  %v83 = vld [vmem:[%s1 + $0x48] sm:$0xff]
  %v84 = vld [vmem:[%s1 + $0x50] sm:$0xff]
  %v85 = vld [vmem:[%s1 + $0x58] sm:$0xff]
  %v86 = vld [vmem:[%s1 + $0x60] sm:$0xff]
  %v87 = vld [vmem:[%s1 + $0x68] sm:$0xff]
  %v88 = vld [vmem:[%s1 + $0x70] sm:$0xff]
  %v89 = vld [vmem:[%s1 + $0x78] sm:$0xff]
  %v90 = vld [vmem:[%s1 + $0x80] sm:$0xff]
  %v91 = vld [vmem:[%s1 + $0x88] sm:$0xff]
  %v92 = vld [vmem:[%s1 + $0x90] sm:$0xff]
  %v93 = vld [vmem:[%s1 + $0x98] sm:$0xff]
  %v94 = vld [vmem:[%s1 + $0xa0] sm:$0xff]
  %v95 = vld [vmem:[%s1 + $0xa8] sm:$0xff]
  %v96 = vld [vmem:[%s1 + $0xb0] sm:$0xff]
  %v97 = vld [vmem:[%s1 + $0xb8] sm:$0xff]
  %v98 = vld [vmem:[%s1 + $0xc0] sm:$0xff]
  %v99 = vld [vmem:[%s1 + $0xc8] sm:$0xff]
  %v100 = vld [vmem:[%s1 + $0xd0] sm:$0xff]
  %v101 = vld [vmem:[%s1 + $0xd8] sm:$0xff]
  %v102 = vld [vmem:[%s1 + $0xe0] sm:$0xff]
  %v103 = vld [vmem:[%s1 + $0xe8] sm:$0xff]
  %v104 = vld [vmem:[%s1 + $0xf0] sm:$0xff]
  %v105 = vld [vmem:[%s1 + $0xf8] sm:$0xff]
  %v106 = vld [vmem:[%s1 + $0x100] sm:$0xff]
  %v107 = vld [vmem:[%s1 + $0x108] sm:$0xff]
  %v108 = vld [vmem:[%s1 + $0x110] sm:$0xff]
  %v109 = vld [vmem:[%s1 + $0x118] sm:$0xff]
  %v110 = vld [vmem:[%s1 + $0x120] sm:$0xff]
  %v111 = vld [vmem:[%s1 + $0x128] sm:$0xff]
  %v112 = vld [vmem:[%s1 + $0x130] sm:$0xff]
  %v113 = vld [vmem:[%s1 + $0x138] sm:$0xff]
  %v114 = vld [vmem:[%s1 + $0x140] sm:$0xff]
  %v115 = vld [vmem:[%s1 + $0x148] sm:$0xff]
  %v116 = vld [vmem:[%s1 + $0x150] sm:$0xff]
  %v117 = vld [vmem:[%s1 + $0x158] sm:$0xff]
  %v118 = vld [vmem:[%s1 + $0x160] sm:$0xff]
  %v119 = vld [vmem:[%s1 + $0x168] sm:$0xff]
  %v120 = vld [vmem:[%s1 + $0x170] sm:$0xff]
  %v121 = vld [vmem:[%s1 + $0x178] sm:$0xff]
  %v122 = vld [vmem:[%s1 + $0x180] sm:$0xff]
  %v123 = vld [vmem:[%s1 + $0x188] sm:$0xff]
  %v124 = vld [vmem:[%s1 + $0x190] sm:$0xff]
  %v125 = vld [vmem:[%s1 + $0x198] sm:$0xff]
  %v126 = vld [vmem:[%s1 + $0x1a0] sm:$0xff]
  %v127 = vld [vmem:[%s1 + $0x1a8] sm:$0xff]
  %v128 = vld [vmem:[%s1 + $0x1b0] sm:$0xff]
  %v129 = vld [vmem:[%s1 + $0x1b8] sm:$0xff]
  %v130 = vld [vmem:[%s1 + $0x1c0] sm:$0xff]
  %v131 = vld [vmem:[%s1 + $0x1c8] sm:$0xff]
  %v132 = vld [vmem:[%s1 + $0x1d0] sm:$0xff]
  %v133 = vld [vmem:[%s1 + $0x1d8] sm:$0xff]
  %vm134 = vcmask 785408
  %v136 = vsel %vm134, %v49, 0
  %v139 = vsel %vm134, %v53, 0
  %v142 = vsel %vm134, %v57, 0
  %v145 = vsel %vm134, %v61, 0
  %v148 = vsel %vm134, %v65, 0
  %v151 = vsel %vm134, %v69, 0
  %v154 = vsel %vm134, %v73, 0
  %156 = vmatprep.subr.mxu0 0.0
  %157 = vmatpush1.msra.mxu0 %v74
  %158 = vmatprep.subr.mxu0 0.0
  %159 = vmatpush1.msra.mxu0 %v75
  %160 = vmatprep.subr.mxu0 0.0
  %161 = vmatpush1.msra.mxu0 %v76
  %162 = vmatprep.subr.mxu0 0.0
  %163 = vmatpush1.msra.mxu0 %v77
  %164 = vmatprep.subr.mxu0 0.0
  %165 = vmatpush1.msra.mxu0 %v78
  %166 = vmatprep.subr.mxu0 0.0
  %167 = vmatpush1.msra.mxu0 %v79
  %168 = vmatprep.subr.mxu0 0.0
  %169 = vmatpush1.msra.mxu0 %v80
  %170 = vmatprep.subr.mxu0 0.0
  %171 = vmatpush1.msra.mxu0 %v81
  %172 = vmatprep.subr.mxu0 0.0
  %173 = vmatpush1.msra.mxu0 %v82
  %174 = vmatprep.subr.mxu0 0.0
  %175 = vmatpush1.msra.mxu0 %v83
  %176 = vmatprep.subr.mxu0 0.0
  %177 = vmatpush1.msra.mxu0 %v84
  %178 = vmatprep.subr.mxu0 0.0
  %179 = vmatpush1.msra.mxu0 %v85
  %180 = vmatprep.subr.mxu0 0.0
  %181 = vmatpush1.msra.mxu0 %v86
  %182 = vmatprep.subr.mxu0 0.0
  %183 = vmatpush1.msra.mxu0 %v87
  %184 = vmatprep.subr.mxu0 0.0
  %185 = vmatpush1.msra.mxu0 %v88
  %186 = vmatprep.subr.mxu0 0.0
  %187 = vmatpush1.msra.mxu0 %v89
  %188 = vmatprep.subr.mxu0 0.0
  %189 = vmatpush1.msra.mxu0 %v90
  %190 = vmatprep.subr.mxu0 0.0
  %191 = vmatpush1.msra.mxu0 %v91
  %192 = vmatprep.subr.mxu0 0.0
  %193 = vmatpush1.msra.mxu0 %v92
  %194 = vmatprep.subr.mxu0 0.0
  %195 = vmatpush1.msra.mxu0 %v93
  %196 = vmatprep.subr.mxu0 0.0
  %197 = vmatpush1.msra.mxu0 %v94
  %198 = vmatprep.subr.mxu0 0.0
  %199 = vmatpush1.msra.mxu0 %v95
  %200 = vmatprep.subr.mxu0 0.0
  %201 = vmatpush1.msra.mxu0 %v96
  %202 = vmatprep.subr.mxu0 0.0
  %203 = vmatpush1.msra.mxu0 %v97
  %204 = vmatprep.subr.mxu0 0.0
  %205 = vmatpush1.msra.mxu0 %v98
  %206 = vmatprep.subr.mxu0 0.0
  %207 = vmatpush1.msra.mxu0 %v99
  %208 = vmatprep.subr.mxu0 0.0
  %209 = vmatpush1.msra.mxu0 %v100
  %210 = vmatprep.subr.mxu0 0.0
  %211 = vmatpush1.msra.mxu0 %v101
  %212 = vmatprep.subr.mxu0 0.0
  %213 = vmatpush1.msra.mxu0 %v102
  %214 = vmatprep.subr.mxu0 0.0
  %215 = vmatpush1.msra.mxu0 %v103
  %216 = vmatprep.subr.mxu0 0.0
  %217 = vmatpush1.msra.mxu0 %v104
  %218 = vmatprep.subr.mxu0 0.0
  %219 = vmatpush1.msra.mxu0 %v105
  %220 = vmatprep.mubr.f32.mxu0 %v47
  %221 = vmatmul.mubr.f32.gmra.mrb[0].mxu0 %v46
  %v222 = vpop.f32.mrb[0].mxu0
  %v223 = vadd.f32 0.0, %v222
  %v224 = vpop.f32.mrb[0].mxu0
  %225 = vmatprep.mubr.f32.mxu0 %v51
  %226 = vmatmul.mubr.f32.gmra.mrb[0].mxu0 %v50
  %v227 = vpop.f32.mrb[0].mxu0
  %v228 = vadd.f32 0.0, %v227
  %v229 = vpop.f32.mrb[0].mxu0
  %230 = vmatprep.mubr.f32.mxu0 %v55
  %231 = vmatmul.mubr.f32.gmra.mrb[0].mxu0 %v54
  %v232 = vpop.f32.mrb[0].mxu0
  %v233 = vadd.f32 0.0, %v232
  %v234 = vpop.f32.mrb[0].mxu0
  %235 = vmatprep.mubr.f32.mxu0 %v59
  %236 = vmatmul.mubr.f32.gmra.mrb[0].mxu0 %v58
  %v237 = vpop.f32.mrb[0].mxu0
  %v238 = vadd.f32 0.0, %v237
  %v239 = vpop.f32.mrb[0].mxu0
  %240 = vmatprep.mubr.f32.mxu0 %v63
  %241 = vmatmul.mubr.f32.gmra.mrb[0].mxu0 %v62
  %v242 = vpop.f32.mrb[0].mxu0
  %v243 = vadd.f32 0.0, %v242
  %v244 = vpop.f32.mrb[0].mxu0
  %245 = vmatprep.mubr.f32.mxu0 %v67
  %246 = vmatmul.mubr.f32.gmra.mrb[0].mxu0 %v66
  %v247 = vpop.f32.mrb[0].mxu0
  %v248 = vadd.f32 0.0, %v247
  %v249 = vpop.f32.mrb[0].mxu0
  %250 = vmatprep.mubr.f32.mxu0 %v71
  %251 = vmatmul.mubr.f32.gmra.mrb[0].mxu0 %v70
  %v252 = vpop.f32.mrb[0].mxu0
  %v253 = vadd.f32 0.0, %v252
  %v254 = vpop.f32.mrb[0].mxu0
  %255 = vdwg.mxu0
  %256 = vmatprep.subr.mxu0 0.0
  %257 = vmatpush1.msra.mxu0 %v106
  %258 = vmatprep.subr.mxu0 0.0
  %259 = vmatpush1.msra.mxu0 %v107
  %260 = vmatprep.subr.mxu0 0.0
  %261 = vmatpush1.msra.mxu0 %v108
  %262 = vmatprep.subr.mxu0 0.0
  %263 = vmatpush1.msra.mxu0 %v109
  %264 = vmatprep.subr.mxu0 0.0
  %265 = vmatpush1.msra.mxu0 %v110
  %266 = vmatprep.subr.mxu0 0.0
  %267 = vmatpush1.msra.mxu0 %v111
  %268 = vmatprep.subr.mxu0 0.0
  %269 = vmatpush1.msra.mxu0 %v112
  %270 = vmatprep.subr.mxu0 0.0
  %271 = vmatpush1.msra.mxu0 %v113
  %272 = vmatprep.subr.mxu0 0.0
  %273 = vmatpush1.msra.mxu0 %v114
  %274 = vmatprep.subr.mxu0 0.0
  %275 = vmatpush1.msra.mxu0 %v115
  %276 = vmatprep.subr.mxu0 0.0
  %277 = vmatpush1.msra.mxu0 %v116
  %278 = vmatprep.subr.mxu0 0.0
  %279 = vmatpush1.msra.mxu0 %v117
  %280 = vmatprep.subr.mxu0 0.0
  %281 = vmatpush1.msra.mxu0 %v118
  %282 = vmatprep.subr.mxu0 0.0
  %283 = vmatpush1.msra.mxu0 %v119
  %284 = vmatprep.subr.mxu0 0.0
  %285 = vmatpush1.msra.mxu0 %v120
  %286 = vmatprep.subr.mxu0 0.0
  %287 = vmatpush1.msra.mxu0 %v121
  %288 = vmatprep.subr.mxu0 0.0
  %289 = vmatpush1.msra.mxu0 %v122
  %290 = vmatprep.subr.mxu0 0.0
  %291 = vmatpush1.msra.mxu0 %v123
  %292 = vmatprep.subr.mxu0 0.0
  %293 = vmatpush1.msra.mxu0 %v124
  %294 = vmatprep.subr.mxu0 0.0
  %295 = vmatpush1.msra.mxu0 %v125
  %296 = vmatprep.subr.mxu0 0.0
  %297 = vmatpush1.msra.mxu0 %v126
  %298 = vmatprep.subr.mxu0 0.0
  %299 = vmatpush1.msra.mxu0 %v127
  %300 = vmatprep.subr.mxu0 0.0
  %301 = vmatpush1.msra.mxu0 %v128
  %302 = vmatprep.subr.mxu0 0.0
  %303 = vmatpush1.msra.mxu0 %v129
  %304 = vmatprep.subr.mxu0 0.0
  %305 = vmatpush1.msra.mxu0 %v130
  %306 = vmatprep.subr.mxu0 0.0
  %307 = vmatpush1.msra.mxu0 %v131
  %308 = vmatprep.subr.mxu0 0.0
  %309 = vmatpush1.msra.mxu0 %v132
  %310 = vmatprep.subr.mxu0 0.0
  %311 = vmatpush1.msra.mxu0 %v133
  %312 = vmatprep.subr.mxu0 0.0
  %313 = vmatpush1.msra.mxu0 0.0
  %314 = vmatprep.subr.mxu0 0.0
  %315 = vmatpush1.msra.mxu0 0.0
  %316 = vmatprep.subr.mxu0 0.0
  %317 = vmatpush1.msra.mxu0 0.0
  %318 = vmatprep.subr.mxu0 0.0
  %319 = vmatpush1.msra.mxu0 0.0
  %320 = vmatprep.mubr.f32.mxu0 %v136
  %321 = vmatmul.mubr.f32.gmra.mrb[0].mxu0 %v48
  %v322 = vpop.f32.mrb[0].mxu0
  %v323 = vadd.f32 %v223, %v322
  %v324 = vpop.f32.mrb[0].mxu0
  %325 = vmatprep.mubr.f32.mxu0 %v139
  %326 = vmatmul.mubr.f32.gmra.mrb[0].mxu0 %v52
  %v327 = vpop.f32.mrb[0].mxu0
  %v328 = vadd.f32 %v228, %v327
  %v329 = vpop.f32.mrb[0].mxu0
  %330 = vmatprep.mubr.f32.mxu0 %v142
  %331 = vmatmul.mubr.f32.gmra.mrb[0].mxu0 %v56
  %v332 = vpop.f32.mrb[0].mxu0
  %v333 = vadd.f32 %v233, %v332
  %v334 = vpop.f32.mrb[0].mxu0
  %335 = vmatprep.mubr.f32.mxu0 %v145
  %336 = vmatmul.mubr.f32.gmra.mrb[0].mxu0 %v60
  %v337 = vpop.f32.mrb[0].mxu0
  %v338 = vadd.f32 %v238, %v337
  %v339 = vpop.f32.mrb[0].mxu0
  %340 = vmatprep.mubr.f32.mxu0 %v148
  %341 = vmatmul.mubr.f32.gmra.mrb[0].mxu0 %v64
  %v342 = vpop.f32.mrb[0].mxu0
  %v343 = vadd.f32 %v243, %v342
  %v344 = vpop.f32.mrb[0].mxu0
  %345 = vmatprep.mubr.f32.mxu0 %v151
  %346 = vmatmul.mubr.f32.gmra.mrb[0].mxu0 %v68
  %v347 = vpop.f32.mrb[0].mxu0
  %v348 = vadd.f32 %v248, %v347
  %v349 = vpop.f32.mrb[0].mxu0
  %350 = vmatprep.mubr.f32.mxu0 %v154
  %351 = vmatmul.mubr.f32.gmra.mrb[0].mxu0 %v72
  %v352 = vpop.f32.mrb[0].mxu0
  %v353 = vadd.f32 %v253, %v352
  %v354 = vpop.f32.mrb[0].mxu0
  %355 = vdwg.mxu0
  %s356 = scalar_lea.vmem %s1, 480
  %v357 = vld [vmem:[%s356] sm:$0xff]
  %v358 = vld [vmem:[%s356 + $0x8] sm:$0xff]
  %v359 = vld [vmem:[%s356 + $0x10] sm:$0xff]
  %v360 = vld [vmem:[%s356 + $0x18] sm:$0xff]
  %v361 = vld [vmem:[%s356 + $0x20] sm:$0xff]
  %v362 = vld [vmem:[%s356 + $0x28] sm:$0xff]
  %v363 = vld [vmem:[%s356 + $0x30] sm:$0xff]
  %v364 = vld [vmem:[%s356 + $0x38] sm:$0xff]
  %v365 = vld [vmem:[%s356 + $0x40] sm:$0xff]
  %v366 = vld [vmem:[%s356 + $0x48] sm:$0xff]
  %v367 = vld [vmem:[%s356 + $0x50] sm:$0xff]
  %v368 = vld [vmem:[%s356 + $0x58] sm:$0xff]
  %v369 = vld [vmem:[%s356 + $0x60] sm:$0xff]
  %v370 = vld [vmem:[%s356 + $0x68] sm:$0xff]
  %v371 = vld [vmem:[%s356 + $0x70] sm:$0xff]
  %v372 = vld [vmem:[%s356 + $0x78] sm:$0xff]
  %v373 = vld [vmem:[%s356 + $0x80] sm:$0xff]
  %v374 = vld [vmem:[%s356 + $0x88] sm:$0xff]
  %v375 = vld [vmem:[%s356 + $0x90] sm:$0xff]
  %v376 = vld [vmem:[%s356 + $0x98] sm:$0xff]
  %v377 = vld [vmem:[%s356 + $0xa0] sm:$0xff]
  %v378 = vld [vmem:[%s356 + $0xa8] sm:$0xff]
  %v379 = vld [vmem:[%s356 + $0xb0] sm:$0xff]
  %v380 = vld [vmem:[%s356 + $0xb8] sm:$0xff]
  %v381 = vld [vmem:[%s356 + $0xc0] sm:$0xff]
  %v382 = vld [vmem:[%s356 + $0xc8] sm:$0xff]
  %v383 = vld [vmem:[%s356 + $0xd0] sm:$0xff]
  %v384 = vld [vmem:[%s356 + $0xd8] sm:$0xff]
  %v385 = vld [vmem:[%s356 + $0xe0] sm:$0xff]
  %v386 = vld [vmem:[%s356 + $0xe8] sm:$0xff]
  %v387 = vld [vmem:[%s356 + $0xf0] sm:$0xff]
  %v388 = vld [vmem:[%s356 + $0xf8] sm:$0xff]
  %v389 = vld [vmem:[%s356 + $0x100] sm:$0xff]
  %v390 = vld [vmem:[%s356 + $0x108] sm:$0xff]
  %v391 = vld [vmem:[%s356 + $0x110] sm:$0xff]
  %v392 = vld [vmem:[%s356 + $0x118] sm:$0xff]
  %v393 = vld [vmem:[%s356 + $0x120] sm:$0xff]
  %v394 = vld [vmem:[%s356 + $0x128] sm:$0xff]
  %v395 = vld [vmem:[%s356 + $0x130] sm:$0xff]
  %v396 = vld [vmem:[%s356 + $0x138] sm:$0xff]
  %v397 = vld [vmem:[%s356 + $0x140] sm:$0xff]
  %v398 = vld [vmem:[%s356 + $0x148] sm:$0xff]
  %v399 = vld [vmem:[%s356 + $0x150] sm:$0xff]
  %v400 = vld [vmem:[%s356 + $0x158] sm:$0xff]
  %v401 = vld [vmem:[%s356 + $0x160] sm:$0xff]
  %v402 = vld [vmem:[%s356 + $0x168] sm:$0xff]
  %v403 = vld [vmem:[%s356 + $0x170] sm:$0xff]
  %v404 = vld [vmem:[%s356 + $0x178] sm:$0xff]
  %v405 = vld [vmem:[%s356 + $0x180] sm:$0xff]
  %v406 = vld [vmem:[%s356 + $0x188] sm:$0xff]
  %v407 = vld [vmem:[%s356 + $0x190] sm:$0xff]
  %v408 = vld [vmem:[%s356 + $0x198] sm:$0xff]
  %v409 = vld [vmem:[%s356 + $0x1a0] sm:$0xff]
  %v410 = vld [vmem:[%s356 + $0x1a8] sm:$0xff]
  %v411 = vld [vmem:[%s356 + $0x1b0] sm:$0xff]
  %v412 = vld [vmem:[%s356 + $0x1b8] sm:$0xff]
  %v413 = vld [vmem:[%s356 + $0x1c0] sm:$0xff]
  %v414 = vld [vmem:[%s356 + $0x1c8] sm:$0xff]
  %v415 = vld [vmem:[%s356 + $0x1d0] sm:$0xff]
  %v416 = vld [vmem:[%s356 + $0x1d8] sm:$0xff]
  %417 = vmatprep.subr.mxu0 0.0
  %418 = vmatpush1.msra.mxu0 %v357
  %419 = vmatprep.subr.mxu0 0.0
  %420 = vmatpush1.msra.mxu0 %v358
  %421 = vmatprep.subr.mxu0 0.0
  %422 = vmatpush1.msra.mxu0 %v359
  %423 = vmatprep.subr.mxu0 0.0
  %424 = vmatpush1.msra.mxu0 %v360
  %425 = vmatprep.subr.mxu0 0.0
  %426 = vmatpush1.msra.mxu0 %v361
  %427 = vmatprep.subr.mxu0 0.0
  %428 = vmatpush1.msra.mxu0 %v362
  %429 = vmatprep.subr.mxu0 0.0
  %430 = vmatpush1.msra.mxu0 %v363
  %431 = vmatprep.subr.mxu0 0.0
  %432 = vmatpush1.msra.mxu0 %v364
  %433 = vmatprep.subr.mxu0 0.0
  %434 = vmatpush1.msra.mxu0 %v365
  %435 = vmatprep.subr.mxu0 0.0
  %436 = vmatpush1.msra.mxu0 %v366
  %437 = vmatprep.subr.mxu0 0.0
  %438 = vmatpush1.msra.mxu0 %v367
  %439 = vmatprep.subr.mxu0 0.0
  %440 = vmatpush1.msra.mxu0 %v368
  %441 = vmatprep.subr.mxu0 0.0
  %442 = vmatpush1.msra.mxu0 %v369
  %443 = vmatprep.subr.mxu0 0.0
  %444 = vmatpush1.msra.mxu0 %v370
  %445 = vmatprep.subr.mxu0 0.0
  %446 = vmatpush1.msra.mxu0 %v371
  %447 = vmatprep.subr.mxu0 0.0
  %448 = vmatpush1.msra.mxu0 %v372
  %449 = vmatprep.subr.mxu0 0.0
  %450 = vmatpush1.msra.mxu0 %v373
  %451 = vmatprep.subr.mxu0 0.0
  %452 = vmatpush1.msra.mxu0 %v374
  %453 = vmatprep.subr.mxu0 0.0
  %454 = vmatpush1.msra.mxu0 %v375
  %455 = vmatprep.subr.mxu0 0.0
  %456 = vmatpush1.msra.mxu0 %v376
  %457 = vmatprep.subr.mxu0 0.0
  %458 = vmatpush1.msra.mxu0 %v377
  %459 = vmatprep.subr.mxu0 0.0
  %460 = vmatpush1.msra.mxu0 %v378
  %461 = vmatprep.subr.mxu0 0.0
  %462 = vmatpush1.msra.mxu0 %v379
  %463 = vmatprep.subr.mxu0 0.0
  %464 = vmatpush1.msra.mxu0 %v380
  %465 = vmatprep.subr.mxu0 0.0
  %466 = vmatpush1.msra.mxu0 %v381
  %467 = vmatprep.subr.mxu0 0.0
  %468 = vmatpush1.msra.mxu0 %v382
  %469 = vmatprep.subr.mxu0 0.0
  %470 = vmatpush1.msra.mxu0 %v383
  %471 = vmatprep.subr.mxu0 0.0
  %472 = vmatpush1.msra.mxu0 %v384
  %473 = vmatprep.subr.mxu0 0.0
  %474 = vmatpush1.msra.mxu0 %v385
  %475 = vmatprep.subr.mxu0 0.0
  %476 = vmatpush1.msra.mxu0 %v386
  %477 = vmatprep.subr.mxu0 0.0
  %478 = vmatpush1.msra.mxu0 %v387
  %479 = vmatprep.subr.mxu0 0.0
  %480 = vmatpush1.msra.mxu0 %v388
  %481 = vmatprep.mubr.f32.mxu0 %v47
  %482 = vmatmul.mubr.f32.gmra.mrb[0].mxu0 %v46
  %v483 = vpop.f32.mrb[0].mxu0
  %v484 = vadd.f32 0.0, %v483
  %v485 = vpop.f32.mrb[0].mxu0
  %486 = vmatprep.mubr.f32.mxu0 %v51
  %487 = vmatmul.mubr.f32.gmra.mrb[0].mxu0 %v50
  %v488 = vpop.f32.mrb[0].mxu0
  %v489 = vadd.f32 0.0, %v488
  %v490 = vpop.f32.mrb[0].mxu0
  %491 = vmatprep.mubr.f32.mxu0 %v55
  %492 = vmatmul.mubr.f32.gmra.mrb[0].mxu0 %v54
  %v493 = vpop.f32.mrb[0].mxu0
  %v494 = vadd.f32 0.0, %v493
  %v495 = vpop.f32.mrb[0].mxu0
  %496 = vmatprep.mubr.f32.mxu0 %v59
  %497 = vmatmul.mubr.f32.gmra.mrb[0].mxu0 %v58
  %v498 = vpop.f32.mrb[0].mxu0
  %v499 = vadd.f32 0.0, %v498
  %v500 = vpop.f32.mrb[0].mxu0
  %501 = vmatprep.mubr.f32.mxu0 %v63
  %502 = vmatmul.mubr.f32.gmra.mrb[0].mxu0 %v62
  %v503 = vpop.f32.mrb[0].mxu0
  %v504 = vadd.f32 0.0, %v503
  %v505 = vpop.f32.mrb[0].mxu0
  %506 = vmatprep.mubr.f32.mxu0 %v67
  %507 = vmatmul.mubr.f32.gmra.mrb[0].mxu0 %v66
  %v508 = vpop.f32.mrb[0].mxu0
  %v509 = vadd.f32 0.0, %v508
  %v510 = vpop.f32.mrb[0].mxu0
  %511 = vmatprep.mubr.f32.mxu0 %v71
  %512 = vmatmul.mubr.f32.gmra.mrb[0].mxu0 %v70
  %v513 = vpop.f32.mrb[0].mxu0
  %v514 = vadd.f32 0.0, %v513
  %v515 = vpop.f32.mrb[0].mxu0
  %516 = vdwg.mxu0
  %517 = vmatprep.subr.mxu0 0.0
  %518 = vmatpush1.msra.mxu0 %v389
  %519 = vmatprep.subr.mxu0 0.0
  %520 = vmatpush1.msra.mxu0 %v390
  %521 = vmatprep.subr.mxu0 0.0
  %522 = vmatpush1.msra.mxu0 %v391
  %523 = vmatprep.subr.mxu0 0.0
  %524 = vmatpush1.msra.mxu0 %v392
  %525 = vmatprep.subr.mxu0 0.0
  %526 = vmatpush1.msra.mxu0 %v393
  %527 = vmatprep.subr.mxu0 0.0
  %528 = vmatpush1.msra.mxu0 %v394
  %529 = vmatprep.subr.mxu0 0.0
  %530 = vmatpush1.msra.mxu0 %v395
  %531 = vmatprep.subr.mxu0 0.0
  %532 = vmatpush1.msra.mxu0 %v396
  %533 = vmatprep.subr.mxu0 0.0
  %534 = vmatpush1.msra.mxu0 %v397
  %535 = vmatprep.subr.mxu0 0.0
  %536 = vmatpush1.msra.mxu0 %v398
  %537 = vmatprep.subr.mxu0 0.0
  %538 = vmatpush1.msra.mxu0 %v399
  %539 = vmatprep.subr.mxu0 0.0
  %540 = vmatpush1.msra.mxu0 %v400
  %541 = vmatprep.subr.mxu0 0.0
  %542 = vmatpush1.msra.mxu0 %v401
  %543 = vmatprep.subr.mxu0 0.0
  %544 = vmatpush1.msra.mxu0 %v402
  %545 = vmatprep.subr.mxu0 0.0
  %546 = vmatpush1.msra.mxu0 %v403
  %547 = vmatprep.subr.mxu0 0.0
  %548 = vmatpush1.msra.mxu0 %v404
  %549 = vmatprep.subr.mxu0 0.0
  %550 = vmatpush1.msra.mxu0 %v405
  %551 = vmatprep.subr.mxu0 0.0
  %552 = vmatpush1.msra.mxu0 %v406
  %553 = vmatprep.subr.mxu0 0.0
  %554 = vmatpush1.msra.mxu0 %v407
  %555 = vmatprep.subr.mxu0 0.0
  %556 = vmatpush1.msra.mxu0 %v408
  %557 = vmatprep.subr.mxu0 0.0
  %558 = vmatpush1.msra.mxu0 %v409
  %559 = vmatprep.subr.mxu0 0.0
  %560 = vmatpush1.msra.mxu0 %v410
  %561 = vmatprep.subr.mxu0 0.0
  %562 = vmatpush1.msra.mxu0 %v411
  %563 = vmatprep.subr.mxu0 0.0
  %564 = vmatpush1.msra.mxu0 %v412
  %565 = vmatprep.subr.mxu0 0.0
  %566 = vmatpush1.msra.mxu0 %v413
  %567 = vmatprep.subr.mxu0 0.0
  %568 = vmatpush1.msra.mxu0 %v414
  %569 = vmatprep.subr.mxu0 0.0
  %570 = vmatpush1.msra.mxu0 %v415
  %571 = vmatprep.subr.mxu0 0.0
  %572 = vmatpush1.msra.mxu0 %v416
  %573 = vmatprep.subr.mxu0 0.0
  %574 = vmatpush1.msra.mxu0 0.0
  %575 = vmatprep.subr.mxu0 0.0
  %576 = vmatpush1.msra.mxu0 0.0
  %577 = vmatprep.subr.mxu0 0.0
  %578 = vmatpush1.msra.mxu0 0.0
  %579 = vmatprep.subr.mxu0 0.0
  %580 = vmatpush1.msra.mxu0 0.0
  %581 = vmatprep.mubr.f32.mxu0 %v136
  %582 = vmatmul.mubr.f32.gmra.mrb[0].mxu0 %v48
  %v583 = vpop.f32.mrb[0].mxu0
  %v584 = vadd.f32 %v484, %v583
  %v585 = vpop.f32.mrb[0].mxu0
  %586 = vmatprep.mubr.f32.mxu0 %v139
  %587 = vmatmul.mubr.f32.gmra.mrb[0].mxu0 %v52
  %v588 = vpop.f32.mrb[0].mxu0
  %v589 = vadd.f32 %v489, %v588
  %v590 = vpop.f32.mrb[0].mxu0
  %591 = vmatprep.mubr.f32.mxu0 %v142
  %592 = vmatmul.mubr.f32.gmra.mrb[0].mxu0 %v56
  %v593 = vpop.f32.mrb[0].mxu0
  %v594 = vadd.f32 %v494, %v593
  %v595 = vpop.f32.mrb[0].mxu0
  %596 = vmatprep.mubr.f32.mxu0 %v145
  %597 = vmatmul.mubr.f32.gmra.mrb[0].mxu0 %v60
  %v598 = vpop.f32.mrb[0].mxu0
  %v599 = vadd.f32 %v499, %v598
  %v600 = vpop.f32.mrb[0].mxu0
  %601 = vmatprep.mubr.f32.mxu0 %v148
  %602 = vmatmul.mubr.f32.gmra.mrb[0].mxu0 %v64
  %v603 = vpop.f32.mrb[0].mxu0
  %v604 = vadd.f32 %v504, %v603
  %v605 = vpop.f32.mrb[0].mxu0
  %606 = vmatprep.mubr.f32.mxu0 %v151
  %607 = vmatmul.mubr.f32.gmra.mrb[0].mxu0 %v68
  %v608 = vpop.f32.mrb[0].mxu0
  %v609 = vadd.f32 %v509, %v608
  %v610 = vpop.f32.mrb[0].mxu0
  %611 = vmatprep.mubr.f32.mxu0 %v154
  %612 = vmatmul.mubr.f32.gmra.mrb[0].mxu0 %v72
  %v613 = vpop.f32.mrb[0].mxu0
  %v614 = vadd.f32 %v514, %v613
  %v615 = vpop.f32.mrb[0].mxu0
  %616 = vdwg.mxu0
  %v617 = vmax.f32 %v323, %v584
  %v618 = vmax.f32 %v328, %v589
  %v619 = vmax.f32 %v333, %v594
  %v620 = vmax.f32 %v338, %v599
  %v621 = vmax.f32 %v343, %v604
  %v622 = vmax.f32 %v348, %v609
  %v623 = vmax.f32 %v353, %v614
  %vm628 = vcmask 1043456
  %v629 = vrot.slane %v620, 4
  %v630 = vrot.slane %v621, 4
  %v631 = vsel %vm628, %v629, %v630
  %v632 = vrot.slane %v622, 4
  %v633 = vsel %vm628, %v630, %v632
  %v634 = vrot.slane %v623, 4
  %v635 = vsel %vm628, %v632, %v634
  %v640 = vmax.f32 %v617, %v631
  %v641 = vmax.f32 %v618, %v633
  %v642 = vmax.f32 %v619, %v635
  %v643 = vmax.f32 %v620, %v634
  %v644 = vld [vmem:[%s2] sm:$0x1]
  %v645 = vlaneseq
  %v646 = vshrl.u32 %v645, 7
  %v647 = vsub.s32 0, %v646
  %v648 = vrot.slane %v644, %v647
  %v649 = vadd.f32 %v640, %v648
  %v650 = vadd.f32 %v641, %v648
  %v651 = vadd.f32 %v642, %v648
  %v652 = vadd.f32 %v643, %v648
  %v653 = vmax.f32 %v649, 0.0
  %v654 = vmax.f32 %v650, 0.0
  %v655 = vmax.f32 %v651, 0.0
  %v656 = vmax.f32 %v652, 0.0
  %vm657 = vcmask 687104
  %v658 = vsel %vm657, %v653, 0.0
  %v659 = vsel %vm657, %v654, 0.0
  %v660 = vadd.f32 %v658, %v659
  %v661 = vsel %vm657, %v655, 0.0
  %v662 = vadd.f32 %v660, %v661
  %vm663 = vcmask 683008
  %v664 = vsel %vm663, %v656, 0.0
  %v665 = vadd.f32 %v662, %v664
  %v666 = vrot.slane %v665, 4
  %v667 = vadd.f32 %v665, %v666
  %v668 = vrot.slane %v667, 2
  %v669 = vadd.f32 %v667, %v668
  %v670 = vrot.slane %v669, 1
  %v671 = vadd.f32 %v669, %v670
  %v672 = vld [vmem:[%s3] sm:$0xff]
  %v673 = vld [vmem:[%s3 + $0x8] sm:$0xff]
  %v674 = vld [vmem:[%s3 + $0x10] sm:$0xff]
  %v675 = vld [vmem:[%s3 + $0x18] sm:$0xff]
  %v676 = vld [vmem:[%s3 + $0x20] sm:$0xff]
  %v677 = vld [vmem:[%s3 + $0x28] sm:$0xff]
  %v678 = vld [vmem:[%s3 + $0x30] sm:$0xff]
  %v679 = vld [vmem:[%s3 + $0x38] sm:$0xff]
  %v680 = vld [vmem:[%s3 + $0x40] sm:$0xff]
  %v681 = vld [vmem:[%s3 + $0x48] sm:$0xff]
  %v682 = vld [vmem:[%s3 + $0x50] sm:$0xf]
  %v684 = vsel %vm657, %v671, 0
  %v687 = vsel %vm628, %v682, 0
  %689 = vmatprep.subr.mxu0 0.0
  %690 = vmatpush1.msra.mxu0 %v672
  %691 = vmatprep.subr.mxu0 0.0
  %692 = vmatpush1.msra.mxu0 %v673
  %693 = vmatprep.subr.mxu0 0.0
  %694 = vmatpush1.msra.mxu0 %v674
  %695 = vmatprep.subr.mxu0 0.0
  %696 = vmatpush1.msra.mxu0 %v675
  %697 = vmatprep.subr.mxu0 0.0
  %698 = vmatpush1.msra.mxu0 %v676
  %699 = vmatprep.subr.mxu0 0.0
  %700 = vmatpush1.msra.mxu0 %v677
  %701 = vmatprep.subr.mxu0 0.0
  %702 = vmatpush1.msra.mxu0 %v678
  %703 = vmatprep.subr.mxu0 0.0
  %704 = vmatpush1.msra.mxu0 %v679
  %705 = vmatprep.subr.mxu0 0.0
  %706 = vmatpush1.msra.mxu0 %v680
  %707 = vmatprep.subr.mxu0 0.0
  %708 = vmatpush1.msra.mxu0 %v681
  %709 = vmatprep.subr.mxu0 0.0
  %710 = vmatpush1.msra.mxu0 %v687
  %711 = vmatprep.subr.mxu0 0.0
  %712 = vmatpush1.msra.mxu0 0.0
  %713 = vmatprep.subr.mxu0 0.0
  %714 = vmatpush1.msra.mxu0 0.0
  %715 = vmatprep.subr.mxu0 0.0
  %716 = vmatpush1.msra.mxu0 0.0
  %717 = vmatprep.subr.mxu0 0.0
  %718 = vmatpush1.msra.mxu0 0.0
  %719 = vmatprep.subr.mxu0 0.0
  %720 = vmatpush1.msra.mxu0 0.0
  %721 = vmatprep.subr.mxu0 0.0
  %722 = vmatpush1.msra.mxu0 0.0
  %723 = vmatprep.subr.mxu0 0.0
  %724 = vmatpush1.msra.mxu0 0.0
  %725 = vmatprep.subr.mxu0 0.0
  %726 = vmatpush1.msra.mxu0 0.0
  %727 = vmatprep.subr.mxu0 0.0
  %728 = vmatpush1.msra.mxu0 0.0
  %729 = vmatprep.subr.mxu0 0.0
  %730 = vmatpush1.msra.mxu0 0.0
  %731 = vmatprep.subr.mxu0 0.0
  %732 = vmatpush1.msra.mxu0 0.0
  %733 = vmatprep.subr.mxu0 0.0
  %734 = vmatpush1.msra.mxu0 0.0
  %735 = vmatprep.subr.mxu0 0.0
  %736 = vmatpush1.msra.mxu0 0.0
  %737 = vmatprep.subr.mxu0 0.0
  %738 = vmatpush1.msra.mxu0 0.0
  %739 = vmatprep.subr.mxu0 0.0
  %740 = vmatpush1.msra.mxu0 0.0
  %741 = vmatprep.subr.mxu0 0.0
  %742 = vmatpush1.msra.mxu0 0.0
  %743 = vmatprep.subr.mxu0 0.0
  %744 = vmatpush1.msra.mxu0 0.0
  %745 = vmatprep.subr.mxu0 0.0
  %746 = vmatpush1.msra.mxu0 0.0
  %747 = vmatprep.subr.mxu0 0.0
  %748 = vmatpush1.msra.mxu0 0.0
  %749 = vmatprep.subr.mxu0 0.0
  %750 = vmatpush1.msra.mxu0 0.0
  %751 = vmatprep.subr.mxu0 0.0
  %752 = vmatpush1.msra.mxu0 0.0
  %753 = vmatprep.mubr.f32.mxu0 0.0
  %754 = vmatmul.mubr.f32.gmra.mrb[0].mxu0 %v684
  %v755 = vpop.f32.mrb[0].mxu0
  %v756 = vadd.f32 0.0, %v755
  %v757 = vpop.f32.mrb[0].mxu0
  %758 = vdwg.mxu0
  %v759 = vmul.f32 %v756, 0.0025510204
  %v760 = vld [vmem:[%s4] sm:$0x3f]
  %vm761 = vcmask 48128
  %v763 = vsel %vm761, %v759, 0
  %vm765 = vcmask 1045504
  %v767 = vsel %vm765, %v760, 0
  %769 = vmatprep.subr.mxu0 0.0
  %770 = vmatpush1.msra.mxu0 %v767
  %771 = vmatprep.subr.mxu0 0.0
  %772 = vmatpush1.msra.mxu0 0.0
  %773 = vmatprep.subr.mxu0 0.0
  %774 = vmatpush1.msra.mxu0 0.0
  %775 = vmatprep.subr.mxu0 0.0
  %776 = vmatpush1.msra.mxu0 0.0
  %777 = vmatprep.subr.mxu0 0.0
  %778 = vmatpush1.msra.mxu0 0.0
  %779 = vmatprep.subr.mxu0 0.0
  %780 = vmatpush1.msra.mxu0 0.0
  %781 = vmatprep.subr.mxu0 0.0
  %782 = vmatpush1.msra.mxu0 0.0
  %783 = vmatprep.subr.mxu0 0.0
  %784 = vmatpush1.msra.mxu0 0.0
  %785 = vmatprep.subr.mxu0 0.0
  %786 = vmatpush1.msra.mxu0 0.0
  %787 = vmatprep.subr.mxu0 0.0
  %788 = vmatpush1.msra.mxu0 0.0
  %789 = vmatprep.subr.mxu0 0.0
  %790 = vmatpush1.msra.mxu0 0.0
  %791 = vmatprep.subr.mxu0 0.0
  %792 = vmatpush1.msra.mxu0 0.0
  %793 = vmatprep.subr.mxu0 0.0
  %794 = vmatpush1.msra.mxu0 0.0
  %795 = vmatprep.subr.mxu0 0.0
  %796 = vmatpush1.msra.mxu0 0.0
  %797 = vmatprep.subr.mxu0 0.0
  %798 = vmatpush1.msra.mxu0 0.0
  %799 = vmatprep.subr.mxu0 0.0
  %800 = vmatpush1.msra.mxu0 0.0
  %801 = vmatprep.subr.mxu0 0.0
  %802 = vmatpush1.msra.mxu0 0.0
  %803 = vmatprep.subr.mxu0 0.0
  %804 = vmatpush1.msra.mxu0 0.0
  %805 = vmatprep.subr.mxu0 0.0
  %806 = vmatpush1.msra.mxu0 0.0
  %807 = vmatprep.subr.mxu0 0.0
  %808 = vmatpush1.msra.mxu0 0.0
  %809 = vmatprep.subr.mxu0 0.0
  %810 = vmatpush1.msra.mxu0 0.0
  %811 = vmatprep.subr.mxu0 0.0
  %812 = vmatpush1.msra.mxu0 0.0
  %813 = vmatprep.subr.mxu0 0.0
  %814 = vmatpush1.msra.mxu0 0.0
  %815 = vmatprep.subr.mxu0 0.0
  %816 = vmatpush1.msra.mxu0 0.0
  %817 = vmatprep.subr.mxu0 0.0
  %818 = vmatpush1.msra.mxu0 0.0
  %819 = vmatprep.subr.mxu0 0.0
  %820 = vmatpush1.msra.mxu0 0.0
  %821 = vmatprep.subr.mxu0 0.0
  %822 = vmatpush1.msra.mxu0 0.0
  %823 = vmatprep.subr.mxu0 0.0
  %824 = vmatpush1.msra.mxu0 0.0
  %825 = vmatprep.subr.mxu0 0.0
  %826 = vmatpush1.msra.mxu0 0.0
  %827 = vmatprep.subr.mxu0 0.0
  %828 = vmatpush1.msra.mxu0 0.0
  %829 = vmatprep.subr.mxu0 0.0
  %830 = vmatpush1.msra.mxu0 0.0
  %831 = vmatprep.subr.mxu0 0.0
  %832 = vmatpush1.msra.mxu0 0.0
  %833 = vmatprep.mubr.f32.mxu0 0.0
  %834 = vmatmul.mubr.f32.gmra.mrb[0].mxu0 %v763
  %v835 = vpop.f32.mrb[0].mxu0
  %v836 = vadd.f32 0.0, %v835
  %v837 = vpop.f32.mrb[0].mxu0
  %838 = vdwg.mxu0
  %v839 = vlaneseq
  %v840 = vshrl.u32 %v839, 7
  %v841 = vsub.s32 0, %v840
  %v842 = vrot.slane %v836, %v841
  %v843 = vsub.f32 %v653, %v842
  %v844 = vsub.f32 %v654, %v842
  %v845 = vsub.f32 %v655, %v842
  %v846 = vsub.f32 %v656, %v842
  %v847 = vmul.f32 %v843, %v843
  %v848 = vmul.f32 %v844, %v844
  %v849 = vmul.f32 %v845, %v845
  %v850 = vmul.f32 %v846, %v846
  %v851 = vsel %vm657, %v847, 0.0
  %v852 = vsel %vm657, %v848, 0.0
  %v853 = vadd.f32 %v851, %v852
  %v854 = vsel %vm657, %v849, 0.0
  %v855 = vadd.f32 %v853, %v854
  %v856 = vsel %vm663, %v850, 0.0
  %v857 = vadd.f32 %v855, %v856
  %v858 = vrot.slane %v857, 4
  %v859 = vadd.f32 %v857, %v858
  %v860 = vrot.slane %v859, 2
  %v861 = vadd.f32 %v859, %v860
  %v862 = vrot.slane %v861, 1
  %v863 = vadd.f32 %v861, %v862
  %v865 = vsel %vm657, %v863, 0
  %867 = vmatprep.subr.mxu0 0.0
  %868 = vmatpush1.msra.mxu0 %v672
  %869 = vmatprep.subr.mxu0 0.0
  %870 = vmatpush1.msra.mxu0 %v673
  %871 = vmatprep.subr.mxu0 0.0
  %872 = vmatpush1.msra.mxu0 %v674
  %873 = vmatprep.subr.mxu0 0.0
  %874 = vmatpush1.msra.mxu0 %v675
  %875 = vmatprep.subr.mxu0 0.0
  %876 = vmatpush1.msra.mxu0 %v676
  %877 = vmatprep.subr.mxu0 0.0
  %878 = vmatpush1.msra.mxu0 %v677
  %879 = vmatprep.subr.mxu0 0.0
  %880 = vmatpush1.msra.mxu0 %v678
  %881 = vmatprep.subr.mxu0 0.0
  %882 = vmatpush1.msra.mxu0 %v679
  %883 = vmatprep.subr.mxu0 0.0
  %884 = vmatpush1.msra.mxu0 %v680
  %885 = vmatprep.subr.mxu0 0.0
  %886 = vmatpush1.msra.mxu0 %v681
  %887 = vmatprep.subr.mxu0 0.0
  %888 = vmatpush1.msra.mxu0 %v687
  %889 = vmatprep.subr.mxu0 0.0
  %890 = vmatpush1.msra.mxu0 0.0
  %891 = vmatprep.subr.mxu0 0.0
  %892 = vmatpush1.msra.mxu0 0.0
  %893 = vmatprep.subr.mxu0 0.0
  %894 = vmatpush1.msra.mxu0 0.0
  %895 = vmatprep.subr.mxu0 0.0
  %896 = vmatpush1.msra.mxu0 0.0
  %897 = vmatprep.subr.mxu0 0.0
  %898 = vmatpush1.msra.mxu0 0.0
  %899 = vmatprep.subr.mxu0 0.0
  %900 = vmatpush1.msra.mxu0 0.0
  %901 = vmatprep.subr.mxu0 0.0
  %902 = vmatpush1.msra.mxu0 0.0
  %903 = vmatprep.subr.mxu0 0.0
  %904 = vmatpush1.msra.mxu0 0.0
  %905 = vmatprep.subr.mxu0 0.0
  %906 = vmatpush1.msra.mxu0 0.0
  %907 = vmatprep.subr.mxu0 0.0
  %908 = vmatpush1.msra.mxu0 0.0
  %909 = vmatprep.subr.mxu0 0.0
  %910 = vmatpush1.msra.mxu0 0.0
  %911 = vmatprep.subr.mxu0 0.0
  %912 = vmatpush1.msra.mxu0 0.0
  %913 = vmatprep.subr.mxu0 0.0
  %914 = vmatpush1.msra.mxu0 0.0
  %915 = vmatprep.subr.mxu0 0.0
  %916 = vmatpush1.msra.mxu0 0.0
  %917 = vmatprep.subr.mxu0 0.0
  %918 = vmatpush1.msra.mxu0 0.0
  %919 = vmatprep.subr.mxu0 0.0
  %920 = vmatpush1.msra.mxu0 0.0
  %921 = vmatprep.subr.mxu0 0.0
  %922 = vmatpush1.msra.mxu0 0.0
  %923 = vmatprep.subr.mxu0 0.0
  %924 = vmatpush1.msra.mxu0 0.0
  %925 = vmatprep.subr.mxu0 0.0
  %926 = vmatpush1.msra.mxu0 0.0
  %927 = vmatprep.subr.mxu0 0.0
  %928 = vmatpush1.msra.mxu0 0.0
  %929 = vmatprep.subr.mxu0 0.0
  %930 = vmatpush1.msra.mxu0 0.0
  %931 = vmatprep.mubr.f32.mxu0 0.0
  %932 = vmatmul.mubr.f32.gmra.mrb[0].mxu0 %v865
  %v933 = vpop.f32.mrb[0].mxu0
  %v934 = vadd.f32 0.0, %v933
  %v935 = vpop.f32.mrb[0].mxu0
  %936 = vdwg.mxu0
  %v937 = vmul.f32 %v934, 0.0025510204
  %v938 = vadd.f32 %v937, 1e-05
  %v939 = vrsqrt.pop %v938
  %v941 = vsel %vm761, %v939, 0
  %943 = vmatprep.subr.mxu0 0.0
  %944 = vmatpush1.msra.mxu0 %v767
  %945 = vmatprep.subr.mxu0 0.0
  %946 = vmatpush1.msra.mxu0 0.0
  %947 = vmatprep.subr.mxu0 0.0
  %948 = vmatpush1.msra.mxu0 0.0
  %949 = vmatprep.subr.mxu0 0.0
  %950 = vmatpush1.msra.mxu0 0.0
  %951 = vmatprep.subr.mxu0 0.0
  %952 = vmatpush1.msra.mxu0 0.0
  %953 = vmatprep.subr.mxu0 0.0
  %954 = vmatpush1.msra.mxu0 0.0
  %955 = vmatprep.subr.mxu0 0.0
  %956 = vmatpush1.msra.mxu0 0.0
  %957 = vmatprep.subr.mxu0 0.0
  %958 = vmatpush1.msra.mxu0 0.0
  %959 = vmatprep.subr.mxu0 0.0
  %960 = vmatpush1.msra.mxu0 0.0
  %961 = vmatprep.subr.mxu0 0.0
  %962 = vmatpush1.msra.mxu0 0.0
  %963 = vmatprep.subr.mxu0 0.0
  %964 = vmatpush1.msra.mxu0 0.0
  %965 = vmatprep.subr.mxu0 0.0
  %966 = vmatpush1.msra.mxu0 0.0
  %967 = vmatprep.subr.mxu0 0.0
  %968 = vmatpush1.msra.mxu0 0.0
  %969 = vmatprep.subr.mxu0 0.0
  %970 = vmatpush1.msra.mxu0 0.0
  %971 = vmatprep.subr.mxu0 0.0
  %972 = vmatpush1.msra.mxu0 0.0
  %973 = vmatprep.subr.mxu0 0.0
  %974 = vmatpush1.msra.mxu0 0.0
  %975 = vmatprep.subr.mxu0 0.0
  %976 = vmatpush1.msra.mxu0 0.0
  %977 = vmatprep.subr.mxu0 0.0
  %978 = vmatpush1.msra.mxu0 0.0
  %979 = vmatprep.subr.mxu0 0.0
  %980 = vmatpush1.msra.mxu0 0.0
  %981 = vmatprep.subr.mxu0 0.0
  %982 = vmatpush1.msra.mxu0 0.0
  %983 = vmatprep.subr.mxu0 0.0
  %984 = vmatpush1.msra.mxu0 0.0
  %985 = vmatprep.subr.mxu0 0.0
  %986 = vmatpush1.msra.mxu0 0.0
  %987 = vmatprep.subr.mxu0 0.0
  %988 = vmatpush1.msra.mxu0 0.0
  %989 = vmatprep.subr.mxu0 0.0
  %990 = vmatpush1.msra.mxu0 0.0
  %991 = vmatprep.subr.mxu0 0.0
  %992 = vmatpush1.msra.mxu0 0.0
  %993 = vmatprep.subr.mxu0 0.0
  %994 = vmatpush1.msra.mxu0 0.0
  %995 = vmatprep.subr.mxu0 0.0
  %996 = vmatpush1.msra.mxu0 0.0
  %997 = vmatprep.subr.mxu0 0.0
  %998 = vmatpush1.msra.mxu0 0.0
  %999 = vmatprep.subr.mxu0 0.0
  %1000 = vmatpush1.msra.mxu0 0.0
  %1001 = vmatprep.subr.mxu0 0.0
  %1002 = vmatpush1.msra.mxu0 0.0
  %1003 = vmatprep.subr.mxu0 0.0
  %1004 = vmatpush1.msra.mxu0 0.0
  %1005 = vmatprep.subr.mxu0 0.0
  %1006 = vmatpush1.msra.mxu0 0.0
  %1007 = vmatprep.mubr.f32.mxu0 0.0
  %1008 = vmatmul.mubr.f32.gmra.mrb[0].mxu0 %v941
  %v1009 = vpop.f32.mrb[0].mxu0
  %v1010 = vadd.f32 0.0, %v1009
  %v1011 = vpop.f32.mrb[0].mxu0
  %1012 = vdwg.mxu0
  %v1013 = vlaneseq
  %v1014 = vshrl.u32 %v1013, 7
  %v1015 = vsub.s32 0, %v1014
  %v1016 = vrot.slane %v1010, %v1015
  %v1017 = vmul.f32 %v843, %v1016
  %v1018 = vmul.f32 %v844, %v1016
  %v1019 = vmul.f32 %v845, %v1016
  %v1020 = vmul.f32 %v846, %v1016
  %v1021 = vld [vmem:[%s2 + $0x1] sm:$0x1]
  %v1022 = vlaneseq
  %v1023 = vshrl.u32 %v1022, 7
  %v1024 = vsub.s32 0, %v1023
  %v1025 = vrot.slane %v1021, %v1024
  %v1026 = vmul.f32 %v1017, %v1025
  %v1027 = vmul.f32 %v1018, %v1025
  %v1028 = vmul.f32 %v1019, %v1025
  %v1029 = vmul.f32 %v1020, %v1025
  %v1030 = vld [vmem:[%s2 + $0x2] sm:$0x1]
  %v1031 = vlaneseq
  %v1032 = vshrl.u32 %v1031, 7
  %v1033 = vsub.s32 0, %v1032
  %v1034 = vrot.slane %v1030, %v1033
  %v1035 = vadd.f32 %v1026, %v1034
  %v1036 = vadd.f32 %v1027, %v1034
  %v1037 = vadd.f32 %v1028, %v1034
  %v1038 = vadd.f32 %v1029, %v1034
  %v1039 = vld [vmem:[%s5] sm:$0xff]
  %v1040 = vld [vmem:[%s5 + $0x8] sm:$0xff]
  %v1041 = vld [vmem:[%s5 + $0x10] sm:$0xff]
  %v1042 = vld [vmem:[%s5 + $0x18] sm:$0xff]
  %v1043 = vld [vmem:[%s5 + $0x20] sm:$0xff]
  %v1044 = vld [vmem:[%s5 + $0x28] sm:$0xff]
  %v1045 = vld [vmem:[%s5 + $0x30] sm:$0xff]
  %v1046 = vld [vmem:[%s5 + $0x38] sm:$0xff]
  %v1047 = vld [vmem:[%s5 + $0x40] sm:$0xff]
  %v1048 = vld [vmem:[%s5 + $0x48] sm:$0xff]
  %v1049 = vld [vmem:[%s5 + $0x50] sm:$0xf]
  %s1050 = scalar_lea.vmem %s5, 88
  %v1051 = vld [vmem:[%s1050] sm:$0xff]
  %v1052 = vld [vmem:[%s1050 + $0x8] sm:$0xff]
  %v1053 = vld [vmem:[%s1050 + $0x10] sm:$0xff]
  %v1054 = vld [vmem:[%s1050 + $0x18] sm:$0xff]
  %v1055 = vld [vmem:[%s1050 + $0x20] sm:$0xff]
  %v1056 = vld [vmem:[%s1050 + $0x28] sm:$0xff]
  %v1057 = vld [vmem:[%s1050 + $0x30] sm:$0xff]
  %v1058 = vld [vmem:[%s1050 + $0x38] sm:$0xff]
  %v1059 = vld [vmem:[%s1050 + $0x40] sm:$0xff]
  %v1060 = vld [vmem:[%s1050 + $0x48] sm:$0xff]
  %v1061 = vld [vmem:[%s1050 + $0x50] sm:$0xf]
  %vm1064 = vcmask 1041408
  %v1065 = vrot.slane %v1036, 6
  %v1066 = vrot.slane %v1037, 6
  %v1067 = vsel %vm1064, %v1065, %v1066
  %v1068 = vsel %vm657, %v1067, 0
  %v1070 = vsel %vm657, %v1066, 0
  %v1073 = vsel %vm628, %v1061, 0
  %1075 = vmatprep.subr.mxu0 0.0
  %1076 = vmatpush1.msra.mxu0 %v1051
  %1077 = vmatprep.subr.mxu0 0.0
  %1078 = vmatpush1.msra.mxu0 %v1052
  %1079 = vmatprep.subr.mxu0 0.0
  %1080 = vmatpush1.msra.mxu0 %v1053
  %1081 = vmatprep.subr.mxu0 0.0
  %1082 = vmatpush1.msra.mxu0 %v1054
  %1083 = vmatprep.subr.mxu0 0.0
  %1084 = vmatpush1.msra.mxu0 %v1055
  %1085 = vmatprep.subr.mxu0 0.0
  %1086 = vmatpush1.msra.mxu0 %v1056
  %1087 = vmatprep.subr.mxu0 0.0
  %1088 = vmatpush1.msra.mxu0 %v1057
  %1089 = vmatprep.subr.mxu0 0.0
  %1090 = vmatpush1.msra.mxu0 %v1058
  %1091 = vmatprep.subr.mxu0 0.0
  %1092 = vmatpush1.msra.mxu0 %v1059
  %1093 = vmatprep.subr.mxu0 0.0
  %1094 = vmatpush1.msra.mxu0 %v1060
  %1095 = vmatprep.subr.mxu0 0.0
  %1096 = vmatpush1.msra.mxu0 %v1073
  %1097 = vmatprep.subr.mxu0 0.0
  %1098 = vmatpush1.msra.mxu0 0.0
  %1099 = vmatprep.subr.mxu0 0.0
  %1100 = vmatpush1.msra.mxu0 0.0
  %1101 = vmatprep.subr.mxu0 0.0
  %1102 = vmatpush1.msra.mxu0 0.0
  %1103 = vmatprep.subr.mxu0 0.0
  %1104 = vmatpush1.msra.mxu0 0.0
  %1105 = vmatprep.subr.mxu0 0.0
  %1106 = vmatpush1.msra.mxu0 0.0
  %1107 = vmatprep.subr.mxu0 0.0
  %1108 = vmatpush1.msra.mxu0 0.0
  %1109 = vmatprep.subr.mxu0 0.0
  %1110 = vmatpush1.msra.mxu0 0.0
  %1111 = vmatprep.subr.mxu0 0.0
  %1112 = vmatpush1.msra.mxu0 0.0
  %1113 = vmatprep.subr.mxu0 0.0
  %1114 = vmatpush1.msra.mxu0 0.0
  %1115 = vmatprep.subr.mxu0 0.0
  %1116 = vmatpush1.msra.mxu0 0.0
  %1117 = vmatprep.subr.mxu0 0.0
  %1118 = vmatpush1.msra.mxu0 0.0
  %1119 = vmatprep.subr.mxu0 0.0
  %1120 = vmatpush1.msra.mxu0 0.0
  %1121 = vmatprep.subr.mxu0 0.0
  %1122 = vmatpush1.msra.mxu0 0.0
  %1123 = vmatprep.subr.mxu0 0.0
  %1124 = vmatpush1.msra.mxu0 0.0
  %1125 = vmatprep.subr.mxu0 0.0
  %1126 = vmatpush1.msra.mxu0 0.0
  %1127 = vmatprep.subr.mxu0 0.0
  %1128 = vmatpush1.msra.mxu0 0.0
  %1129 = vmatprep.subr.mxu0 0.0
  %1130 = vmatpush1.msra.mxu0 0.0
  %1131 = vmatprep.subr.mxu0 0.0
  %1132 = vmatpush1.msra.mxu0 0.0
  %1133 = vmatprep.subr.mxu0 0.0
  %1134 = vmatpush1.msra.mxu0 0.0
  %1135 = vmatprep.subr.mxu0 0.0
  %1136 = vmatpush1.msra.mxu0 0.0
  %1137 = vmatprep.subr.mxu0 0.0
  %1138 = vmatpush1.msra.mxu0 0.0
  %1139 = vmatprep.mubr.f32.mxu0 0.0
  %1140 = vmatmul.mubr.f32.gmra.mrb[0].mxu0 %v1068
  %v1141 = vpop.f32.mrb[0].mxu0
  %v1142 = vadd.f32 0.0, %v1141
  %v1143 = vpop.f32.mrb[0].mxu0
  %1144 = vmatprep.mubr.f32.mxu0 0.0
  %1145 = vmatmul.mubr.f32.gmra.mrb[0].mxu0 %v1070
  %v1146 = vpop.f32.mrb[0].mxu0
  %v1147 = vadd.f32 0.0, %v1146
  %v1148 = vpop.f32.mrb[0].mxu0
  %1149 = vdwg.mxu0
  %v1151 = vsel %vm657, %v1035, 0
  %v1153 = vsel %vm657, %v1036, 0
  %v1156 = vsel %vm628, %v1049, 0
  %1158 = vmatprep.subr.mxu0 0.0
  %1159 = vmatpush1.msra.mxu0 %v1039
  %1160 = vmatprep.subr.mxu0 0.0
  %1161 = vmatpush1.msra.mxu0 %v1040
  %1162 = vmatprep.subr.mxu0 0.0
  %1163 = vmatpush1.msra.mxu0 %v1041
  %1164 = vmatprep.subr.mxu0 0.0
  %1165 = vmatpush1.msra.mxu0 %v1042
  %1166 = vmatprep.subr.mxu0 0.0
  %1167 = vmatpush1.msra.mxu0 %v1043
  %1168 = vmatprep.subr.mxu0 0.0
  %1169 = vmatpush1.msra.mxu0 %v1044
  %1170 = vmatprep.subr.mxu0 0.0
  %1171 = vmatpush1.msra.mxu0 %v1045
  %1172 = vmatprep.subr.mxu0 0.0
  %1173 = vmatpush1.msra.mxu0 %v1046
  %1174 = vmatprep.subr.mxu0 0.0
  %1175 = vmatpush1.msra.mxu0 %v1047
  %1176 = vmatprep.subr.mxu0 0.0
  %1177 = vmatpush1.msra.mxu0 %v1048
  %1178 = vmatprep.subr.mxu0 0.0
  %1179 = vmatpush1.msra.mxu0 %v1156
  %1180 = vmatprep.subr.mxu0 0.0
  %1181 = vmatpush1.msra.mxu0 0.0
  %1182 = vmatprep.subr.mxu0 0.0
  %1183 = vmatpush1.msra.mxu0 0.0
  %1184 = vmatprep.subr.mxu0 0.0
  %1185 = vmatpush1.msra.mxu0 0.0
  %1186 = vmatprep.subr.mxu0 0.0
  %1187 = vmatpush1.msra.mxu0 0.0
  %1188 = vmatprep.subr.mxu0 0.0
  %1189 = vmatpush1.msra.mxu0 0.0
  %1190 = vmatprep.subr.mxu0 0.0
  %1191 = vmatpush1.msra.mxu0 0.0
  %1192 = vmatprep.subr.mxu0 0.0
  %1193 = vmatpush1.msra.mxu0 0.0
  %1194 = vmatprep.subr.mxu0 0.0
  %1195 = vmatpush1.msra.mxu0 0.0
  %1196 = vmatprep.subr.mxu0 0.0
  %1197 = vmatpush1.msra.mxu0 0.0
  %1198 = vmatprep.subr.mxu0 0.0
  %1199 = vmatpush1.msra.mxu0 0.0
  %1200 = vmatprep.subr.mxu0 0.0
  %1201 = vmatpush1.msra.mxu0 0.0
  %1202 = vmatprep.subr.mxu0 0.0
  %1203 = vmatpush1.msra.mxu0 0.0
  %1204 = vmatprep.subr.mxu0 0.0
  %1205 = vmatpush1.msra.mxu0 0.0
  %1206 = vmatprep.subr.mxu0 0.0
  %1207 = vmatpush1.msra.mxu0 0.0
  %1208 = vmatprep.subr.mxu0 0.0
  %1209 = vmatpush1.msra.mxu0 0.0
  %1210 = vmatprep.subr.mxu0 0.0
  %1211 = vmatpush1.msra.mxu0 0.0
  %1212 = vmatprep.subr.mxu0 0.0
  %1213 = vmatpush1.msra.mxu0 0.0
  %1214 = vmatprep.subr.mxu0 0.0
  %1215 = vmatpush1.msra.mxu0 0.0
  %1216 = vmatprep.subr.mxu0 0.0
  %1217 = vmatpush1.msra.mxu0 0.0
  %1218 = vmatprep.subr.mxu0 0.0
  %1219 = vmatpush1.msra.mxu0 0.0
  %1220 = vmatprep.subr.mxu0 0.0
  %1221 = vmatpush1.msra.mxu0 0.0
  %1222 = vmatprep.mubr.f32.mxu0 0.0
  %1223 = vmatmul.mubr.f32.gmra.mrb[0].mxu0 %v1151
  %v1224 = vpop.f32.mrb[0].mxu0
  %v1225 = vadd.f32 %v1142, %v1224
  %v1226 = vpop.f32.mrb[0].mxu0
  %1227 = vmatprep.mubr.f32.mxu0 0.0
  %1228 = vmatmul.mubr.f32.gmra.mrb[0].mxu0 %v1153
  %v1229 = vpop.f32.mrb[0].mxu0
  %v1230 = vadd.f32 %v1147, %v1229
  %v1231 = vpop.f32.mrb[0].mxu0
  %1232 = vdwg.mxu0
  %s1233 = scalar_lea.vmem %s5, 176
  %v1234 = vld [vmem:[%s1233] sm:$0xff]
  %v1235 = vld [vmem:[%s1233 + $0x8] sm:$0xff]
  %v1236 = vld [vmem:[%s1233 + $0x10] sm:$0xff]
  %v1237 = vld [vmem:[%s1233 + $0x18] sm:$0xff]
  %v1238 = vld [vmem:[%s1233 + $0x20] sm:$0xff]
  %v1239 = vld [vmem:[%s1233 + $0x28] sm:$0xff]
  %v1240 = vld [vmem:[%s1233 + $0x30] sm:$0xff]
  %v1241 = vld [vmem:[%s1233 + $0x38] sm:$0xff]
  %v1242 = vld [vmem:[%s1233 + $0x40] sm:$0xff]
  %v1243 = vld [vmem:[%s1233 + $0x48] sm:$0xff]
  %v1244 = vld [vmem:[%s1233 + $0x50] sm:$0xf]
  %v1245 = vrot.slane %v1035, 2
  %v1246 = vrot.slane %v1036, 2
  %v1247 = vsel %vm765, %v1245, %v1246
  %v1248 = vsel %vm657, %v1247, 0
  %v1250 = vsel %vm657, %v1246, 0
  %v1253 = vsel %vm628, %v1244, 0
  %1255 = vmatprep.subr.mxu0 0.0
  %1256 = vmatpush1.msra.mxu0 %v1234
  %1257 = vmatprep.subr.mxu0 0.0
  %1258 = vmatpush1.msra.mxu0 %v1235
  %1259 = vmatprep.subr.mxu0 0.0
  %1260 = vmatpush1.msra.mxu0 %v1236
  %1261 = vmatprep.subr.mxu0 0.0
  %1262 = vmatpush1.msra.mxu0 %v1237
  %1263 = vmatprep.subr.mxu0 0.0
  %1264 = vmatpush1.msra.mxu0 %v1238
  %1265 = vmatprep.subr.mxu0 0.0
  %1266 = vmatpush1.msra.mxu0 %v1239
  %1267 = vmatprep.subr.mxu0 0.0
  %1268 = vmatpush1.msra.mxu0 %v1240
  %1269 = vmatprep.subr.mxu0 0.0
  %1270 = vmatpush1.msra.mxu0 %v1241
  %1271 = vmatprep.subr.mxu0 0.0
  %1272 = vmatpush1.msra.mxu0 %v1242
  %1273 = vmatprep.subr.mxu0 0.0
  %1274 = vmatpush1.msra.mxu0 %v1243
  %1275 = vmatprep.subr.mxu0 0.0
  %1276 = vmatpush1.msra.mxu0 %v1253
  %1277 = vmatprep.subr.mxu0 0.0
  %1278 = vmatpush1.msra.mxu0 0.0
  %1279 = vmatprep.subr.mxu0 0.0
  %1280 = vmatpush1.msra.mxu0 0.0
  %1281 = vmatprep.subr.mxu0 0.0
  %1282 = vmatpush1.msra.mxu0 0.0
  %1283 = vmatprep.subr.mxu0 0.0
  %1284 = vmatpush1.msra.mxu0 0.0
  %1285 = vmatprep.subr.mxu0 0.0
  %1286 = vmatpush1.msra.mxu0 0.0
  %1287 = vmatprep.subr.mxu0 0.0
  %1288 = vmatpush1.msra.mxu0 0.0
  %1289 = vmatprep.subr.mxu0 0.0
  %1290 = vmatpush1.msra.mxu0 0.0
  %1291 = vmatprep.subr.mxu0 0.0
  %1292 = vmatpush1.msra.mxu0 0.0
  %1293 = vmatprep.subr.mxu0 0.0
  %1294 = vmatpush1.msra.mxu0 0.0
  %1295 = vmatprep.subr.mxu0 0.0
  %1296 = vmatpush1.msra.mxu0 0.0
  %1297 = vmatprep.subr.mxu0 0.0
  %1298 = vmatpush1.msra.mxu0 0.0
  %1299 = vmatprep.subr.mxu0 0.0
  %1300 = vmatpush1.msra.mxu0 0.0
  %1301 = vmatprep.subr.mxu0 0.0
  %1302 = vmatpush1.msra.mxu0 0.0
  %1303 = vmatprep.subr.mxu0 0.0
  %1304 = vmatpush1.msra.mxu0 0.0
  %1305 = vmatprep.subr.mxu0 0.0
  %1306 = vmatpush1.msra.mxu0 0.0
  %1307 = vmatprep.subr.mxu0 0.0
  %1308 = vmatpush1.msra.mxu0 0.0
  %1309 = vmatprep.subr.mxu0 0.0
  %1310 = vmatpush1.msra.mxu0 0.0
  %1311 = vmatprep.subr.mxu0 0.0
  %1312 = vmatpush1.msra.mxu0 0.0
  %1313 = vmatprep.subr.mxu0 0.0
  %1314 = vmatpush1.msra.mxu0 0.0
  %1315 = vmatprep.subr.mxu0 0.0
  %1316 = vmatpush1.msra.mxu0 0.0
  %1317 = vmatprep.subr.mxu0 0.0
  %1318 = vmatpush1.msra.mxu0 0.0
  %1319 = vmatprep.mubr.f32.mxu0 0.0
  %1320 = vmatmul.mubr.f32.gmra.mrb[0].mxu0 %v1248
  %v1321 = vpop.f32.mrb[0].mxu0
  %v1322 = vadd.f32 0.0, %v1321
  %v1323 = vpop.f32.mrb[0].mxu0
  %1324 = vmatprep.mubr.f32.mxu0 0.0
  %1325 = vmatmul.mubr.f32.gmra.mrb[0].mxu0 %v1250
  %v1326 = vpop.f32.mrb[0].mxu0
  %v1327 = vadd.f32 0.0, %v1326
  %v1328 = vpop.f32.mrb[0].mxu0
  %1329 = vdwg.mxu0
  %v1330 = vadd.f32 %v1225, %v1322
  %v1331 = vadd.f32 %v1230, %v1327
  %s1332 = scalar_lea.vmem %s5, 264
  %v1333 = vld [vmem:[%s1332] sm:$0xff]
  %v1334 = vld [vmem:[%s1332 + $0x8] sm:$0xff]
  %v1335 = vld [vmem:[%s1332 + $0x10] sm:$0xff]
  %v1336 = vld [vmem:[%s1332 + $0x18] sm:$0xff]
  %v1337 = vld [vmem:[%s1332 + $0x20] sm:$0xff]
  %v1338 = vld [vmem:[%s1332 + $0x28] sm:$0xff]
  %v1339 = vld [vmem:[%s1332 + $0x30] sm:$0xff]
  %v1340 = vld [vmem:[%s1332 + $0x38] sm:$0xff]
  %v1341 = vld [vmem:[%s1332 + $0x40] sm:$0xff]
  %v1342 = vld [vmem:[%s1332 + $0x48] sm:$0xff]
  %v1343 = vld [vmem:[%s1332 + $0x50] sm:$0xf]
  %v1344 = vsel %vm657, %v1037, 0
  %v1347 = vsel %vm657, %v1038, 0
  %v1350 = vsel %vm628, %v1343, 0
  %1352 = vmatprep.subr.mxu0 0.0
  %1353 = vmatpush1.msra.mxu0 %v1333
  %1354 = vmatprep.subr.mxu0 0.0
  %1355 = vmatpush1.msra.mxu0 %v1334
  %1356 = vmatprep.subr.mxu0 0.0
  %1357 = vmatpush1.msra.mxu0 %v1335
  %1358 = vmatprep.subr.mxu0 0.0
  %1359 = vmatpush1.msra.mxu0 %v1336
  %1360 = vmatprep.subr.mxu0 0.0
  %1361 = vmatpush1.msra.mxu0 %v1337
  %1362 = vmatprep.subr.mxu0 0.0
  %1363 = vmatpush1.msra.mxu0 %v1338
  %1364 = vmatprep.subr.mxu0 0.0
  %1365 = vmatpush1.msra.mxu0 %v1339
  %1366 = vmatprep.subr.mxu0 0.0
  %1367 = vmatpush1.msra.mxu0 %v1340
  %1368 = vmatprep.subr.mxu0 0.0
  %1369 = vmatpush1.msra.mxu0 %v1341
  %1370 = vmatprep.subr.mxu0 0.0
  %1371 = vmatpush1.msra.mxu0 %v1342
  %1372 = vmatprep.subr.mxu0 0.0
  %1373 = vmatpush1.msra.mxu0 %v1350
  %1374 = vmatprep.subr.mxu0 0.0
  %1375 = vmatpush1.msra.mxu0 0.0
  %1376 = vmatprep.subr.mxu0 0.0
  %1377 = vmatpush1.msra.mxu0 0.0
  %1378 = vmatprep.subr.mxu0 0.0
  %1379 = vmatpush1.msra.mxu0 0.0
  %1380 = vmatprep.subr.mxu0 0.0
  %1381 = vmatpush1.msra.mxu0 0.0
  %1382 = vmatprep.subr.mxu0 0.0
  %1383 = vmatpush1.msra.mxu0 0.0
  %1384 = vmatprep.subr.mxu0 0.0
  %1385 = vmatpush1.msra.mxu0 0.0
  %1386 = vmatprep.subr.mxu0 0.0
  %1387 = vmatpush1.msra.mxu0 0.0
  %1388 = vmatprep.subr.mxu0 0.0
  %1389 = vmatpush1.msra.mxu0 0.0
  %1390 = vmatprep.subr.mxu0 0.0
  %1391 = vmatpush1.msra.mxu0 0.0
  %1392 = vmatprep.subr.mxu0 0.0
  %1393 = vmatpush1.msra.mxu0 0.0
  %1394 = vmatprep.subr.mxu0 0.0
  %1395 = vmatpush1.msra.mxu0 0.0
  %1396 = vmatprep.subr.mxu0 0.0
  %1397 = vmatpush1.msra.mxu0 0.0
  %1398 = vmatprep.subr.mxu0 0.0
  %1399 = vmatpush1.msra.mxu0 0.0
  %1400 = vmatprep.subr.mxu0 0.0
  %1401 = vmatpush1.msra.mxu0 0.0
  %1402 = vmatprep.subr.mxu0 0.0
  %1403 = vmatpush1.msra.mxu0 0.0
  %1404 = vmatprep.subr.mxu0 0.0
  %1405 = vmatpush1.msra.mxu0 0.0
  %1406 = vmatprep.subr.mxu0 0.0
  %1407 = vmatpush1.msra.mxu0 0.0
  %1408 = vmatprep.subr.mxu0 0.0
  %1409 = vmatpush1.msra.mxu0 0.0
  %1410 = vmatprep.subr.mxu0 0.0
  %1411 = vmatpush1.msra.mxu0 0.0
  %1412 = vmatprep.subr.mxu0 0.0
  %1413 = vmatpush1.msra.mxu0 0.0
  %1414 = vmatprep.subr.mxu0 0.0
  %1415 = vmatpush1.msra.mxu0 0.0
  %1416 = vmatprep.mubr.f32.mxu0 0.0
  %1417 = vmatmul.mubr.f32.gmra.mrb[0].mxu0 %v1344
  %v1418 = vpop.f32.mrb[0].mxu0
  %v1419 = vadd.f32 0.0, %v1418
  %v1420 = vpop.f32.mrb[0].mxu0
  %1421 = vmatprep.mubr.f32.mxu0 0.0
  %1422 = vmatmul.mubr.f32.gmra.mrb[0].mxu0 %v1347
  %v1423 = vpop.f32.mrb[0].mxu0
  %v1424 = vadd.f32 0.0, %v1423
  %v1425 = vpop.f32.mrb[0].mxu0
  %1426 = vdwg.mxu0
  %v1427 = vadd.f32 %v1330, %v1419
  %v1428 = vadd.f32 %v1331, %v1424
  %s1429 = scalar_lea.vmem %s5, 352
  %v1430 = vld [vmem:[%s1429] sm:$0xff]
  %v1431 = vld [vmem:[%s1429 + $0x8] sm:$0xff]
  %v1432 = vld [vmem:[%s1429 + $0x10] sm:$0xff]
  %v1433 = vld [vmem:[%s1429 + $0x18] sm:$0xff]
  %v1434 = vld [vmem:[%s1429 + $0x20] sm:$0xff]
  %v1435 = vld [vmem:[%s1429 + $0x28] sm:$0xff]
  %v1436 = vld [vmem:[%s1429 + $0x30] sm:$0xff]
  %v1437 = vld [vmem:[%s1429 + $0x38] sm:$0xff]
  %v1438 = vld [vmem:[%s1429 + $0x40] sm:$0xff]
  %v1439 = vld [vmem:[%s1429 + $0x48] sm:$0xff]
  %v1440 = vld [vmem:[%s1429 + $0x50] sm:$0xf]
  %v1441 = vrot.slane %v1035, 4
  %v1442 = vrot.slane %v1036, 4
  %v1443 = vsel %vm628, %v1441, %v1442
  %v1444 = vsel %vm657, %v1443, 0
  %v1446 = vsel %vm657, %v1442, 0
  %v1449 = vsel %vm628, %v1440, 0
  %1451 = vmatprep.subr.mxu0 0.0
  %1452 = vmatpush1.msra.mxu0 %v1430
  %1453 = vmatprep.subr.mxu0 0.0
  %1454 = vmatpush1.msra.mxu0 %v1431
  %1455 = vmatprep.subr.mxu0 0.0
  %1456 = vmatpush1.msra.mxu0 %v1432
  %1457 = vmatprep.subr.mxu0 0.0
  %1458 = vmatpush1.msra.mxu0 %v1433
  %1459 = vmatprep.subr.mxu0 0.0
  %1460 = vmatpush1.msra.mxu0 %v1434
  %1461 = vmatprep.subr.mxu0 0.0
  %1462 = vmatpush1.msra.mxu0 %v1435
  %1463 = vmatprep.subr.mxu0 0.0
  %1464 = vmatpush1.msra.mxu0 %v1436
  %1465 = vmatprep.subr.mxu0 0.0
  %1466 = vmatpush1.msra.mxu0 %v1437
  %1467 = vmatprep.subr.mxu0 0.0
  %1468 = vmatpush1.msra.mxu0 %v1438
  %1469 = vmatprep.subr.mxu0 0.0
  %1470 = vmatpush1.msra.mxu0 %v1439
  %1471 = vmatprep.subr.mxu0 0.0
  %1472 = vmatpush1.msra.mxu0 %v1449
  %1473 = vmatprep.subr.mxu0 0.0
  %1474 = vmatpush1.msra.mxu0 0.0
  %1475 = vmatprep.subr.mxu0 0.0
  %1476 = vmatpush1.msra.mxu0 0.0
  %1477 = vmatprep.subr.mxu0 0.0
  %1478 = vmatpush1.msra.mxu0 0.0
  %1479 = vmatprep.subr.mxu0 0.0
  %1480 = vmatpush1.msra.mxu0 0.0
  %1481 = vmatprep.subr.mxu0 0.0
  %1482 = vmatpush1.msra.mxu0 0.0
  %1483 = vmatprep.subr.mxu0 0.0
  %1484 = vmatpush1.msra.mxu0 0.0
  %1485 = vmatprep.subr.mxu0 0.0
  %1486 = vmatpush1.msra.mxu0 0.0
  %1487 = vmatprep.subr.mxu0 0.0
  %1488 = vmatpush1.msra.mxu0 0.0
  %1489 = vmatprep.subr.mxu0 0.0
  %1490 = vmatpush1.msra.mxu0 0.0
  %1491 = vmatprep.subr.mxu0 0.0
  %1492 = vmatpush1.msra.mxu0 0.0
  %1493 = vmatprep.subr.mxu0 0.0
  %1494 = vmatpush1.msra.mxu0 0.0
  %1495 = vmatprep.subr.mxu0 0.0
  %1496 = vmatpush1.msra.mxu0 0.0
  %1497 = vmatprep.subr.mxu0 0.0
  %1498 = vmatpush1.msra.mxu0 0.0
  %1499 = vmatprep.subr.mxu0 0.0
  %1500 = vmatpush1.msra.mxu0 0.0
  %1501 = vmatprep.subr.mxu0 0.0
  %1502 = vmatpush1.msra.mxu0 0.0
  %1503 = vmatprep.subr.mxu0 0.0
  %1504 = vmatpush1.msra.mxu0 0.0
  %1505 = vmatprep.subr.mxu0 0.0
  %1506 = vmatpush1.msra.mxu0 0.0
  %1507 = vmatprep.subr.mxu0 0.0
  %1508 = vmatpush1.msra.mxu0 0.0
  %1509 = vmatprep.subr.mxu0 0.0
  %1510 = vmatpush1.msra.mxu0 0.0
  %1511 = vmatprep.subr.mxu0 0.0
  %1512 = vmatpush1.msra.mxu0 0.0
  %1513 = vmatprep.subr.mxu0 0.0
  %1514 = vmatpush1.msra.mxu0 0.0
  %1515 = vmatprep.mubr.f32.mxu0 0.0
  %1516 = vmatmul.mubr.f32.gmra.mrb[0].mxu0 %v1444
  %v1517 = vpop.f32.mrb[0].mxu0
  %v1518 = vadd.f32 0.0, %v1517
  %v1519 = vpop.f32.mrb[0].mxu0
  %1520 = vmatprep.mubr.f32.mxu0 0.0
  %1521 = vmatmul.mubr.f32.gmra.mrb[0].mxu0 %v1446
  %v1522 = vpop.f32.mrb[0].mxu0
  %v1523 = vadd.f32 0.0, %v1522
  %v1524 = vpop.f32.mrb[0].mxu0
  %1525 = vdwg.mxu0
  %v1526 = vadd.f32 %v1427, %v1518
  %v1527 = vadd.f32 %v1428, %v1523
  %s1528 = scalar_lea.vmem %s5, 440
  %v1529 = vld [vmem:[%s1528] sm:$0xff]
  %v1530 = vld [vmem:[%s1528 + $0x8] sm:$0xff]
  %v1531 = vld [vmem:[%s1528 + $0x10] sm:$0xff]
  %v1532 = vld [vmem:[%s1528 + $0x18] sm:$0xff]
  %v1533 = vld [vmem:[%s1528 + $0x20] sm:$0xff]
  %v1534 = vld [vmem:[%s1528 + $0x28] sm:$0xff]
  %v1535 = vld [vmem:[%s1528 + $0x30] sm:$0xff]
  %v1536 = vld [vmem:[%s1528 + $0x38] sm:$0xff]
  %v1537 = vld [vmem:[%s1528 + $0x40] sm:$0xff]
  %v1538 = vld [vmem:[%s1528 + $0x48] sm:$0xff]
  %v1539 = vld [vmem:[%s1528 + $0x50] sm:$0xf]
  %s1540 = scalar_lea.vmem %s5, 528
  %v1541 = vld [vmem:[%s1540] sm:$0xff]
  %v1542 = vld [vmem:[%s1540 + $0x8] sm:$0xff]
  %v1543 = vld [vmem:[%s1540 + $0x10] sm:$0xff]
  %v1544 = vld [vmem:[%s1540 + $0x18] sm:$0xff]
  %v1545 = vld [vmem:[%s1540 + $0x20] sm:$0xff]
  %v1546 = vld [vmem:[%s1540 + $0x28] sm:$0xff]
  %v1547 = vld [vmem:[%s1540 + $0x30] sm:$0xff]
  %v1548 = vld [vmem:[%s1540 + $0x38] sm:$0xff]
  %v1549 = vld [vmem:[%s1540 + $0x40] sm:$0xff]
  %v1550 = vld [vmem:[%s1540 + $0x48] sm:$0xff]
  %v1551 = vld [vmem:[%s1540 + $0x50] sm:$0xf]
  %v1553 = vsel %vm628, %v1551, 0
  %1555 = vmatprep.subr.mxu0 0.0
  %1556 = vmatpush1.msra.mxu0 %v1541
  %1557 = vmatprep.subr.mxu0 0.0
  %1558 = vmatpush1.msra.mxu0 %v1542
  %1559 = vmatprep.subr.mxu0 0.0
  %1560 = vmatpush1.msra.mxu0 %v1543
  %1561 = vmatprep.subr.mxu0 0.0
  %1562 = vmatpush1.msra.mxu0 %v1544
  %1563 = vmatprep.subr.mxu0 0.0
  %1564 = vmatpush1.msra.mxu0 %v1545
  %1565 = vmatprep.subr.mxu0 0.0
  %1566 = vmatpush1.msra.mxu0 %v1546
  %1567 = vmatprep.subr.mxu0 0.0
  %1568 = vmatpush1.msra.mxu0 %v1547
  %1569 = vmatprep.subr.mxu0 0.0
  %1570 = vmatpush1.msra.mxu0 %v1548
  %1571 = vmatprep.subr.mxu0 0.0
  %1572 = vmatpush1.msra.mxu0 %v1549
  %1573 = vmatprep.subr.mxu0 0.0
  %1574 = vmatpush1.msra.mxu0 %v1550
  %1575 = vmatprep.subr.mxu0 0.0
  %1576 = vmatpush1.msra.mxu0 %v1553
  %1577 = vmatprep.subr.mxu0 0.0
  %1578 = vmatpush1.msra.mxu0 0.0
  %1579 = vmatprep.subr.mxu0 0.0
  %1580 = vmatpush1.msra.mxu0 0.0
  %1581 = vmatprep.subr.mxu0 0.0
  %1582 = vmatpush1.msra.mxu0 0.0
  %1583 = vmatprep.subr.mxu0 0.0
  %1584 = vmatpush1.msra.mxu0 0.0
  %1585 = vmatprep.subr.mxu0 0.0
  %1586 = vmatpush1.msra.mxu0 0.0
  %1587 = vmatprep.subr.mxu0 0.0
  %1588 = vmatpush1.msra.mxu0 0.0
  %1589 = vmatprep.subr.mxu0 0.0
  %1590 = vmatpush1.msra.mxu0 0.0
  %1591 = vmatprep.subr.mxu0 0.0
  %1592 = vmatpush1.msra.mxu0 0.0
  %1593 = vmatprep.subr.mxu0 0.0
  %1594 = vmatpush1.msra.mxu0 0.0
  %1595 = vmatprep.subr.mxu0 0.0
  %1596 = vmatpush1.msra.mxu0 0.0
  %1597 = vmatprep.subr.mxu0 0.0
  %1598 = vmatpush1.msra.mxu0 0.0
  %1599 = vmatprep.subr.mxu0 0.0
  %1600 = vmatpush1.msra.mxu0 0.0
  %1601 = vmatprep.subr.mxu0 0.0
  %1602 = vmatpush1.msra.mxu0 0.0
  %1603 = vmatprep.subr.mxu0 0.0
  %1604 = vmatpush1.msra.mxu0 0.0
  %1605 = vmatprep.subr.mxu0 0.0
  %1606 = vmatpush1.msra.mxu0 0.0
  %1607 = vmatprep.subr.mxu0 0.0
  %1608 = vmatpush1.msra.mxu0 0.0
  %1609 = vmatprep.subr.mxu0 0.0
  %1610 = vmatpush1.msra.mxu0 0.0
  %1611 = vmatprep.subr.mxu0 0.0
  %1612 = vmatpush1.msra.mxu0 0.0
  %1613 = vmatprep.subr.mxu0 0.0
  %1614 = vmatpush1.msra.mxu0 0.0
  %1615 = vmatprep.subr.mxu0 0.0
  %1616 = vmatpush1.msra.mxu0 0.0
  %1617 = vmatprep.subr.mxu0 0.0
  %1618 = vmatpush1.msra.mxu0 0.0
  %1619 = vmatprep.mubr.f32.mxu0 0.0
  %1620 = vmatmul.mubr.f32.gmra.mrb[0].mxu0 %v1068
  %v1621 = vpop.f32.mrb[0].mxu0
  %v1622 = vadd.f32 0.0, %v1621
  %v1623 = vpop.f32.mrb[0].mxu0
  %1624 = vmatprep.mubr.f32.mxu0 0.0
  %1625 = vmatmul.mubr.f32.gmra.mrb[0].mxu0 %v1070
  %v1626 = vpop.f32.mrb[0].mxu0
  %v1627 = vadd.f32 0.0, %v1626
  %v1628 = vpop.f32.mrb[0].mxu0
  %1629 = vdwg.mxu0
  %v1631 = vsel %vm628, %v1539, 0
  %1633 = vmatprep.subr.mxu0 0.0
  %1634 = vmatpush1.msra.mxu0 %v1529
  %1635 = vmatprep.subr.mxu0 0.0
  %1636 = vmatpush1.msra.mxu0 %v1530
  %1637 = vmatprep.subr.mxu0 0.0
  %1638 = vmatpush1.msra.mxu0 %v1531
  %1639 = vmatprep.subr.mxu0 0.0
  %1640 = vmatpush1.msra.mxu0 %v1532
  %1641 = vmatprep.subr.mxu0 0.0
  %1642 = vmatpush1.msra.mxu0 %v1533
  %1643 = vmatprep.subr.mxu0 0.0
  %1644 = vmatpush1.msra.mxu0 %v1534
  %1645 = vmatprep.subr.mxu0 0.0
  %1646 = vmatpush1.msra.mxu0 %v1535
  %1647 = vmatprep.subr.mxu0 0.0
  %1648 = vmatpush1.msra.mxu0 %v1536
  %1649 = vmatprep.subr.mxu0 0.0
  %1650 = vmatpush1.msra.mxu0 %v1537
  %1651 = vmatprep.subr.mxu0 0.0
  %1652 = vmatpush1.msra.mxu0 %v1538
  %1653 = vmatprep.subr.mxu0 0.0
  %1654 = vmatpush1.msra.mxu0 %v1631
  %1655 = vmatprep.subr.mxu0 0.0
  %1656 = vmatpush1.msra.mxu0 0.0
  %1657 = vmatprep.subr.mxu0 0.0
  %1658 = vmatpush1.msra.mxu0 0.0
  %1659 = vmatprep.subr.mxu0 0.0
  %1660 = vmatpush1.msra.mxu0 0.0
  %1661 = vmatprep.subr.mxu0 0.0
  %1662 = vmatpush1.msra.mxu0 0.0
  %1663 = vmatprep.subr.mxu0 0.0
  %1664 = vmatpush1.msra.mxu0 0.0
  %1665 = vmatprep.subr.mxu0 0.0
  %1666 = vmatpush1.msra.mxu0 0.0
  %1667 = vmatprep.subr.mxu0 0.0
  %1668 = vmatpush1.msra.mxu0 0.0
  %1669 = vmatprep.subr.mxu0 0.0
  %1670 = vmatpush1.msra.mxu0 0.0
  %1671 = vmatprep.subr.mxu0 0.0
  %1672 = vmatpush1.msra.mxu0 0.0
  %1673 = vmatprep.subr.mxu0 0.0
  %1674 = vmatpush1.msra.mxu0 0.0
  %1675 = vmatprep.subr.mxu0 0.0
  %1676 = vmatpush1.msra.mxu0 0.0
  %1677 = vmatprep.subr.mxu0 0.0
  %1678 = vmatpush1.msra.mxu0 0.0
  %1679 = vmatprep.subr.mxu0 0.0
  %1680 = vmatpush1.msra.mxu0 0.0
  %1681 = vmatprep.subr.mxu0 0.0
  %1682 = vmatpush1.msra.mxu0 0.0
  %1683 = vmatprep.subr.mxu0 0.0
  %1684 = vmatpush1.msra.mxu0 0.0
  %1685 = vmatprep.subr.mxu0 0.0
  %1686 = vmatpush1.msra.mxu0 0.0
  %1687 = vmatprep.subr.mxu0 0.0
  %1688 = vmatpush1.msra.mxu0 0.0
  %1689 = vmatprep.subr.mxu0 0.0
  %1690 = vmatpush1.msra.mxu0 0.0
  %1691 = vmatprep.subr.mxu0 0.0
  %1692 = vmatpush1.msra.mxu0 0.0
  %1693 = vmatprep.subr.mxu0 0.0
  %1694 = vmatpush1.msra.mxu0 0.0
  %1695 = vmatprep.subr.mxu0 0.0
  %1696 = vmatpush1.msra.mxu0 0.0
  %1697 = vmatprep.mubr.f32.mxu0 0.0
  %1698 = vmatmul.mubr.f32.gmra.mrb[0].mxu0 %v1151
  %v1699 = vpop.f32.mrb[0].mxu0
  %v1700 = vadd.f32 %v1622, %v1699
  %v1701 = vpop.f32.mrb[0].mxu0
  %1702 = vmatprep.mubr.f32.mxu0 0.0
  %1703 = vmatmul.mubr.f32.gmra.mrb[0].mxu0 %v1153
  %v1704 = vpop.f32.mrb[0].mxu0
  %v1705 = vadd.f32 %v1627, %v1704
  %v1706 = vpop.f32.mrb[0].mxu0
  %1707 = vdwg.mxu0
  %s1708 = scalar_lea.vmem %s5, 616
  %v1709 = vld [vmem:[%s1708] sm:$0xff]
  %v1710 = vld [vmem:[%s1708 + $0x8] sm:$0xff]
  %v1711 = vld [vmem:[%s1708 + $0x10] sm:$0xff]
  %v1712 = vld [vmem:[%s1708 + $0x18] sm:$0xff]
  %v1713 = vld [vmem:[%s1708 + $0x20] sm:$0xff]
  %v1714 = vld [vmem:[%s1708 + $0x28] sm:$0xff]
  %v1715 = vld [vmem:[%s1708 + $0x30] sm:$0xff]
  %v1716 = vld [vmem:[%s1708 + $0x38] sm:$0xff]
  %v1717 = vld [vmem:[%s1708 + $0x40] sm:$0xff]
  %v1718 = vld [vmem:[%s1708 + $0x48] sm:$0xff]
  %v1719 = vld [vmem:[%s1708 + $0x50] sm:$0xf]
  %v1721 = vsel %vm628, %v1719, 0
  %1723 = vmatprep.subr.mxu0 0.0
  %1724 = vmatpush1.msra.mxu0 %v1709
  %1725 = vmatprep.subr.mxu0 0.0
  %1726 = vmatpush1.msra.mxu0 %v1710
  %1727 = vmatprep.subr.mxu0 0.0
  %1728 = vmatpush1.msra.mxu0 %v1711
  %1729 = vmatprep.subr.mxu0 0.0
  %1730 = vmatpush1.msra.mxu0 %v1712
  %1731 = vmatprep.subr.mxu0 0.0
  %1732 = vmatpush1.msra.mxu0 %v1713
  %1733 = vmatprep.subr.mxu0 0.0
  %1734 = vmatpush1.msra.mxu0 %v1714
  %1735 = vmatprep.subr.mxu0 0.0
  %1736 = vmatpush1.msra.mxu0 %v1715
  %1737 = vmatprep.subr.mxu0 0.0
  %1738 = vmatpush1.msra.mxu0 %v1716
  %1739 = vmatprep.subr.mxu0 0.0
  %1740 = vmatpush1.msra.mxu0 %v1717
  %1741 = vmatprep.subr.mxu0 0.0
  %1742 = vmatpush1.msra.mxu0 %v1718
  %1743 = vmatprep.subr.mxu0 0.0
  %1744 = vmatpush1.msra.mxu0 %v1721
  %1745 = vmatprep.subr.mxu0 0.0
  %1746 = vmatpush1.msra.mxu0 0.0
  %1747 = vmatprep.subr.mxu0 0.0
  %1748 = vmatpush1.msra.mxu0 0.0
  %1749 = vmatprep.subr.mxu0 0.0
  %1750 = vmatpush1.msra.mxu0 0.0
  %1751 = vmatprep.subr.mxu0 0.0
  %1752 = vmatpush1.msra.mxu0 0.0
  %1753 = vmatprep.subr.mxu0 0.0
  %1754 = vmatpush1.msra.mxu0 0.0
  %1755 = vmatprep.subr.mxu0 0.0
  %1756 = vmatpush1.msra.mxu0 0.0
  %1757 = vmatprep.subr.mxu0 0.0
  %1758 = vmatpush1.msra.mxu0 0.0
  %1759 = vmatprep.subr.mxu0 0.0
  %1760 = vmatpush1.msra.mxu0 0.0
  %1761 = vmatprep.subr.mxu0 0.0
  %1762 = vmatpush1.msra.mxu0 0.0
  %1763 = vmatprep.subr.mxu0 0.0
  %1764 = vmatpush1.msra.mxu0 0.0
  %1765 = vmatprep.subr.mxu0 0.0
  %1766 = vmatpush1.msra.mxu0 0.0
  %1767 = vmatprep.subr.mxu0 0.0
  %1768 = vmatpush1.msra.mxu0 0.0
  %1769 = vmatprep.subr.mxu0 0.0
  %1770 = vmatpush1.msra.mxu0 0.0
  %1771 = vmatprep.subr.mxu0 0.0
  %1772 = vmatpush1.msra.mxu0 0.0
  %1773 = vmatprep.subr.mxu0 0.0
  %1774 = vmatpush1.msra.mxu0 0.0
  %1775 = vmatprep.subr.mxu0 0.0
  %1776 = vmatpush1.msra.mxu0 0.0
  %1777 = vmatprep.subr.mxu0 0.0
  %1778 = vmatpush1.msra.mxu0 0.0
  %1779 = vmatprep.subr.mxu0 0.0
  %1780 = vmatpush1.msra.mxu0 0.0
  %1781 = vmatprep.subr.mxu0 0.0
  %1782 = vmatpush1.msra.mxu0 0.0
  %1783 = vmatprep.subr.mxu0 0.0
  %1784 = vmatpush1.msra.mxu0 0.0
  %1785 = vmatprep.subr.mxu0 0.0
  %1786 = vmatpush1.msra.mxu0 0.0
  %1787 = vmatprep.mubr.f32.mxu0 0.0
  %1788 = vmatmul.mubr.f32.gmra.mrb[0].mxu0 %v1248
  %v1789 = vpop.f32.mrb[0].mxu0
  %v1790 = vadd.f32 0.0, %v1789
  %v1791 = vpop.f32.mrb[0].mxu0
  %1792 = vmatprep.mubr.f32.mxu0 0.0
  %1793 = vmatmul.mubr.f32.gmra.mrb[0].mxu0 %v1250
  %v1794 = vpop.f32.mrb[0].mxu0
  %v1795 = vadd.f32 0.0, %v1794
  %v1796 = vpop.f32.mrb[0].mxu0
  %1797 = vdwg.mxu0
  %v1798 = vadd.f32 %v1700, %v1790
  %v1799 = vadd.f32 %v1705, %v1795
  %s1800 = scalar_lea.vmem %s5, 704
  %v1801 = vld [vmem:[%s1800] sm:$0xff]
  %v1802 = vld [vmem:[%s1800 + $0x8] sm:$0xff]
  %v1803 = vld [vmem:[%s1800 + $0x10] sm:$0xff]
  %v1804 = vld [vmem:[%s1800 + $0x18] sm:$0xff]
  %v1805 = vld [vmem:[%s1800 + $0x20] sm:$0xff]
  %v1806 = vld [vmem:[%s1800 + $0x28] sm:$0xff]
  %v1807 = vld [vmem:[%s1800 + $0x30] sm:$0xff]
  %v1808 = vld [vmem:[%s1800 + $0x38] sm:$0xff]
  %v1809 = vld [vmem:[%s1800 + $0x40] sm:$0xff]
  %v1810 = vld [vmem:[%s1800 + $0x48] sm:$0xff]
  %v1811 = vld [vmem:[%s1800 + $0x50] sm:$0xf]
  %v1813 = vsel %vm628, %v1811, 0
  %1815 = vmatprep.subr.mxu0 0.0
  %1816 = vmatpush1.msra.mxu0 %v1801
  %1817 = vmatprep.subr.mxu0 0.0
  %1818 = vmatpush1.msra.mxu0 %v1802
  %1819 = vmatprep.subr.mxu0 0.0
  %1820 = vmatpush1.msra.mxu0 %v1803
  %1821 = vmatprep.subr.mxu0 0.0
  %1822 = vmatpush1.msra.mxu0 %v1804
  %1823 = vmatprep.subr.mxu0 0.0
  %1824 = vmatpush1.msra.mxu0 %v1805
  %1825 = vmatprep.subr.mxu0 0.0
  %1826 = vmatpush1.msra.mxu0 %v1806
  %1827 = vmatprep.subr.mxu0 0.0
  %1828 = vmatpush1.msra.mxu0 %v1807
  %1829 = vmatprep.subr.mxu0 0.0
  %1830 = vmatpush1.msra.mxu0 %v1808
  %1831 = vmatprep.subr.mxu0 0.0
  %1832 = vmatpush1.msra.mxu0 %v1809
  %1833 = vmatprep.subr.mxu0 0.0
  %1834 = vmatpush1.msra.mxu0 %v1810
  %1835 = vmatprep.subr.mxu0 0.0
  %1836 = vmatpush1.msra.mxu0 %v1813
  %1837 = vmatprep.subr.mxu0 0.0
  %1838 = vmatpush1.msra.mxu0 0.0
  %1839 = vmatprep.subr.mxu0 0.0
  %1840 = vmatpush1.msra.mxu0 0.0
  %1841 = vmatprep.subr.mxu0 0.0
  %1842 = vmatpush1.msra.mxu0 0.0
  %1843 = vmatprep.subr.mxu0 0.0
  %1844 = vmatpush1.msra.mxu0 0.0
  %1845 = vmatprep.subr.mxu0 0.0
  %1846 = vmatpush1.msra.mxu0 0.0
  %1847 = vmatprep.subr.mxu0 0.0
  %1848 = vmatpush1.msra.mxu0 0.0
  %1849 = vmatprep.subr.mxu0 0.0
  %1850 = vmatpush1.msra.mxu0 0.0
  %1851 = vmatprep.subr.mxu0 0.0
  %1852 = vmatpush1.msra.mxu0 0.0
  %1853 = vmatprep.subr.mxu0 0.0
  %1854 = vmatpush1.msra.mxu0 0.0
  %1855 = vmatprep.subr.mxu0 0.0
  %1856 = vmatpush1.msra.mxu0 0.0
  %1857 = vmatprep.subr.mxu0 0.0
  %1858 = vmatpush1.msra.mxu0 0.0
  %1859 = vmatprep.subr.mxu0 0.0
  %1860 = vmatpush1.msra.mxu0 0.0
  %1861 = vmatprep.subr.mxu0 0.0
  %1862 = vmatpush1.msra.mxu0 0.0
  %1863 = vmatprep.subr.mxu0 0.0
  %1864 = vmatpush1.msra.mxu0 0.0
  %1865 = vmatprep.subr.mxu0 0.0
  %1866 = vmatpush1.msra.mxu0 0.0
  %1867 = vmatprep.subr.mxu0 0.0
  %1868 = vmatpush1.msra.mxu0 0.0
  %1869 = vmatprep.subr.mxu0 0.0
  %1870 = vmatpush1.msra.mxu0 0.0
  %1871 = vmatprep.subr.mxu0 0.0
  %1872 = vmatpush1.msra.mxu0 0.0
  %1873 = vmatprep.subr.mxu0 0.0
  %1874 = vmatpush1.msra.mxu0 0.0
  %1875 = vmatprep.subr.mxu0 0.0
  %1876 = vmatpush1.msra.mxu0 0.0
  %1877 = vmatprep.subr.mxu0 0.0
  %1878 = vmatpush1.msra.mxu0 0.0
  %1879 = vmatprep.mubr.f32.mxu0 0.0
  %1880 = vmatmul.mubr.f32.gmra.mrb[0].mxu0 %v1344
  %v1881 = vpop.f32.mrb[0].mxu0
  %v1882 = vadd.f32 0.0, %v1881
  %v1883 = vpop.f32.mrb[0].mxu0
  %1884 = vmatprep.mubr.f32.mxu0 0.0
  %1885 = vmatmul.mubr.f32.gmra.mrb[0].mxu0 %v1347
  %v1886 = vpop.f32.mrb[0].mxu0
  %v1887 = vadd.f32 0.0, %v1886
  %v1888 = vpop.f32.mrb[0].mxu0
  %1889 = vdwg.mxu0
  %v1890 = vadd.f32 %v1798, %v1882
  %v1891 = vadd.f32 %v1799, %v1887
  %s1892 = scalar_lea.vmem %s5, 792
  %v1893 = vld [vmem:[%s1892] sm:$0xff]
  %v1894 = vld [vmem:[%s1892 + $0x8] sm:$0xff]
  %v1895 = vld [vmem:[%s1892 + $0x10] sm:$0xff]
  %v1896 = vld [vmem:[%s1892 + $0x18] sm:$0xff]
  %v1897 = vld [vmem:[%s1892 + $0x20] sm:$0xff]
  %v1898 = vld [vmem:[%s1892 + $0x28] sm:$0xff]
  %v1899 = vld [vmem:[%s1892 + $0x30] sm:$0xff]
  %v1900 = vld [vmem:[%s1892 + $0x38] sm:$0xff]
  %v1901 = vld [vmem:[%s1892 + $0x40] sm:$0xff]
  %v1902 = vld [vmem:[%s1892 + $0x48] sm:$0xff]
  %v1903 = vld [vmem:[%s1892 + $0x50] sm:$0xf]
  %v1905 = vsel %vm628, %v1903, 0
  %1907 = vmatprep.subr.mxu0 0.0
  %1908 = vmatpush1.msra.mxu0 %v1893
  %1909 = vmatprep.subr.mxu0 0.0
  %1910 = vmatpush1.msra.mxu0 %v1894
  %1911 = vmatprep.subr.mxu0 0.0
  %1912 = vmatpush1.msra.mxu0 %v1895
  %1913 = vmatprep.subr.mxu0 0.0
  %1914 = vmatpush1.msra.mxu0 %v1896
  %1915 = vmatprep.subr.mxu0 0.0
  %1916 = vmatpush1.msra.mxu0 %v1897
  %1917 = vmatprep.subr.mxu0 0.0
  %1918 = vmatpush1.msra.mxu0 %v1898
  %1919 = vmatprep.subr.mxu0 0.0
  %1920 = vmatpush1.msra.mxu0 %v1899
  %1921 = vmatprep.subr.mxu0 0.0
  %1922 = vmatpush1.msra.mxu0 %v1900
  %1923 = vmatprep.subr.mxu0 0.0
  %1924 = vmatpush1.msra.mxu0 %v1901
  %1925 = vmatprep.subr.mxu0 0.0
  %1926 = vmatpush1.msra.mxu0 %v1902
  %1927 = vmatprep.subr.mxu0 0.0
  %1928 = vmatpush1.msra.mxu0 %v1905
  %1929 = vmatprep.subr.mxu0 0.0
  %1930 = vmatpush1.msra.mxu0 0.0
  %1931 = vmatprep.subr.mxu0 0.0
  %1932 = vmatpush1.msra.mxu0 0.0
  %1933 = vmatprep.subr.mxu0 0.0
  %1934 = vmatpush1.msra.mxu0 0.0
  %1935 = vmatprep.subr.mxu0 0.0
  %1936 = vmatpush1.msra.mxu0 0.0
  %1937 = vmatprep.subr.mxu0 0.0
  %1938 = vmatpush1.msra.mxu0 0.0
  %1939 = vmatprep.subr.mxu0 0.0
  %1940 = vmatpush1.msra.mxu0 0.0
  %1941 = vmatprep.subr.mxu0 0.0
  %1942 = vmatpush1.msra.mxu0 0.0
  %1943 = vmatprep.subr.mxu0 0.0
  %1944 = vmatpush1.msra.mxu0 0.0
  %1945 = vmatprep.subr.mxu0 0.0
  %1946 = vmatpush1.msra.mxu0 0.0
  %1947 = vmatprep.subr.mxu0 0.0
  %1948 = vmatpush1.msra.mxu0 0.0
  %1949 = vmatprep.subr.mxu0 0.0
  %1950 = vmatpush1.msra.mxu0 0.0
  %1951 = vmatprep.subr.mxu0 0.0
  %1952 = vmatpush1.msra.mxu0 0.0
  %1953 = vmatprep.subr.mxu0 0.0
  %1954 = vmatpush1.msra.mxu0 0.0
  %1955 = vmatprep.subr.mxu0 0.0
  %1956 = vmatpush1.msra.mxu0 0.0
  %1957 = vmatprep.subr.mxu0 0.0
  %1958 = vmatpush1.msra.mxu0 0.0
  %1959 = vmatprep.subr.mxu0 0.0
  %1960 = vmatpush1.msra.mxu0 0.0
  %1961 = vmatprep.subr.mxu0 0.0
  %1962 = vmatpush1.msra.mxu0 0.0
  %1963 = vmatprep.subr.mxu0 0.0
  %1964 = vmatpush1.msra.mxu0 0.0
  %1965 = vmatprep.subr.mxu0 0.0
  %1966 = vmatpush1.msra.mxu0 0.0
  %1967 = vmatprep.subr.mxu0 0.0
  %1968 = vmatpush1.msra.mxu0 0.0
  %1969 = vmatprep.subr.mxu0 0.0
  %1970 = vmatpush1.msra.mxu0 0.0
  %1971 = vmatprep.mubr.f32.mxu0 0.0
  %1972 = vmatmul.mubr.f32.gmra.mrb[0].mxu0 %v1444
  %v1973 = vpop.f32.mrb[0].mxu0
  %v1974 = vadd.f32 0.0, %v1973
  %v1975 = vpop.f32.mrb[0].mxu0
  %1976 = vmatprep.mubr.f32.mxu0 0.0
  %1977 = vmatmul.mubr.f32.gmra.mrb[0].mxu0 %v1446
  %v1978 = vpop.f32.mrb[0].mxu0
  %v1979 = vadd.f32 0.0, %v1978
  %v1980 = vpop.f32.mrb[0].mxu0
  %1981 = vdwg.mxu0
  %v1982 = vadd.f32 %v1890, %v1974
  %v1983 = vadd.f32 %v1891, %v1979
  %v1984 = vmax.f32 %v1526, %v1982
  %v1985 = vmax.f32 %v1527, %v1983
  %1986 = vmatprep.subr.mxu0 0.0
  %1987 = vmatpush1.msra.mxu0 %v1051
  %1988 = vmatprep.subr.mxu0 0.0
  %1989 = vmatpush1.msra.mxu0 %v1052
  %1990 = vmatprep.subr.mxu0 0.0
  %1991 = vmatpush1.msra.mxu0 %v1053
  %1992 = vmatprep.subr.mxu0 0.0
  %1993 = vmatpush1.msra.mxu0 %v1054
  %1994 = vmatprep.subr.mxu0 0.0
  %1995 = vmatpush1.msra.mxu0 %v1055
  %1996 = vmatprep.subr.mxu0 0.0
  %1997 = vmatpush1.msra.mxu0 %v1056
  %1998 = vmatprep.subr.mxu0 0.0
  %1999 = vmatpush1.msra.mxu0 %v1057
  %2000 = vmatprep.subr.mxu0 0.0
  %2001 = vmatpush1.msra.mxu0 %v1058
  %2002 = vmatprep.subr.mxu0 0.0
  %2003 = vmatpush1.msra.mxu0 %v1059
  %2004 = vmatprep.subr.mxu0 0.0
  %2005 = vmatpush1.msra.mxu0 %v1060
  %2006 = vmatprep.subr.mxu0 0.0
  %2007 = vmatpush1.msra.mxu0 %v1073
  %2008 = vmatprep.subr.mxu0 0.0
  %2009 = vmatpush1.msra.mxu0 0.0
  %2010 = vmatprep.subr.mxu0 0.0
  %2011 = vmatpush1.msra.mxu0 0.0
  %2012 = vmatprep.subr.mxu0 0.0
  %2013 = vmatpush1.msra.mxu0 0.0
  %2014 = vmatprep.subr.mxu0 0.0
  %2015 = vmatpush1.msra.mxu0 0.0
  %2016 = vmatprep.subr.mxu0 0.0
  %2017 = vmatpush1.msra.mxu0 0.0
  %2018 = vmatprep.subr.mxu0 0.0
  %2019 = vmatpush1.msra.mxu0 0.0
  %2020 = vmatprep.subr.mxu0 0.0
  %2021 = vmatpush1.msra.mxu0 0.0
  %2022 = vmatprep.subr.mxu0 0.0
  %2023 = vmatpush1.msra.mxu0 0.0
  %2024 = vmatprep.subr.mxu0 0.0
  %2025 = vmatpush1.msra.mxu0 0.0
  %2026 = vmatprep.subr.mxu0 0.0
  %2027 = vmatpush1.msra.mxu0 0.0
  %2028 = vmatprep.subr.mxu0 0.0
  %2029 = vmatpush1.msra.mxu0 0.0
  %2030 = vmatprep.subr.mxu0 0.0
  %2031 = vmatpush1.msra.mxu0 0.0
  %2032 = vmatprep.subr.mxu0 0.0
  %2033 = vmatpush1.msra.mxu0 0.0
  %2034 = vmatprep.subr.mxu0 0.0
  %2035 = vmatpush1.msra.mxu0 0.0
  %2036 = vmatprep.subr.mxu0 0.0
  %2037 = vmatpush1.msra.mxu0 0.0
  %2038 = vmatprep.subr.mxu0 0.0
  %2039 = vmatpush1.msra.mxu0 0.0
  %2040 = vmatprep.subr.mxu0 0.0
  %2041 = vmatpush1.msra.mxu0 0.0
  %2042 = vmatprep.subr.mxu0 0.0
  %2043 = vmatpush1.msra.mxu0 0.0
  %2044 = vmatprep.subr.mxu0 0.0
  %2045 = vmatpush1.msra.mxu0 0.0
  %2046 = vmatprep.subr.mxu0 0.0
  %2047 = vmatpush1.msra.mxu0 0.0
  %2048 = vmatprep.subr.mxu0 0.0
  %2049 = vmatpush1.msra.mxu0 0.0
  %2050 = vmatprep.mubr.f32.mxu0 0.0
  %2051 = vmatmul.mubr.f32.gmra.mrb[0].mxu0 %v1248
  %v2052 = vpop.f32.mrb[0].mxu0
  %v2053 = vadd.f32 0.0, %v2052
  %v2054 = vpop.f32.mrb[0].mxu0
  %2055 = vmatprep.mubr.f32.mxu0 0.0
  %2056 = vmatmul.mubr.f32.gmra.mrb[0].mxu0 %v1250
  %v2057 = vpop.f32.mrb[0].mxu0
  %v2058 = vadd.f32 0.0, %v2057
  %v2059 = vpop.f32.mrb[0].mxu0
  %2060 = vdwg.mxu0
  %2061 = vmatprep.subr.mxu0 0.0
  %2062 = vmatpush1.msra.mxu0 %v1039
  %2063 = vmatprep.subr.mxu0 0.0
  %2064 = vmatpush1.msra.mxu0 %v1040
  %2065 = vmatprep.subr.mxu0 0.0
  %2066 = vmatpush1.msra.mxu0 %v1041
  %2067 = vmatprep.subr.mxu0 0.0
  %2068 = vmatpush1.msra.mxu0 %v1042
  %2069 = vmatprep.subr.mxu0 0.0
  %2070 = vmatpush1.msra.mxu0 %v1043
  %2071 = vmatprep.subr.mxu0 0.0
  %2072 = vmatpush1.msra.mxu0 %v1044
  %2073 = vmatprep.subr.mxu0 0.0
  %2074 = vmatpush1.msra.mxu0 %v1045
  %2075 = vmatprep.subr.mxu0 0.0
  %2076 = vmatpush1.msra.mxu0 %v1046
  %2077 = vmatprep.subr.mxu0 0.0
  %2078 = vmatpush1.msra.mxu0 %v1047
  %2079 = vmatprep.subr.mxu0 0.0
  %2080 = vmatpush1.msra.mxu0 %v1048
  %2081 = vmatprep.subr.mxu0 0.0
  %2082 = vmatpush1.msra.mxu0 %v1156
  %2083 = vmatprep.subr.mxu0 0.0
  %2084 = vmatpush1.msra.mxu0 0.0
  %2085 = vmatprep.subr.mxu0 0.0
  %2086 = vmatpush1.msra.mxu0 0.0
  %2087 = vmatprep.subr.mxu0 0.0
  %2088 = vmatpush1.msra.mxu0 0.0
  %2089 = vmatprep.subr.mxu0 0.0
  %2090 = vmatpush1.msra.mxu0 0.0
  %2091 = vmatprep.subr.mxu0 0.0
  %2092 = vmatpush1.msra.mxu0 0.0
  %2093 = vmatprep.subr.mxu0 0.0
  %2094 = vmatpush1.msra.mxu0 0.0
  %2095 = vmatprep.subr.mxu0 0.0
  %2096 = vmatpush1.msra.mxu0 0.0
  %2097 = vmatprep.subr.mxu0 0.0
  %2098 = vmatpush1.msra.mxu0 0.0
  %2099 = vmatprep.subr.mxu0 0.0
  %2100 = vmatpush1.msra.mxu0 0.0
  %2101 = vmatprep.subr.mxu0 0.0
  %2102 = vmatpush1.msra.mxu0 0.0
  %2103 = vmatprep.subr.mxu0 0.0
  %2104 = vmatpush1.msra.mxu0 0.0
  %2105 = vmatprep.subr.mxu0 0.0
  %2106 = vmatpush1.msra.mxu0 0.0
  %2107 = vmatprep.subr.mxu0 0.0
  %2108 = vmatpush1.msra.mxu0 0.0
  %2109 = vmatprep.subr.mxu0 0.0
  %2110 = vmatpush1.msra.mxu0 0.0
  %2111 = vmatprep.subr.mxu0 0.0
  %2112 = vmatpush1.msra.mxu0 0.0
  %2113 = vmatprep.subr.mxu0 0.0
  %2114 = vmatpush1.msra.mxu0 0.0
  %2115 = vmatprep.subr.mxu0 0.0
  %2116 = vmatpush1.msra.mxu0 0.0
  %2117 = vmatprep.subr.mxu0 0.0
  %2118 = vmatpush1.msra.mxu0 0.0
  %2119 = vmatprep.subr.mxu0 0.0
  %2120 = vmatpush1.msra.mxu0 0.0
  %2121 = vmatprep.subr.mxu0 0.0
  %2122 = vmatpush1.msra.mxu0 0.0
  %2123 = vmatprep.subr.mxu0 0.0
  %2124 = vmatpush1.msra.mxu0 0.0
  %2125 = vmatprep.mubr.f32.mxu0 0.0
  %2126 = vmatmul.mubr.f32.gmra.mrb[0].mxu0 %v1068
  %v2127 = vpop.f32.mrb[0].mxu0
  %v2128 = vadd.f32 %v2053, %v2127
  %v2129 = vpop.f32.mrb[0].mxu0
  %2130 = vmatprep.mubr.f32.mxu0 0.0
  %2131 = vmatmul.mubr.f32.gmra.mrb[0].mxu0 %v1070
  %v2132 = vpop.f32.mrb[0].mxu0
  %v2133 = vadd.f32 %v2058, %v2132
  %v2134 = vpop.f32.mrb[0].mxu0
  %2135 = vdwg.mxu0
  %2136 = vmatprep.subr.mxu0 0.0
  %2137 = vmatpush1.msra.mxu0 %v1234
  %2138 = vmatprep.subr.mxu0 0.0
  %2139 = vmatpush1.msra.mxu0 %v1235
  %2140 = vmatprep.subr.mxu0 0.0
  %2141 = vmatpush1.msra.mxu0 %v1236
  %2142 = vmatprep.subr.mxu0 0.0
  %2143 = vmatpush1.msra.mxu0 %v1237
  %2144 = vmatprep.subr.mxu0 0.0
  %2145 = vmatpush1.msra.mxu0 %v1238
  %2146 = vmatprep.subr.mxu0 0.0
  %2147 = vmatpush1.msra.mxu0 %v1239
  %2148 = vmatprep.subr.mxu0 0.0
  %2149 = vmatpush1.msra.mxu0 %v1240
  %2150 = vmatprep.subr.mxu0 0.0
  %2151 = vmatpush1.msra.mxu0 %v1241
  %2152 = vmatprep.subr.mxu0 0.0
  %2153 = vmatpush1.msra.mxu0 %v1242
  %2154 = vmatprep.subr.mxu0 0.0
  %2155 = vmatpush1.msra.mxu0 %v1243
  %2156 = vmatprep.subr.mxu0 0.0
  %2157 = vmatpush1.msra.mxu0 %v1253
  %2158 = vmatprep.subr.mxu0 0.0
  %2159 = vmatpush1.msra.mxu0 0.0
  %2160 = vmatprep.subr.mxu0 0.0
  %2161 = vmatpush1.msra.mxu0 0.0
  %2162 = vmatprep.subr.mxu0 0.0
  %2163 = vmatpush1.msra.mxu0 0.0
  %2164 = vmatprep.subr.mxu0 0.0
  %2165 = vmatpush1.msra.mxu0 0.0
  %2166 = vmatprep.subr.mxu0 0.0
  %2167 = vmatpush1.msra.mxu0 0.0
  %2168 = vmatprep.subr.mxu0 0.0
  %2169 = vmatpush1.msra.mxu0 0.0
  %2170 = vmatprep.subr.mxu0 0.0
  %2171 = vmatpush1.msra.mxu0 0.0
  %2172 = vmatprep.subr.mxu0 0.0
  %2173 = vmatpush1.msra.mxu0 0.0
  %2174 = vmatprep.subr.mxu0 0.0
  %2175 = vmatpush1.msra.mxu0 0.0
  %2176 = vmatprep.subr.mxu0 0.0
  %2177 = vmatpush1.msra.mxu0 0.0
  %2178 = vmatprep.subr.mxu0 0.0
  %2179 = vmatpush1.msra.mxu0 0.0
  %2180 = vmatprep.subr.mxu0 0.0
  %2181 = vmatpush1.msra.mxu0 0.0
  %2182 = vmatprep.subr.mxu0 0.0
  %2183 = vmatpush1.msra.mxu0 0.0
  %2184 = vmatprep.subr.mxu0 0.0
  %2185 = vmatpush1.msra.mxu0 0.0
  %2186 = vmatprep.subr.mxu0 0.0
  %2187 = vmatpush1.msra.mxu0 0.0
  %2188 = vmatprep.subr.mxu0 0.0
  %2189 = vmatpush1.msra.mxu0 0.0
  %2190 = vmatprep.subr.mxu0 0.0
  %2191 = vmatpush1.msra.mxu0 0.0
  %2192 = vmatprep.subr.mxu0 0.0
  %2193 = vmatpush1.msra.mxu0 0.0
  %2194 = vmatprep.subr.mxu0 0.0
  %2195 = vmatpush1.msra.mxu0 0.0
  %2196 = vmatprep.subr.mxu0 0.0
  %2197 = vmatpush1.msra.mxu0 0.0
  %2198 = vmatprep.subr.mxu0 0.0
  %2199 = vmatpush1.msra.mxu0 0.0
  %2200 = vmatprep.mubr.f32.mxu0 0.0
  %2201 = vmatmul.mubr.f32.gmra.mrb[0].mxu0 %v1344
  %v2202 = vpop.f32.mrb[0].mxu0
  %v2203 = vadd.f32 0.0, %v2202
  %v2204 = vpop.f32.mrb[0].mxu0
  %2205 = vmatprep.mubr.f32.mxu0 0.0
  %2206 = vmatmul.mubr.f32.gmra.mrb[0].mxu0 %v1347
  %v2207 = vpop.f32.mrb[0].mxu0
  %v2208 = vadd.f32 0.0, %v2207
  %v2209 = vpop.f32.mrb[0].mxu0
  %2210 = vdwg.mxu0
  %v2211 = vadd.f32 %v2128, %v2203
  %v2212 = vadd.f32 %v2133, %v2208
  %2213 = vmatprep.subr.mxu0 0.0
  %2214 = vmatpush1.msra.mxu0 %v1333
  %2215 = vmatprep.subr.mxu0 0.0
  %2216 = vmatpush1.msra.mxu0 %v1334
  %2217 = vmatprep.subr.mxu0 0.0
  %2218 = vmatpush1.msra.mxu0 %v1335
  %2219 = vmatprep.subr.mxu0 0.0
  %2220 = vmatpush1.msra.mxu0 %v1336
  %2221 = vmatprep.subr.mxu0 0.0
  %2222 = vmatpush1.msra.mxu0 %v1337
  %2223 = vmatprep.subr.mxu0 0.0
  %2224 = vmatpush1.msra.mxu0 %v1338
  %2225 = vmatprep.subr.mxu0 0.0
  %2226 = vmatpush1.msra.mxu0 %v1339
  %2227 = vmatprep.subr.mxu0 0.0
  %2228 = vmatpush1.msra.mxu0 %v1340
  %2229 = vmatprep.subr.mxu0 0.0
  %2230 = vmatpush1.msra.mxu0 %v1341
  %2231 = vmatprep.subr.mxu0 0.0
  %2232 = vmatpush1.msra.mxu0 %v1342
  %2233 = vmatprep.subr.mxu0 0.0
  %2234 = vmatpush1.msra.mxu0 %v1350
  %2235 = vmatprep.subr.mxu0 0.0
  %2236 = vmatpush1.msra.mxu0 0.0
  %2237 = vmatprep.subr.mxu0 0.0
  %2238 = vmatpush1.msra.mxu0 0.0
  %2239 = vmatprep.subr.mxu0 0.0
  %2240 = vmatpush1.msra.mxu0 0.0
  %2241 = vmatprep.subr.mxu0 0.0
  %2242 = vmatpush1.msra.mxu0 0.0
  %2243 = vmatprep.subr.mxu0 0.0
  %2244 = vmatpush1.msra.mxu0 0.0
  %2245 = vmatprep.subr.mxu0 0.0
  %2246 = vmatpush1.msra.mxu0 0.0
  %2247 = vmatprep.subr.mxu0 0.0
  %2248 = vmatpush1.msra.mxu0 0.0
  %2249 = vmatprep.subr.mxu0 0.0
  %2250 = vmatpush1.msra.mxu0 0.0
  %2251 = vmatprep.subr.mxu0 0.0
  %2252 = vmatpush1.msra.mxu0 0.0
  %2253 = vmatprep.subr.mxu0 0.0
  %2254 = vmatpush1.msra.mxu0 0.0
  %2255 = vmatprep.subr.mxu0 0.0
  %2256 = vmatpush1.msra.mxu0 0.0
  %2257 = vmatprep.subr.mxu0 0.0
  %2258 = vmatpush1.msra.mxu0 0.0
  %2259 = vmatprep.subr.mxu0 0.0
  %2260 = vmatpush1.msra.mxu0 0.0
  %2261 = vmatprep.subr.mxu0 0.0
  %2262 = vmatpush1.msra.mxu0 0.0
  %2263 = vmatprep.subr.mxu0 0.0
  %2264 = vmatpush1.msra.mxu0 0.0
  %2265 = vmatprep.subr.mxu0 0.0
  %2266 = vmatpush1.msra.mxu0 0.0
  %2267 = vmatprep.subr.mxu0 0.0
  %2268 = vmatpush1.msra.mxu0 0.0
  %2269 = vmatprep.subr.mxu0 0.0
  %2270 = vmatpush1.msra.mxu0 0.0
  %2271 = vmatprep.subr.mxu0 0.0
  %2272 = vmatpush1.msra.mxu0 0.0
  %2273 = vmatprep.subr.mxu0 0.0
  %2274 = vmatpush1.msra.mxu0 0.0
  %2275 = vmatprep.subr.mxu0 0.0
  %2276 = vmatpush1.msra.mxu0 0.0
  %2277 = vmatprep.mubr.f32.mxu0 0.0
  %2278 = vmatmul.mubr.f32.gmra.mrb[0].mxu0 %v1444
  %v2279 = vpop.f32.mrb[0].mxu0
  %v2280 = vadd.f32 0.0, %v2279
  %v2281 = vpop.f32.mrb[0].mxu0
  %2282 = vmatprep.mubr.f32.mxu0 0.0
  %2283 = vmatmul.mubr.f32.gmra.mrb[0].mxu0 %v1446
  %v2284 = vpop.f32.mrb[0].mxu0
  %v2285 = vadd.f32 0.0, %v2284
  %v2286 = vpop.f32.mrb[0].mxu0
  %2287 = vdwg.mxu0
  %v2288 = vadd.f32 %v2211, %v2280
  %v2289 = vadd.f32 %v2212, %v2285
  %v2290 = vrot.slane %v1037, 2
  %v2291 = vrot.slane %v1038, 2
  %v2292 = vsel %vm765, %v2290, %v2291
  %v2293 = vsel %vm657, %v2292, 0
  %v2295 = vsel %vm657, %v2291, 0
  %2297 = vmatprep.subr.mxu0 0.0
  %2298 = vmatpush1.msra.mxu0 %v1430
  %2299 = vmatprep.subr.mxu0 0.0
  %2300 = vmatpush1.msra.mxu0 %v1431
  %2301 = vmatprep.subr.mxu0 0.0
  %2302 = vmatpush1.msra.mxu0 %v1432
  %2303 = vmatprep.subr.mxu0 0.0
  %2304 = vmatpush1.msra.mxu0 %v1433
  %2305 = vmatprep.subr.mxu0 0.0
  %2306 = vmatpush1.msra.mxu0 %v1434
  %2307 = vmatprep.subr.mxu0 0.0
  %2308 = vmatpush1.msra.mxu0 %v1435
  %2309 = vmatprep.subr.mxu0 0.0
  %2310 = vmatpush1.msra.mxu0 %v1436
  %2311 = vmatprep.subr.mxu0 0.0
  %2312 = vmatpush1.msra.mxu0 %v1437
  %2313 = vmatprep.subr.mxu0 0.0
  %2314 = vmatpush1.msra.mxu0 %v1438
  %2315 = vmatprep.subr.mxu0 0.0
  %2316 = vmatpush1.msra.mxu0 %v1439
  %2317 = vmatprep.subr.mxu0 0.0
  %2318 = vmatpush1.msra.mxu0 %v1449
  %2319 = vmatprep.subr.mxu0 0.0
  %2320 = vmatpush1.msra.mxu0 0.0
  %2321 = vmatprep.subr.mxu0 0.0
  %2322 = vmatpush1.msra.mxu0 0.0
  %2323 = vmatprep.subr.mxu0 0.0
  %2324 = vmatpush1.msra.mxu0 0.0
  %2325 = vmatprep.subr.mxu0 0.0
  %2326 = vmatpush1.msra.mxu0 0.0
  %2327 = vmatprep.subr.mxu0 0.0
  %2328 = vmatpush1.msra.mxu0 0.0
  %2329 = vmatprep.subr.mxu0 0.0
  %2330 = vmatpush1.msra.mxu0 0.0
  %2331 = vmatprep.subr.mxu0 0.0
  %2332 = vmatpush1.msra.mxu0 0.0
  %2333 = vmatprep.subr.mxu0 0.0
  %2334 = vmatpush1.msra.mxu0 0.0
  %2335 = vmatprep.subr.mxu0 0.0
  %2336 = vmatpush1.msra.mxu0 0.0
  %2337 = vmatprep.subr.mxu0 0.0
  %2338 = vmatpush1.msra.mxu0 0.0
  %2339 = vmatprep.subr.mxu0 0.0
  %2340 = vmatpush1.msra.mxu0 0.0
  %2341 = vmatprep.subr.mxu0 0.0
  %2342 = vmatpush1.msra.mxu0 0.0
  %2343 = vmatprep.subr.mxu0 0.0
  %2344 = vmatpush1.msra.mxu0 0.0
  %2345 = vmatprep.subr.mxu0 0.0
  %2346 = vmatpush1.msra.mxu0 0.0
  %2347 = vmatprep.subr.mxu0 0.0
  %2348 = vmatpush1.msra.mxu0 0.0
  %2349 = vmatprep.subr.mxu0 0.0
  %2350 = vmatpush1.msra.mxu0 0.0
  %2351 = vmatprep.subr.mxu0 0.0
  %2352 = vmatpush1.msra.mxu0 0.0
  %2353 = vmatprep.subr.mxu0 0.0
  %2354 = vmatpush1.msra.mxu0 0.0
  %2355 = vmatprep.subr.mxu0 0.0
  %2356 = vmatpush1.msra.mxu0 0.0
  %2357 = vmatprep.subr.mxu0 0.0
  %2358 = vmatpush1.msra.mxu0 0.0
  %2359 = vmatprep.subr.mxu0 0.0
  %2360 = vmatpush1.msra.mxu0 0.0
  %2361 = vmatprep.mubr.f32.mxu0 0.0
  %2362 = vmatmul.mubr.f32.gmra.mrb[0].mxu0 %v2293
  %v2363 = vpop.f32.mrb[0].mxu0
  %v2364 = vadd.f32 0.0, %v2363
  %v2365 = vpop.f32.mrb[0].mxu0
  %2366 = vmatprep.mubr.f32.mxu0 0.0
  %2367 = vmatmul.mubr.f32.gmra.mrb[0].mxu0 %v2295
  %v2368 = vpop.f32.mrb[0].mxu0
  %v2369 = vadd.f32 0.0, %v2368
  %v2370 = vpop.f32.mrb[0].mxu0
  %2371 = vdwg.mxu0
  %v2372 = vadd.f32 %v2288, %v2364
  %v2373 = vadd.f32 %v2289, %v2369
  %v2374 = vmax.f32 %v1984, %v2372
  %v2375 = vmax.f32 %v1985, %v2373
  %2376 = vmatprep.subr.mxu0 0.0
  %2377 = vmatpush1.msra.mxu0 %v1541
  %2378 = vmatprep.subr.mxu0 0.0
  %2379 = vmatpush1.msra.mxu0 %v1542
  %2380 = vmatprep.subr.mxu0 0.0
  %2381 = vmatpush1.msra.mxu0 %v1543
  %2382 = vmatprep.subr.mxu0 0.0
  %2383 = vmatpush1.msra.mxu0 %v1544
  %2384 = vmatprep.subr.mxu0 0.0
  %2385 = vmatpush1.msra.mxu0 %v1545
  %2386 = vmatprep.subr.mxu0 0.0
  %2387 = vmatpush1.msra.mxu0 %v1546
  %2388 = vmatprep.subr.mxu0 0.0
  %2389 = vmatpush1.msra.mxu0 %v1547
  %2390 = vmatprep.subr.mxu0 0.0
  %2391 = vmatpush1.msra.mxu0 %v1548
  %2392 = vmatprep.subr.mxu0 0.0
  %2393 = vmatpush1.msra.mxu0 %v1549
  %2394 = vmatprep.subr.mxu0 0.0
  %2395 = vmatpush1.msra.mxu0 %v1550
  %2396 = vmatprep.subr.mxu0 0.0
  %2397 = vmatpush1.msra.mxu0 %v1553
  %2398 = vmatprep.subr.mxu0 0.0
  %2399 = vmatpush1.msra.mxu0 0.0
  %2400 = vmatprep.subr.mxu0 0.0
  %2401 = vmatpush1.msra.mxu0 0.0
  %2402 = vmatprep.subr.mxu0 0.0
  %2403 = vmatpush1.msra.mxu0 0.0
  %2404 = vmatprep.subr.mxu0 0.0
  %2405 = vmatpush1.msra.mxu0 0.0
  %2406 = vmatprep.subr.mxu0 0.0
  %2407 = vmatpush1.msra.mxu0 0.0
  %2408 = vmatprep.subr.mxu0 0.0
  %2409 = vmatpush1.msra.mxu0 0.0
  %2410 = vmatprep.subr.mxu0 0.0
  %2411 = vmatpush1.msra.mxu0 0.0
  %2412 = vmatprep.subr.mxu0 0.0
  %2413 = vmatpush1.msra.mxu0 0.0
  %2414 = vmatprep.subr.mxu0 0.0
  %2415 = vmatpush1.msra.mxu0 0.0
  %2416 = vmatprep.subr.mxu0 0.0
  %2417 = vmatpush1.msra.mxu0 0.0
  %2418 = vmatprep.subr.mxu0 0.0
  %2419 = vmatpush1.msra.mxu0 0.0
  %2420 = vmatprep.subr.mxu0 0.0
  %2421 = vmatpush1.msra.mxu0 0.0
  %2422 = vmatprep.subr.mxu0 0.0
  %2423 = vmatpush1.msra.mxu0 0.0
  %2424 = vmatprep.subr.mxu0 0.0
  %2425 = vmatpush1.msra.mxu0 0.0
  %2426 = vmatprep.subr.mxu0 0.0
  %2427 = vmatpush1.msra.mxu0 0.0
  %2428 = vmatprep.subr.mxu0 0.0
  %2429 = vmatpush1.msra.mxu0 0.0
  %2430 = vmatprep.subr.mxu0 0.0
  %2431 = vmatpush1.msra.mxu0 0.0
  %2432 = vmatprep.subr.mxu0 0.0
  %2433 = vmatpush1.msra.mxu0 0.0
  %2434 = vmatprep.subr.mxu0 0.0
  %2435 = vmatpush1.msra.mxu0 0.0
  %2436 = vmatprep.subr.mxu0 0.0
  %2437 = vmatpush1.msra.mxu0 0.0
  %2438 = vmatprep.subr.mxu0 0.0
  %2439 = vmatpush1.msra.mxu0 0.0
  %2440 = vmatprep.mubr.f32.mxu0 0.0
  %2441 = vmatmul.mubr.f32.gmra.mrb[0].mxu0 %v1248
  %v2442 = vpop.f32.mrb[0].mxu0
  %v2443 = vadd.f32 0.0, %v2442
  %v2444 = vpop.f32.mrb[0].mxu0
  %2445 = vmatprep.mubr.f32.mxu0 0.0
  %2446 = vmatmul.mubr.f32.gmra.mrb[0].mxu0 %v1250
  %v2447 = vpop.f32.mrb[0].mxu0
  %v2448 = vadd.f32 0.0, %v2447
  %v2449 = vpop.f32.mrb[0].mxu0
  %2450 = vdwg.mxu0
  %2451 = vmatprep.subr.mxu0 0.0
  %2452 = vmatpush1.msra.mxu0 %v1529
  %2453 = vmatprep.subr.mxu0 0.0
  %2454 = vmatpush1.msra.mxu0 %v1530
  %2455 = vmatprep.subr.mxu0 0.0
  %2456 = vmatpush1.msra.mxu0 %v1531
  %2457 = vmatprep.subr.mxu0 0.0
  %2458 = vmatpush1.msra.mxu0 %v1532
  %2459 = vmatprep.subr.mxu0 0.0
  %2460 = vmatpush1.msra.mxu0 %v1533
  %2461 = vmatprep.subr.mxu0 0.0
  %2462 = vmatpush1.msra.mxu0 %v1534
  %2463 = vmatprep.subr.mxu0 0.0
  %2464 = vmatpush1.msra.mxu0 %v1535
  %2465 = vmatprep.subr.mxu0 0.0
  %2466 = vmatpush1.msra.mxu0 %v1536
  %2467 = vmatprep.subr.mxu0 0.0
  %2468 = vmatpush1.msra.mxu0 %v1537
  %2469 = vmatprep.subr.mxu0 0.0
  %2470 = vmatpush1.msra.mxu0 %v1538
  %2471 = vmatprep.subr.mxu0 0.0
  %2472 = vmatpush1.msra.mxu0 %v1631
  %2473 = vmatprep.subr.mxu0 0.0
  %2474 = vmatpush1.msra.mxu0 0.0
  %2475 = vmatprep.subr.mxu0 0.0
  %2476 = vmatpush1.msra.mxu0 0.0
  %2477 = vmatprep.subr.mxu0 0.0
  %2478 = vmatpush1.msra.mxu0 0.0
  %2479 = vmatprep.subr.mxu0 0.0
  %2480 = vmatpush1.msra.mxu0 0.0
  %2481 = vmatprep.subr.mxu0 0.0
  %2482 = vmatpush1.msra.mxu0 0.0
  %2483 = vmatprep.subr.mxu0 0.0
  %2484 = vmatpush1.msra.mxu0 0.0
  %2485 = vmatprep.subr.mxu0 0.0
  %2486 = vmatpush1.msra.mxu0 0.0
  %2487 = vmatprep.subr.mxu0 0.0
  %2488 = vmatpush1.msra.mxu0 0.0
  %2489 = vmatprep.subr.mxu0 0.0
  %2490 = vmatpush1.msra.mxu0 0.0
  %2491 = vmatprep.subr.mxu0 0.0
  %2492 = vmatpush1.msra.mxu0 0.0
  %2493 = vmatprep.subr.mxu0 0.0
  %2494 = vmatpush1.msra.mxu0 0.0
  %2495 = vmatprep.subr.mxu0 0.0
  %2496 = vmatpush1.msra.mxu0 0.0
  %2497 = vmatprep.subr.mxu0 0.0
  %2498 = vmatpush1.msra.mxu0 0.0
  %2499 = vmatprep.subr.mxu0 0.0
  %2500 = vmatpush1.msra.mxu0 0.0
  %2501 = vmatprep.subr.mxu0 0.0
  %2502 = vmatpush1.msra.mxu0 0.0
  %2503 = vmatprep.subr.mxu0 0.0
  %2504 = vmatpush1.msra.mxu0 0.0
  %2505 = vmatprep.subr.mxu0 0.0
  %2506 = vmatpush1.msra.mxu0 0.0
  %2507 = vmatprep.subr.mxu0 0.0
  %2508 = vmatpush1.msra.mxu0 0.0
  %2509 = vmatprep.subr.mxu0 0.0
  %2510 = vmatpush1.msra.mxu0 0.0
  %2511 = vmatprep.subr.mxu0 0.0
  %2512 = vmatpush1.msra.mxu0 0.0
  %2513 = vmatprep.subr.mxu0 0.0
  %2514 = vmatpush1.msra.mxu0 0.0
  %2515 = vmatprep.mubr.f32.mxu0 0.0
  %2516 = vmatmul.mubr.f32.gmra.mrb[0].mxu0 %v1068
  %v2517 = vpop.f32.mrb[0].mxu0
  %v2518 = vadd.f32 %v2443, %v2517
  %v2519 = vpop.f32.mrb[0].mxu0
  %2520 = vmatprep.mubr.f32.mxu0 0.0
  %2521 = vmatmul.mubr.f32.gmra.mrb[0].mxu0 %v1070
  %v2522 = vpop.f32.mrb[0].mxu0
  %v2523 = vadd.f32 %v2448, %v2522
  %v2524 = vpop.f32.mrb[0].mxu0
  %2525 = vdwg.mxu0
  %2526 = vmatprep.subr.mxu0 0.0
  %2527 = vmatpush1.msra.mxu0 %v1709
  %2528 = vmatprep.subr.mxu0 0.0
  %2529 = vmatpush1.msra.mxu0 %v1710
  %2530 = vmatprep.subr.mxu0 0.0
  %2531 = vmatpush1.msra.mxu0 %v1711
  %2532 = vmatprep.subr.mxu0 0.0
  %2533 = vmatpush1.msra.mxu0 %v1712
  %2534 = vmatprep.subr.mxu0 0.0
  %2535 = vmatpush1.msra.mxu0 %v1713
  %2536 = vmatprep.subr.mxu0 0.0
  %2537 = vmatpush1.msra.mxu0 %v1714
  %2538 = vmatprep.subr.mxu0 0.0
  %2539 = vmatpush1.msra.mxu0 %v1715
  %2540 = vmatprep.subr.mxu0 0.0
  %2541 = vmatpush1.msra.mxu0 %v1716
  %2542 = vmatprep.subr.mxu0 0.0
  %2543 = vmatpush1.msra.mxu0 %v1717
  %2544 = vmatprep.subr.mxu0 0.0
  %2545 = vmatpush1.msra.mxu0 %v1718
  %2546 = vmatprep.subr.mxu0 0.0
  %2547 = vmatpush1.msra.mxu0 %v1721
  %2548 = vmatprep.subr.mxu0 0.0
  %2549 = vmatpush1.msra.mxu0 0.0
  %2550 = vmatprep.subr.mxu0 0.0
  %2551 = vmatpush1.msra.mxu0 0.0
  %2552 = vmatprep.subr.mxu0 0.0
  %2553 = vmatpush1.msra.mxu0 0.0
  %2554 = vmatprep.subr.mxu0 0.0
  %2555 = vmatpush1.msra.mxu0 0.0
  %2556 = vmatprep.subr.mxu0 0.0
  %2557 = vmatpush1.msra.mxu0 0.0
  %2558 = vmatprep.subr.mxu0 0.0
  %2559 = vmatpush1.msra.mxu0 0.0
  %2560 = vmatprep.subr.mxu0 0.0
  %2561 = vmatpush1.msra.mxu0 0.0
  %2562 = vmatprep.subr.mxu0 0.0
  %2563 = vmatpush1.msra.mxu0 0.0
  %2564 = vmatprep.subr.mxu0 0.0
  %2565 = vmatpush1.msra.mxu0 0.0
  %2566 = vmatprep.subr.mxu0 0.0
  %2567 = vmatpush1.msra.mxu0 0.0
  %2568 = vmatprep.subr.mxu0 0.0
  %2569 = vmatpush1.msra.mxu0 0.0
  %2570 = vmatprep.subr.mxu0 0.0
  %2571 = vmatpush1.msra.mxu0 0.0
  %2572 = vmatprep.subr.mxu0 0.0
  %2573 = vmatpush1.msra.mxu0 0.0
  %2574 = vmatprep.subr.mxu0 0.0
  %2575 = vmatpush1.msra.mxu0 0.0
  %2576 = vmatprep.subr.mxu0 0.0
  %2577 = vmatpush1.msra.mxu0 0.0
  %2578 = vmatprep.subr.mxu0 0.0
  %2579 = vmatpush1.msra.mxu0 0.0
  %2580 = vmatprep.subr.mxu0 0.0
  %2581 = vmatpush1.msra.mxu0 0.0
  %2582 = vmatprep.subr.mxu0 0.0
  %2583 = vmatpush1.msra.mxu0 0.0
  %2584 = vmatprep.subr.mxu0 0.0
  %2585 = vmatpush1.msra.mxu0 0.0
  %2586 = vmatprep.subr.mxu0 0.0
  %2587 = vmatpush1.msra.mxu0 0.0
  %2588 = vmatprep.subr.mxu0 0.0
  %2589 = vmatpush1.msra.mxu0 0.0
  %2590 = vmatprep.mubr.f32.mxu0 0.0
  %2591 = vmatmul.mubr.f32.gmra.mrb[0].mxu0 %v1344
  %v2592 = vpop.f32.mrb[0].mxu0
  %v2593 = vadd.f32 0.0, %v2592
  %v2594 = vpop.f32.mrb[0].mxu0
  %2595 = vmatprep.mubr.f32.mxu0 0.0
  %2596 = vmatmul.mubr.f32.gmra.mrb[0].mxu0 %v1347
  %v2597 = vpop.f32.mrb[0].mxu0
  %v2598 = vadd.f32 0.0, %v2597
  %v2599 = vpop.f32.mrb[0].mxu0
  %2600 = vdwg.mxu0
  %v2601 = vadd.f32 %v2518, %v2593
  %v2602 = vadd.f32 %v2523, %v2598
  %2603 = vmatprep.subr.mxu0 0.0
  %2604 = vmatpush1.msra.mxu0 %v1801
  %2605 = vmatprep.subr.mxu0 0.0
  %2606 = vmatpush1.msra.mxu0 %v1802
  %2607 = vmatprep.subr.mxu0 0.0
  %2608 = vmatpush1.msra.mxu0 %v1803
  %2609 = vmatprep.subr.mxu0 0.0
  %2610 = vmatpush1.msra.mxu0 %v1804
  %2611 = vmatprep.subr.mxu0 0.0
  %2612 = vmatpush1.msra.mxu0 %v1805
  %2613 = vmatprep.subr.mxu0 0.0
  %2614 = vmatpush1.msra.mxu0 %v1806
  %2615 = vmatprep.subr.mxu0 0.0
  %2616 = vmatpush1.msra.mxu0 %v1807
  %2617 = vmatprep.subr.mxu0 0.0
  %2618 = vmatpush1.msra.mxu0 %v1808
  %2619 = vmatprep.subr.mxu0 0.0
  %2620 = vmatpush1.msra.mxu0 %v1809
  %2621 = vmatprep.subr.mxu0 0.0
  %2622 = vmatpush1.msra.mxu0 %v1810
  %2623 = vmatprep.subr.mxu0 0.0
  %2624 = vmatpush1.msra.mxu0 %v1813
  %2625 = vmatprep.subr.mxu0 0.0
  %2626 = vmatpush1.msra.mxu0 0.0
  %2627 = vmatprep.subr.mxu0 0.0
  %2628 = vmatpush1.msra.mxu0 0.0
  %2629 = vmatprep.subr.mxu0 0.0
  %2630 = vmatpush1.msra.mxu0 0.0
  %2631 = vmatprep.subr.mxu0 0.0
  %2632 = vmatpush1.msra.mxu0 0.0
  %2633 = vmatprep.subr.mxu0 0.0
  %2634 = vmatpush1.msra.mxu0 0.0
  %2635 = vmatprep.subr.mxu0 0.0
  %2636 = vmatpush1.msra.mxu0 0.0
  %2637 = vmatprep.subr.mxu0 0.0
  %2638 = vmatpush1.msra.mxu0 0.0
  %2639 = vmatprep.subr.mxu0 0.0
  %2640 = vmatpush1.msra.mxu0 0.0
  %2641 = vmatprep.subr.mxu0 0.0
  %2642 = vmatpush1.msra.mxu0 0.0
  %2643 = vmatprep.subr.mxu0 0.0
  %2644 = vmatpush1.msra.mxu0 0.0
  %2645 = vmatprep.subr.mxu0 0.0
  %2646 = vmatpush1.msra.mxu0 0.0
  %2647 = vmatprep.subr.mxu0 0.0
  %2648 = vmatpush1.msra.mxu0 0.0
  %2649 = vmatprep.subr.mxu0 0.0
  %2650 = vmatpush1.msra.mxu0 0.0
  %2651 = vmatprep.subr.mxu0 0.0
  %2652 = vmatpush1.msra.mxu0 0.0
  %2653 = vmatprep.subr.mxu0 0.0
  %2654 = vmatpush1.msra.mxu0 0.0
  %2655 = vmatprep.subr.mxu0 0.0
  %2656 = vmatpush1.msra.mxu0 0.0
  %2657 = vmatprep.subr.mxu0 0.0
  %2658 = vmatpush1.msra.mxu0 0.0
  %2659 = vmatprep.subr.mxu0 0.0
  %2660 = vmatpush1.msra.mxu0 0.0
  %2661 = vmatprep.subr.mxu0 0.0
  %2662 = vmatpush1.msra.mxu0 0.0
  %2663 = vmatprep.subr.mxu0 0.0
  %2664 = vmatpush1.msra.mxu0 0.0
  %2665 = vmatprep.subr.mxu0 0.0
  %2666 = vmatpush1.msra.mxu0 0.0
  %2667 = vmatprep.mubr.f32.mxu0 0.0
  %2668 = vmatmul.mubr.f32.gmra.mrb[0].mxu0 %v1444
  %v2669 = vpop.f32.mrb[0].mxu0
  %v2670 = vadd.f32 0.0, %v2669
  %v2671 = vpop.f32.mrb[0].mxu0
  %2672 = vmatprep.mubr.f32.mxu0 0.0
  %2673 = vmatmul.mubr.f32.gmra.mrb[0].mxu0 %v1446
  %v2674 = vpop.f32.mrb[0].mxu0
  %v2675 = vadd.f32 0.0, %v2674
  %v2676 = vpop.f32.mrb[0].mxu0
  %2677 = vdwg.mxu0
  %v2678 = vadd.f32 %v2601, %v2670
  %v2679 = vadd.f32 %v2602, %v2675
  %2680 = vmatprep.subr.mxu0 0.0
  %2681 = vmatpush1.msra.mxu0 %v1893
  %2682 = vmatprep.subr.mxu0 0.0
  %2683 = vmatpush1.msra.mxu0 %v1894
  %2684 = vmatprep.subr.mxu0 0.0
  %2685 = vmatpush1.msra.mxu0 %v1895
  %2686 = vmatprep.subr.mxu0 0.0
  %2687 = vmatpush1.msra.mxu0 %v1896
  %2688 = vmatprep.subr.mxu0 0.0
  %2689 = vmatpush1.msra.mxu0 %v1897
  %2690 = vmatprep.subr.mxu0 0.0
  %2691 = vmatpush1.msra.mxu0 %v1898
  %2692 = vmatprep.subr.mxu0 0.0
  %2693 = vmatpush1.msra.mxu0 %v1899
  %2694 = vmatprep.subr.mxu0 0.0
  %2695 = vmatpush1.msra.mxu0 %v1900
  %2696 = vmatprep.subr.mxu0 0.0
  %2697 = vmatpush1.msra.mxu0 %v1901
  %2698 = vmatprep.subr.mxu0 0.0
  %2699 = vmatpush1.msra.mxu0 %v1902
  %2700 = vmatprep.subr.mxu0 0.0
  %2701 = vmatpush1.msra.mxu0 %v1905
  %2702 = vmatprep.subr.mxu0 0.0
  %2703 = vmatpush1.msra.mxu0 0.0
  %2704 = vmatprep.subr.mxu0 0.0
  %2705 = vmatpush1.msra.mxu0 0.0
  %2706 = vmatprep.subr.mxu0 0.0
  %2707 = vmatpush1.msra.mxu0 0.0
  %2708 = vmatprep.subr.mxu0 0.0
  %2709 = vmatpush1.msra.mxu0 0.0
  %2710 = vmatprep.subr.mxu0 0.0
  %2711 = vmatpush1.msra.mxu0 0.0
  %2712 = vmatprep.subr.mxu0 0.0
  %2713 = vmatpush1.msra.mxu0 0.0
  %2714 = vmatprep.subr.mxu0 0.0
  %2715 = vmatpush1.msra.mxu0 0.0
  %2716 = vmatprep.subr.mxu0 0.0
  %2717 = vmatpush1.msra.mxu0 0.0
  %2718 = vmatprep.subr.mxu0 0.0
  %2719 = vmatpush1.msra.mxu0 0.0
  %2720 = vmatprep.subr.mxu0 0.0
  %2721 = vmatpush1.msra.mxu0 0.0
  %2722 = vmatprep.subr.mxu0 0.0
  %2723 = vmatpush1.msra.mxu0 0.0
  %2724 = vmatprep.subr.mxu0 0.0
  %2725 = vmatpush1.msra.mxu0 0.0
  %2726 = vmatprep.subr.mxu0 0.0
  %2727 = vmatpush1.msra.mxu0 0.0
  %2728 = vmatprep.subr.mxu0 0.0
  %2729 = vmatpush1.msra.mxu0 0.0
  %2730 = vmatprep.subr.mxu0 0.0
  %2731 = vmatpush1.msra.mxu0 0.0
  %2732 = vmatprep.subr.mxu0 0.0
  %2733 = vmatpush1.msra.mxu0 0.0
  %2734 = vmatprep.subr.mxu0 0.0
  %2735 = vmatpush1.msra.mxu0 0.0
  %2736 = vmatprep.subr.mxu0 0.0
  %2737 = vmatpush1.msra.mxu0 0.0
  %2738 = vmatprep.subr.mxu0 0.0
  %2739 = vmatpush1.msra.mxu0 0.0
  %2740 = vmatprep.subr.mxu0 0.0
  %2741 = vmatpush1.msra.mxu0 0.0
  %2742 = vmatprep.subr.mxu0 0.0
  %2743 = vmatpush1.msra.mxu0 0.0
  %2744 = vmatprep.mubr.f32.mxu0 0.0
  %2745 = vmatmul.mubr.f32.gmra.mrb[0].mxu0 %v2293
  %v2746 = vpop.f32.mrb[0].mxu0
  %v2747 = vadd.f32 0.0, %v2746
  %v2748 = vpop.f32.mrb[0].mxu0
  %2749 = vmatprep.mubr.f32.mxu0 0.0
  %2750 = vmatmul.mubr.f32.gmra.mrb[0].mxu0 %v2295
  %v2751 = vpop.f32.mrb[0].mxu0
  %v2752 = vadd.f32 0.0, %v2751
  %v2753 = vpop.f32.mrb[0].mxu0
  %2754 = vdwg.mxu0
  %v2755 = vadd.f32 %v2678, %v2747
  %v2756 = vadd.f32 %v2679, %v2752
  %v2757 = vmax.f32 %v2374, %v2755
  %v2758 = vmax.f32 %v2375, %v2756
  %v2759 = vld [vmem:[%s6] sm:$0x1]
  %v2760 = vlaneseq
  %v2761 = vshrl.u32 %v2760, 7
  %v2762 = vsub.s32 0, %v2761
  %v2763 = vrot.slane %v2759, %v2762
  %v2764 = vadd.f32 %v2757, %v2763
  %v2765 = vadd.f32 %v2758, %v2763
  %v2766 = vmax.f32 %v2764, 0.0
  %v2767 = vmax.f32 %v2765, 0.0
  %vm2768 = vcmask 654336
  %v2769 = vsel %vm2768, %v2766, 0.0
  %vm2770 = vcmask 648192
  %v2771 = vsel %vm2770, %v2767, 0.0
  %v2772 = vadd.f32 %v2769, %v2771
  %v2773 = vrot.slane %v2772, 4
  %v2774 = vadd.f32 %v2772, %v2773
  %v2775 = vrot.slane %v2774, 2
  %v2776 = vadd.f32 %v2774, %v2775
  %v2777 = vrot.slane %v2776, 1
  %v2778 = vadd.f32 %v2776, %v2777
  %v2779 = vld [vmem:[%s7] sm:$0xff]
  %v2780 = vld [vmem:[%s7 + $0x8] sm:$0xff]
  %v2781 = vld [vmem:[%s7 + $0x10] sm:$0xff]
  %v2782 = vld [vmem:[%s7 + $0x18] sm:$0xff]
  %v2783 = vld [vmem:[%s7 + $0x20] sm:$0xff]
  %v2784 = vld [vmem:[%s7 + $0x28] sm:$0xff]
  %v2785 = vld [vmem:[%s7 + $0x30] sm:$0xff]
  %v2786 = vld [vmem:[%s7 + $0x38] sm:$0xff]
  %v2787 = vld [vmem:[%s7 + $0x40] sm:$0xff]
  %v2788 = vld [vmem:[%s7 + $0x48] sm:$0xff]
  %v2790 = vsel %vm2768, %v2778, 0
  %2792 = vmatprep.subr.mxu0 0.0
  %2793 = vmatpush1.msra.mxu0 %v2779
  %2794 = vmatprep.subr.mxu0 0.0
  %2795 = vmatpush1.msra.mxu0 %v2780
  %2796 = vmatprep.subr.mxu0 0.0
  %2797 = vmatpush1.msra.mxu0 %v2781
  %2798 = vmatprep.subr.mxu0 0.0
  %2799 = vmatpush1.msra.mxu0 %v2782
  %2800 = vmatprep.subr.mxu0 0.0
  %2801 = vmatpush1.msra.mxu0 %v2783
  %2802 = vmatprep.subr.mxu0 0.0
  %2803 = vmatpush1.msra.mxu0 %v2784
  %2804 = vmatprep.subr.mxu0 0.0
  %2805 = vmatpush1.msra.mxu0 %v2785
  %2806 = vmatprep.subr.mxu0 0.0
  %2807 = vmatpush1.msra.mxu0 %v2786
  %2808 = vmatprep.subr.mxu0 0.0
  %2809 = vmatpush1.msra.mxu0 %v2787
  %2810 = vmatprep.subr.mxu0 0.0
  %2811 = vmatpush1.msra.mxu0 %v2788
  %2812 = vmatprep.subr.mxu0 0.0
  %2813 = vmatpush1.msra.mxu0 0.0
  %2814 = vmatprep.subr.mxu0 0.0
  %2815 = vmatpush1.msra.mxu0 0.0
  %2816 = vmatprep.subr.mxu0 0.0
  %2817 = vmatpush1.msra.mxu0 0.0
  %2818 = vmatprep.subr.mxu0 0.0
  %2819 = vmatpush1.msra.mxu0 0.0
  %2820 = vmatprep.subr.mxu0 0.0
  %2821 = vmatpush1.msra.mxu0 0.0
  %2822 = vmatprep.subr.mxu0 0.0
  %2823 = vmatpush1.msra.mxu0 0.0
  %2824 = vmatprep.subr.mxu0 0.0
  %2825 = vmatpush1.msra.mxu0 0.0
  %2826 = vmatprep.subr.mxu0 0.0
  %2827 = vmatpush1.msra.mxu0 0.0
  %2828 = vmatprep.subr.mxu0 0.0
  %2829 = vmatpush1.msra.mxu0 0.0
  %2830 = vmatprep.subr.mxu0 0.0
  %2831 = vmatpush1.msra.mxu0 0.0
  %2832 = vmatprep.subr.mxu0 0.0
  %2833 = vmatpush1.msra.mxu0 0.0
  %2834 = vmatprep.subr.mxu0 0.0
  %2835 = vmatpush1.msra.mxu0 0.0
  %2836 = vmatprep.subr.mxu0 0.0
  %2837 = vmatpush1.msra.mxu0 0.0
  %2838 = vmatprep.subr.mxu0 0.0
  %2839 = vmatpush1.msra.mxu0 0.0
  %2840 = vmatprep.subr.mxu0 0.0
  %2841 = vmatpush1.msra.mxu0 0.0
  %2842 = vmatprep.subr.mxu0 0.0
  %2843 = vmatpush1.msra.mxu0 0.0
  %2844 = vmatprep.subr.mxu0 0.0
  %2845 = vmatpush1.msra.mxu0 0.0
  %2846 = vmatprep.subr.mxu0 0.0
  %2847 = vmatpush1.msra.mxu0 0.0
  %2848 = vmatprep.subr.mxu0 0.0
  %2849 = vmatpush1.msra.mxu0 0.0
  %2850 = vmatprep.subr.mxu0 0.0
  %2851 = vmatpush1.msra.mxu0 0.0
  %2852 = vmatprep.subr.mxu0 0.0
  %2853 = vmatpush1.msra.mxu0 0.0
  %2854 = vmatprep.subr.mxu0 0.0
  %2855 = vmatpush1.msra.mxu0 0.0
  %2856 = vmatprep.mubr.f32.mxu0 0.0
  %2857 = vmatmul.mubr.f32.gmra.mrb[0].mxu0 %v2790
  %v2858 = vpop.f32.mrb[0].mxu0
  %v2859 = vadd.f32 0.0, %v2858
  %v2860 = vpop.f32.mrb[0].mxu0
  %2861 = vdwg.mxu0
  %v2862 = vmul.f32 %v2859, 0.02
  %v2863 = vld [vmem:[%s8] sm:$0xff]
  %v2864 = vld [vmem:[%s8 + $0x8] sm:$0xff]
  %vm2865 = vcmask 130048
  %v2867 = vsel %vm2865, %v2862, 0
  %2869 = vmatprep.subr.mxu0 0.0
  %2870 = vmatpush1.msra.mxu0 %v2863
  %2871 = vmatprep.subr.mxu0 0.0
  %2872 = vmatpush1.msra.mxu0 %v2864
  %2873 = vmatprep.subr.mxu0 0.0
  %2874 = vmatpush1.msra.mxu0 0.0
  %2875 = vmatprep.subr.mxu0 0.0
  %2876 = vmatpush1.msra.mxu0 0.0
  %2877 = vmatprep.subr.mxu0 0.0
  %2878 = vmatpush1.msra.mxu0 0.0
  %2879 = vmatprep.subr.mxu0 0.0
  %2880 = vmatpush1.msra.mxu0 0.0
  %2881 = vmatprep.subr.mxu0 0.0
  %2882 = vmatpush1.msra.mxu0 0.0
  %2883 = vmatprep.subr.mxu0 0.0
  %2884 = vmatpush1.msra.mxu0 0.0
  %2885 = vmatprep.subr.mxu0 0.0
  %2886 = vmatpush1.msra.mxu0 0.0
  %2887 = vmatprep.subr.mxu0 0.0
  %2888 = vmatpush1.msra.mxu0 0.0
  %2889 = vmatprep.subr.mxu0 0.0
  %2890 = vmatpush1.msra.mxu0 0.0
  %2891 = vmatprep.subr.mxu0 0.0
  %2892 = vmatpush1.msra.mxu0 0.0
  %2893 = vmatprep.subr.mxu0 0.0
  %2894 = vmatpush1.msra.mxu0 0.0
  %2895 = vmatprep.subr.mxu0 0.0
  %2896 = vmatpush1.msra.mxu0 0.0
  %2897 = vmatprep.subr.mxu0 0.0
  %2898 = vmatpush1.msra.mxu0 0.0
  %2899 = vmatprep.subr.mxu0 0.0
  %2900 = vmatpush1.msra.mxu0 0.0
  %2901 = vmatprep.subr.mxu0 0.0
  %2902 = vmatpush1.msra.mxu0 0.0
  %2903 = vmatprep.subr.mxu0 0.0
  %2904 = vmatpush1.msra.mxu0 0.0
  %2905 = vmatprep.subr.mxu0 0.0
  %2906 = vmatpush1.msra.mxu0 0.0
  %2907 = vmatprep.subr.mxu0 0.0
  %2908 = vmatpush1.msra.mxu0 0.0
  %2909 = vmatprep.subr.mxu0 0.0
  %2910 = vmatpush1.msra.mxu0 0.0
  %2911 = vmatprep.subr.mxu0 0.0
  %2912 = vmatpush1.msra.mxu0 0.0
  %2913 = vmatprep.subr.mxu0 0.0
  %2914 = vmatpush1.msra.mxu0 0.0
  %2915 = vmatprep.subr.mxu0 0.0
  %2916 = vmatpush1.msra.mxu0 0.0
  %2917 = vmatprep.subr.mxu0 0.0
  %2918 = vmatpush1.msra.mxu0 0.0
  %2919 = vmatprep.subr.mxu0 0.0
  %2920 = vmatpush1.msra.mxu0 0.0
  %2921 = vmatprep.subr.mxu0 0.0
  %2922 = vmatpush1.msra.mxu0 0.0
  %2923 = vmatprep.subr.mxu0 0.0
  %2924 = vmatpush1.msra.mxu0 0.0
  %2925 = vmatprep.subr.mxu0 0.0
  %2926 = vmatpush1.msra.mxu0 0.0
  %2927 = vmatprep.subr.mxu0 0.0
  %2928 = vmatpush1.msra.mxu0 0.0
  %2929 = vmatprep.subr.mxu0 0.0
  %2930 = vmatpush1.msra.mxu0 0.0
  %2931 = vmatprep.subr.mxu0 0.0
  %2932 = vmatpush1.msra.mxu0 0.0
  %2933 = vmatprep.mubr.f32.mxu0 0.0
  %2934 = vmatmul.mubr.f32.gmra.mrb[0].mxu0 %v2867
  %v2935 = vpop.f32.mrb[0].mxu0
  %v2936 = vadd.f32 0.0, %v2935
  %v2937 = vpop.f32.mrb[0].mxu0
  %2938 = vdwg.mxu0
  %v2939 = vlaneseq
  %v2940 = vshrl.u32 %v2939, 7
  %v2941 = vsub.s32 0, %v2940
  %v2942 = vrot.slane %v2936, %v2941
  %v2943 = vsub.f32 %v2766, %v2942
  %v2944 = vsub.f32 %v2767, %v2942
  %v2945 = vmul.f32 %v2943, %v2943
  %v2946 = vmul.f32 %v2944, %v2944
  %v2947 = vsel %vm2768, %v2945, 0.0
  %v2948 = vsel %vm2770, %v2946, 0.0
  %v2949 = vadd.f32 %v2947, %v2948
  %v2950 = vrot.slane %v2949, 4
  %v2951 = vadd.f32 %v2949, %v2950
  %v2952 = vrot.slane %v2951, 2
  %v2953 = vadd.f32 %v2951, %v2952
  %v2954 = vrot.slane %v2953, 1
  %v2955 = vadd.f32 %v2953, %v2954
  %v2957 = vsel %vm2768, %v2955, 0
  %2959 = vmatprep.subr.mxu0 0.0
  %2960 = vmatpush1.msra.mxu0 %v2779
  %2961 = vmatprep.subr.mxu0 0.0
  %2962 = vmatpush1.msra.mxu0 %v2780
  %2963 = vmatprep.subr.mxu0 0.0
  %2964 = vmatpush1.msra.mxu0 %v2781
  %2965 = vmatprep.subr.mxu0 0.0
  %2966 = vmatpush1.msra.mxu0 %v2782
  %2967 = vmatprep.subr.mxu0 0.0
  %2968 = vmatpush1.msra.mxu0 %v2783
  %2969 = vmatprep.subr.mxu0 0.0
  %2970 = vmatpush1.msra.mxu0 %v2784
  %2971 = vmatprep.subr.mxu0 0.0
  %2972 = vmatpush1.msra.mxu0 %v2785
  %2973 = vmatprep.subr.mxu0 0.0
  %2974 = vmatpush1.msra.mxu0 %v2786
  %2975 = vmatprep.subr.mxu0 0.0
  %2976 = vmatpush1.msra.mxu0 %v2787
  %2977 = vmatprep.subr.mxu0 0.0
  %2978 = vmatpush1.msra.mxu0 %v2788
  %2979 = vmatprep.subr.mxu0 0.0
  %2980 = vmatpush1.msra.mxu0 0.0
  %2981 = vmatprep.subr.mxu0 0.0
  %2982 = vmatpush1.msra.mxu0 0.0
  %2983 = vmatprep.subr.mxu0 0.0
  %2984 = vmatpush1.msra.mxu0 0.0
  %2985 = vmatprep.subr.mxu0 0.0
  %2986 = vmatpush1.msra.mxu0 0.0
  %2987 = vmatprep.subr.mxu0 0.0
  %2988 = vmatpush1.msra.mxu0 0.0
  %2989 = vmatprep.subr.mxu0 0.0
  %2990 = vmatpush1.msra.mxu0 0.0
  %2991 = vmatprep.subr.mxu0 0.0
  %2992 = vmatpush1.msra.mxu0 0.0
  %2993 = vmatprep.subr.mxu0 0.0
  %2994 = vmatpush1.msra.mxu0 0.0
  %2995 = vmatprep.subr.mxu0 0.0
  %2996 = vmatpush1.msra.mxu0 0.0
  %2997 = vmatprep.subr.mxu0 0.0
  %2998 = vmatpush1.msra.mxu0 0.0
  %2999 = vmatprep.subr.mxu0 0.0
  %3000 = vmatpush1.msra.mxu0 0.0
  %3001 = vmatprep.subr.mxu0 0.0
  %3002 = vmatpush1.msra.mxu0 0.0
  %3003 = vmatprep.subr.mxu0 0.0
  %3004 = vmatpush1.msra.mxu0 0.0
  %3005 = vmatprep.subr.mxu0 0.0
  %3006 = vmatpush1.msra.mxu0 0.0
  %3007 = vmatprep.subr.mxu0 0.0
  %3008 = vmatpush1.msra.mxu0 0.0
  %3009 = vmatprep.subr.mxu0 0.0
  %3010 = vmatpush1.msra.mxu0 0.0
  %3011 = vmatprep.subr.mxu0 0.0
  %3012 = vmatpush1.msra.mxu0 0.0
  %3013 = vmatprep.subr.mxu0 0.0
  %3014 = vmatpush1.msra.mxu0 0.0
  %3015 = vmatprep.subr.mxu0 0.0
  %3016 = vmatpush1.msra.mxu0 0.0
  %3017 = vmatprep.subr.mxu0 0.0
  %3018 = vmatpush1.msra.mxu0 0.0
  %3019 = vmatprep.subr.mxu0 0.0
  %3020 = vmatpush1.msra.mxu0 0.0
  %3021 = vmatprep.subr.mxu0 0.0
  %3022 = vmatpush1.msra.mxu0 0.0
  %3023 = vmatprep.mubr.f32.mxu0 0.0
  %3024 = vmatmul.mubr.f32.gmra.mrb[0].mxu0 %v2957
  %v3025 = vpop.f32.mrb[0].mxu0
  %v3026 = vadd.f32 0.0, %v3025
  %v3027 = vpop.f32.mrb[0].mxu0
  %3028 = vdwg.mxu0
  %v3029 = vmul.f32 %v3026, 0.02
  %v3030 = vadd.f32 %v3029, 1e-05
  %v3031 = vrsqrt.pop %v3030
  %v3033 = vsel %vm2865, %v3031, 0
  %3035 = vmatprep.subr.mxu0 0.0
  %3036 = vmatpush1.msra.mxu0 %v2863
  %3037 = vmatprep.subr.mxu0 0.0
  %3038 = vmatpush1.msra.mxu0 %v2864
  %3039 = vmatprep.subr.mxu0 0.0
  %3040 = vmatpush1.msra.mxu0 0.0
  %3041 = vmatprep.subr.mxu0 0.0
  %3042 = vmatpush1.msra.mxu0 0.0
  %3043 = vmatprep.subr.mxu0 0.0
  %3044 = vmatpush1.msra.mxu0 0.0
  %3045 = vmatprep.subr.mxu0 0.0
  %3046 = vmatpush1.msra.mxu0 0.0
  %3047 = vmatprep.subr.mxu0 0.0
  %3048 = vmatpush1.msra.mxu0 0.0
  %3049 = vmatprep.subr.mxu0 0.0
  %3050 = vmatpush1.msra.mxu0 0.0
  %3051 = vmatprep.subr.mxu0 0.0
  %3052 = vmatpush1.msra.mxu0 0.0
  %3053 = vmatprep.subr.mxu0 0.0
  %3054 = vmatpush1.msra.mxu0 0.0
  %3055 = vmatprep.subr.mxu0 0.0
  %3056 = vmatpush1.msra.mxu0 0.0
  %3057 = vmatprep.subr.mxu0 0.0
  %3058 = vmatpush1.msra.mxu0 0.0
  %3059 = vmatprep.subr.mxu0 0.0
  %3060 = vmatpush1.msra.mxu0 0.0
  %3061 = vmatprep.subr.mxu0 0.0
  %3062 = vmatpush1.msra.mxu0 0.0
  %3063 = vmatprep.subr.mxu0 0.0
  %3064 = vmatpush1.msra.mxu0 0.0
  %3065 = vmatprep.subr.mxu0 0.0
  %3066 = vmatpush1.msra.mxu0 0.0
  %3067 = vmatprep.subr.mxu0 0.0
  %3068 = vmatpush1.msra.mxu0 0.0
  %3069 = vmatprep.subr.mxu0 0.0
  %3070 = vmatpush1.msra.mxu0 0.0
  %3071 = vmatprep.subr.mxu0 0.0
  %3072 = vmatpush1.msra.mxu0 0.0
  %3073 = vmatprep.subr.mxu0 0.0
  %3074 = vmatpush1.msra.mxu0 0.0
  %3075 = vmatprep.subr.mxu0 0.0
  %3076 = vmatpush1.msra.mxu0 0.0
  %3077 = vmatprep.subr.mxu0 0.0
  %3078 = vmatpush1.msra.mxu0 0.0
  %3079 = vmatprep.subr.mxu0 0.0
  %3080 = vmatpush1.msra.mxu0 0.0
  %3081 = vmatprep.subr.mxu0 0.0
  %3082 = vmatpush1.msra.mxu0 0.0
  %3083 = vmatprep.subr.mxu0 0.0
  %3084 = vmatpush1.msra.mxu0 0.0
  %3085 = vmatprep.subr.mxu0 0.0
  %3086 = vmatpush1.msra.mxu0 0.0
  %3087 = vmatprep.subr.mxu0 0.0
  %3088 = vmatpush1.msra.mxu0 0.0
  %3089 = vmatprep.subr.mxu0 0.0
  %3090 = vmatpush1.msra.mxu0 0.0
  %3091 = vmatprep.subr.mxu0 0.0
  %3092 = vmatpush1.msra.mxu0 0.0
  %3093 = vmatprep.subr.mxu0 0.0
  %3094 = vmatpush1.msra.mxu0 0.0
  %3095 = vmatprep.subr.mxu0 0.0
  %3096 = vmatpush1.msra.mxu0 0.0
  %3097 = vmatprep.subr.mxu0 0.0
  %3098 = vmatpush1.msra.mxu0 0.0
  %3099 = vmatprep.mubr.f32.mxu0 0.0
  %3100 = vmatmul.mubr.f32.gmra.mrb[0].mxu0 %v3033
  %v3101 = vpop.f32.mrb[0].mxu0
  %v3102 = vadd.f32 0.0, %v3101
  %v3103 = vpop.f32.mrb[0].mxu0
  %3104 = vdwg.mxu0
  %v3105 = vlaneseq
  %v3106 = vshrl.u32 %v3105, 7
  %v3107 = vsub.s32 0, %v3106
  %v3108 = vrot.slane %v3102, %v3107
  %v3109 = vmul.f32 %v2943, %v3108
  %v3110 = vmul.f32 %v2944, %v3108
  %v3111 = vld [vmem:[%s6 + $0x1] sm:$0x1]
  %v3112 = vlaneseq
  %v3113 = vshrl.u32 %v3112, 7
  %v3114 = vsub.s32 0, %v3113
  %v3115 = vrot.slane %v3111, %v3114
  %v3116 = vmul.f32 %v3109, %v3115
  %v3117 = vmul.f32 %v3110, %v3115
  %v3118 = vld [vmem:[%s6 + $0x2] sm:$0x1]
  %v3119 = vlaneseq
  %v3120 = vshrl.u32 %v3119, 7
  %v3121 = vsub.s32 0, %v3120
  %v3122 = vrot.slane %v3118, %v3121
  %v3123 = vadd.f32 %v3116, %v3122
  %v3124 = vadd.f32 %v3117, %v3122
  %v3125 = vld [vmem:[%s9] sm:$0xff]
  %v3126 = vld [vmem:[%s9 + $0x8] sm:$0xff]
  %v3127 = vld [vmem:[%s9 + $0x10] sm:$0xff]
  %v3128 = vld [vmem:[%s9 + $0x18] sm:$0xff]
  %v3129 = vld [vmem:[%s9 + $0x20] sm:$0xff]
  %v3130 = vld [vmem:[%s9 + $0x28] sm:$0xff]
  %v3131 = vld [vmem:[%s9 + $0x30] sm:$0xff]
  %v3132 = vld [vmem:[%s9 + $0x38] sm:$0xff]
  %v3133 = vld [vmem:[%s9 + $0x40] sm:$0xff]
  %v3134 = vld [vmem:[%s9 + $0x48] sm:$0xff]
  %s3135 = scalar_lea.vmem %s9, 80
  %v3136 = vld [vmem:[%s3135] sm:$0xff]
  %v3137 = vld [vmem:[%s3135 + $0x8] sm:$0xff]
  %v3138 = vld [vmem:[%s3135 + $0x10] sm:$0xff]
  %v3139 = vld [vmem:[%s3135 + $0x18] sm:$0xff]
  %v3140 = vld [vmem:[%s3135 + $0x20] sm:$0xff]
  %v3141 = vld [vmem:[%s3135 + $0x28] sm:$0xff]
  %v3142 = vld [vmem:[%s3135 + $0x30] sm:$0xff]
  %v3143 = vld [vmem:[%s3135 + $0x38] sm:$0xff]
  %v3144 = vld [vmem:[%s3135 + $0x40] sm:$0xff]
  %v3145 = vld [vmem:[%s3135 + $0x48] sm:$0xff]
  %v3147 = vrot.slane %v3123, 2
  %v3148 = vsel %vm2768, %v3147, 0
  %3150 = vmatprep.subr.mxu0 0.0
  %3151 = vmatpush1.msra.mxu0 %v3136
  %3152 = vmatprep.subr.mxu0 0.0
  %3153 = vmatpush1.msra.mxu0 %v3137
  %3154 = vmatprep.subr.mxu0 0.0
  %3155 = vmatpush1.msra.mxu0 %v3138
  %3156 = vmatprep.subr.mxu0 0.0
  %3157 = vmatpush1.msra.mxu0 %v3139
  %3158 = vmatprep.subr.mxu0 0.0
  %3159 = vmatpush1.msra.mxu0 %v3140
  %3160 = vmatprep.subr.mxu0 0.0
  %3161 = vmatpush1.msra.mxu0 %v3141
  %3162 = vmatprep.subr.mxu0 0.0
  %3163 = vmatpush1.msra.mxu0 %v3142
  %3164 = vmatprep.subr.mxu0 0.0
  %3165 = vmatpush1.msra.mxu0 %v3143
  %3166 = vmatprep.subr.mxu0 0.0
  %3167 = vmatpush1.msra.mxu0 %v3144
  %3168 = vmatprep.subr.mxu0 0.0
  %3169 = vmatpush1.msra.mxu0 %v3145
  %3170 = vmatprep.subr.mxu0 0.0
  %3171 = vmatpush1.msra.mxu0 0.0
  %3172 = vmatprep.subr.mxu0 0.0
  %3173 = vmatpush1.msra.mxu0 0.0
  %3174 = vmatprep.subr.mxu0 0.0
  %3175 = vmatpush1.msra.mxu0 0.0
  %3176 = vmatprep.subr.mxu0 0.0
  %3177 = vmatpush1.msra.mxu0 0.0
  %3178 = vmatprep.subr.mxu0 0.0
  %3179 = vmatpush1.msra.mxu0 0.0
  %3180 = vmatprep.subr.mxu0 0.0
  %3181 = vmatpush1.msra.mxu0 0.0
  %3182 = vmatprep.subr.mxu0 0.0
  %3183 = vmatpush1.msra.mxu0 0.0
  %3184 = vmatprep.subr.mxu0 0.0
  %3185 = vmatpush1.msra.mxu0 0.0
  %3186 = vmatprep.subr.mxu0 0.0
  %3187 = vmatpush1.msra.mxu0 0.0
  %3188 = vmatprep.subr.mxu0 0.0
  %3189 = vmatpush1.msra.mxu0 0.0
  %3190 = vmatprep.subr.mxu0 0.0
  %3191 = vmatpush1.msra.mxu0 0.0
  %3192 = vmatprep.subr.mxu0 0.0
  %3193 = vmatpush1.msra.mxu0 0.0
  %3194 = vmatprep.subr.mxu0 0.0
  %3195 = vmatpush1.msra.mxu0 0.0
  %3196 = vmatprep.subr.mxu0 0.0
  %3197 = vmatpush1.msra.mxu0 0.0
  %3198 = vmatprep.subr.mxu0 0.0
  %3199 = vmatpush1.msra.mxu0 0.0
  %3200 = vmatprep.subr.mxu0 0.0
  %3201 = vmatpush1.msra.mxu0 0.0
  %3202 = vmatprep.subr.mxu0 0.0
  %3203 = vmatpush1.msra.mxu0 0.0
  %3204 = vmatprep.subr.mxu0 0.0
  %3205 = vmatpush1.msra.mxu0 0.0
  %3206 = vmatprep.subr.mxu0 0.0
  %3207 = vmatpush1.msra.mxu0 0.0
  %3208 = vmatprep.subr.mxu0 0.0
  %3209 = vmatpush1.msra.mxu0 0.0
  %3210 = vmatprep.subr.mxu0 0.0
  %3211 = vmatpush1.msra.mxu0 0.0
  %3212 = vmatprep.subr.mxu0 0.0
  %3213 = vmatpush1.msra.mxu0 0.0
  %3214 = vmatprep.mubr.f32.mxu0 0.0
  %3215 = vmatmul.mubr.f32.gmra.mrb[0].mxu0 %v3148
  %v3216 = vpop.f32.mrb[0].mxu0
  %v3217 = vadd.f32 0.0, %v3216
  %v3218 = vpop.f32.mrb[0].mxu0
  %3219 = vdwg.mxu0
  %v3220 = vsel %vm2768, %v3123, 0
  %3222 = vmatprep.subr.mxu0 0.0
  %3223 = vmatpush1.msra.mxu0 %v3125
  %3224 = vmatprep.subr.mxu0 0.0
  %3225 = vmatpush1.msra.mxu0 %v3126
  %3226 = vmatprep.subr.mxu0 0.0
  %3227 = vmatpush1.msra.mxu0 %v3127
  %3228 = vmatprep.subr.mxu0 0.0
  %3229 = vmatpush1.msra.mxu0 %v3128
  %3230 = vmatprep.subr.mxu0 0.0
  %3231 = vmatpush1.msra.mxu0 %v3129
  %3232 = vmatprep.subr.mxu0 0.0
  %3233 = vmatpush1.msra.mxu0 %v3130
  %3234 = vmatprep.subr.mxu0 0.0
  %3235 = vmatpush1.msra.mxu0 %v3131
  %3236 = vmatprep.subr.mxu0 0.0
  %3237 = vmatpush1.msra.mxu0 %v3132
  %3238 = vmatprep.subr.mxu0 0.0
  %3239 = vmatpush1.msra.mxu0 %v3133
  %3240 = vmatprep.subr.mxu0 0.0
  %3241 = vmatpush1.msra.mxu0 %v3134
  %3242 = vmatprep.subr.mxu0 0.0
  %3243 = vmatpush1.msra.mxu0 0.0
  %3244 = vmatprep.subr.mxu0 0.0
  %3245 = vmatpush1.msra.mxu0 0.0
  %3246 = vmatprep.subr.mxu0 0.0
  %3247 = vmatpush1.msra.mxu0 0.0
  %3248 = vmatprep.subr.mxu0 0.0
  %3249 = vmatpush1.msra.mxu0 0.0
  %3250 = vmatprep.subr.mxu0 0.0
  %3251 = vmatpush1.msra.mxu0 0.0
  %3252 = vmatprep.subr.mxu0 0.0
  %3253 = vmatpush1.msra.mxu0 0.0
  %3254 = vmatprep.subr.mxu0 0.0
  %3255 = vmatpush1.msra.mxu0 0.0
  %3256 = vmatprep.subr.mxu0 0.0
  %3257 = vmatpush1.msra.mxu0 0.0
  %3258 = vmatprep.subr.mxu0 0.0
  %3259 = vmatpush1.msra.mxu0 0.0
  %3260 = vmatprep.subr.mxu0 0.0
  %3261 = vmatpush1.msra.mxu0 0.0
  %3262 = vmatprep.subr.mxu0 0.0
  %3263 = vmatpush1.msra.mxu0 0.0
  %3264 = vmatprep.subr.mxu0 0.0
  %3265 = vmatpush1.msra.mxu0 0.0
  %3266 = vmatprep.subr.mxu0 0.0
  %3267 = vmatpush1.msra.mxu0 0.0
  %3268 = vmatprep.subr.mxu0 0.0
  %3269 = vmatpush1.msra.mxu0 0.0
  %3270 = vmatprep.subr.mxu0 0.0
  %3271 = vmatpush1.msra.mxu0 0.0
  %3272 = vmatprep.subr.mxu0 0.0
  %3273 = vmatpush1.msra.mxu0 0.0
  %3274 = vmatprep.subr.mxu0 0.0
  %3275 = vmatpush1.msra.mxu0 0.0
  %3276 = vmatprep.subr.mxu0 0.0
  %3277 = vmatpush1.msra.mxu0 0.0
  %3278 = vmatprep.subr.mxu0 0.0
  %3279 = vmatpush1.msra.mxu0 0.0
  %3280 = vmatprep.subr.mxu0 0.0
  %3281 = vmatpush1.msra.mxu0 0.0
  %3282 = vmatprep.subr.mxu0 0.0
  %3283 = vmatpush1.msra.mxu0 0.0
  %3284 = vmatprep.subr.mxu0 0.0
  %3285 = vmatpush1.msra.mxu0 0.0
  %3286 = vmatprep.mubr.f32.mxu0 0.0
  %3287 = vmatmul.mubr.f32.gmra.mrb[0].mxu0 %v3220
  %v3288 = vpop.f32.mrb[0].mxu0
  %v3289 = vadd.f32 %v3217, %v3288
  %v3290 = vpop.f32.mrb[0].mxu0
  %3291 = vdwg.mxu0
  %s3292 = scalar_lea.vmem %s9, 160
  %v3293 = vld [vmem:[%s3292] sm:$0xff]
  %v3294 = vld [vmem:[%s3292 + $0x8] sm:$0xff]
  %v3295 = vld [vmem:[%s3292 + $0x10] sm:$0xff]
  %v3296 = vld [vmem:[%s3292 + $0x18] sm:$0xff]
  %v3297 = vld [vmem:[%s3292 + $0x20] sm:$0xff]
  %v3298 = vld [vmem:[%s3292 + $0x28] sm:$0xff]
  %v3299 = vld [vmem:[%s3292 + $0x30] sm:$0xff]
  %v3300 = vld [vmem:[%s3292 + $0x38] sm:$0xff]
  %v3301 = vld [vmem:[%s3292 + $0x40] sm:$0xff]
  %v3302 = vld [vmem:[%s3292 + $0x48] sm:$0xff]
  %v3303 = vrot.slane %v3123, 4
  %v3304 = vsel %vm2768, %v3303, 0
  %3306 = vmatprep.subr.mxu0 0.0
  %3307 = vmatpush1.msra.mxu0 %v3293
  %3308 = vmatprep.subr.mxu0 0.0
  %3309 = vmatpush1.msra.mxu0 %v3294
  %3310 = vmatprep.subr.mxu0 0.0
  %3311 = vmatpush1.msra.mxu0 %v3295
  %3312 = vmatprep.subr.mxu0 0.0
  %3313 = vmatpush1.msra.mxu0 %v3296
  %3314 = vmatprep.subr.mxu0 0.0
  %3315 = vmatpush1.msra.mxu0 %v3297
  %3316 = vmatprep.subr.mxu0 0.0
  %3317 = vmatpush1.msra.mxu0 %v3298
  %3318 = vmatprep.subr.mxu0 0.0
  %3319 = vmatpush1.msra.mxu0 %v3299
  %3320 = vmatprep.subr.mxu0 0.0
  %3321 = vmatpush1.msra.mxu0 %v3300
  %3322 = vmatprep.subr.mxu0 0.0
  %3323 = vmatpush1.msra.mxu0 %v3301
  %3324 = vmatprep.subr.mxu0 0.0
  %3325 = vmatpush1.msra.mxu0 %v3302
  %3326 = vmatprep.subr.mxu0 0.0
  %3327 = vmatpush1.msra.mxu0 0.0
  %3328 = vmatprep.subr.mxu0 0.0
  %3329 = vmatpush1.msra.mxu0 0.0
  %3330 = vmatprep.subr.mxu0 0.0
  %3331 = vmatpush1.msra.mxu0 0.0
  %3332 = vmatprep.subr.mxu0 0.0
  %3333 = vmatpush1.msra.mxu0 0.0
  %3334 = vmatprep.subr.mxu0 0.0
  %3335 = vmatpush1.msra.mxu0 0.0
  %3336 = vmatprep.subr.mxu0 0.0
  %3337 = vmatpush1.msra.mxu0 0.0
  %3338 = vmatprep.subr.mxu0 0.0
  %3339 = vmatpush1.msra.mxu0 0.0
  %3340 = vmatprep.subr.mxu0 0.0
  %3341 = vmatpush1.msra.mxu0 0.0
  %3342 = vmatprep.subr.mxu0 0.0
  %3343 = vmatpush1.msra.mxu0 0.0
  %3344 = vmatprep.subr.mxu0 0.0
  %3345 = vmatpush1.msra.mxu0 0.0
  %3346 = vmatprep.subr.mxu0 0.0
  %3347 = vmatpush1.msra.mxu0 0.0
  %3348 = vmatprep.subr.mxu0 0.0
  %3349 = vmatpush1.msra.mxu0 0.0
  %3350 = vmatprep.subr.mxu0 0.0
  %3351 = vmatpush1.msra.mxu0 0.0
  %3352 = vmatprep.subr.mxu0 0.0
  %3353 = vmatpush1.msra.mxu0 0.0
  %3354 = vmatprep.subr.mxu0 0.0
  %3355 = vmatpush1.msra.mxu0 0.0
  %3356 = vmatprep.subr.mxu0 0.0
  %3357 = vmatpush1.msra.mxu0 0.0
  %3358 = vmatprep.subr.mxu0 0.0
  %3359 = vmatpush1.msra.mxu0 0.0
  %3360 = vmatprep.subr.mxu0 0.0
  %3361 = vmatpush1.msra.mxu0 0.0
  %3362 = vmatprep.subr.mxu0 0.0
  %3363 = vmatpush1.msra.mxu0 0.0
  %3364 = vmatprep.subr.mxu0 0.0
  %3365 = vmatpush1.msra.mxu0 0.0
  %3366 = vmatprep.subr.mxu0 0.0
  %3367 = vmatpush1.msra.mxu0 0.0
  %3368 = vmatprep.subr.mxu0 0.0
  %3369 = vmatpush1.msra.mxu0 0.0
  %3370 = vmatprep.mubr.f32.mxu0 0.0
  %3371 = vmatmul.mubr.f32.gmra.mrb[0].mxu0 %v3304
  %v3372 = vpop.f32.mrb[0].mxu0
  %v3373 = vadd.f32 0.0, %v3372
  %v3374 = vpop.f32.mrb[0].mxu0
  %3375 = vdwg.mxu0
  %v3376 = vadd.f32 %v3289, %v3373
  %s3377 = scalar_lea.vmem %s9, 240
  %v3378 = vld [vmem:[%s3377] sm:$0xff]
  %v3379 = vld [vmem:[%s3377 + $0x8] sm:$0xff]
  %v3380 = vld [vmem:[%s3377 + $0x10] sm:$0xff]
  %v3381 = vld [vmem:[%s3377 + $0x18] sm:$0xff]
  %v3382 = vld [vmem:[%s3377 + $0x20] sm:$0xff]
  %v3383 = vld [vmem:[%s3377 + $0x28] sm:$0xff]
  %v3384 = vld [vmem:[%s3377 + $0x30] sm:$0xff]
  %v3385 = vld [vmem:[%s3377 + $0x38] sm:$0xff]
  %v3386 = vld [vmem:[%s3377 + $0x40] sm:$0xff]
  %v3387 = vld [vmem:[%s3377 + $0x48] sm:$0xff]
  %v3388 = vrot.slane %v3123, 6
  %v3389 = vsel %vm2768, %v3388, 0
  %3391 = vmatprep.subr.mxu0 0.0
  %3392 = vmatpush1.msra.mxu0 %v3378
  %3393 = vmatprep.subr.mxu0 0.0
  %3394 = vmatpush1.msra.mxu0 %v3379
  %3395 = vmatprep.subr.mxu0 0.0
  %3396 = vmatpush1.msra.mxu0 %v3380
  %3397 = vmatprep.subr.mxu0 0.0
  %3398 = vmatpush1.msra.mxu0 %v3381
  %3399 = vmatprep.subr.mxu0 0.0
  %3400 = vmatpush1.msra.mxu0 %v3382
  %3401 = vmatprep.subr.mxu0 0.0
  %3402 = vmatpush1.msra.mxu0 %v3383
  %3403 = vmatprep.subr.mxu0 0.0
  %3404 = vmatpush1.msra.mxu0 %v3384
  %3405 = vmatprep.subr.mxu0 0.0
  %3406 = vmatpush1.msra.mxu0 %v3385
  %3407 = vmatprep.subr.mxu0 0.0
  %3408 = vmatpush1.msra.mxu0 %v3386
  %3409 = vmatprep.subr.mxu0 0.0
  %3410 = vmatpush1.msra.mxu0 %v3387
  %3411 = vmatprep.subr.mxu0 0.0
  %3412 = vmatpush1.msra.mxu0 0.0
  %3413 = vmatprep.subr.mxu0 0.0
  %3414 = vmatpush1.msra.mxu0 0.0
  %3415 = vmatprep.subr.mxu0 0.0
  %3416 = vmatpush1.msra.mxu0 0.0
  %3417 = vmatprep.subr.mxu0 0.0
  %3418 = vmatpush1.msra.mxu0 0.0
  %3419 = vmatprep.subr.mxu0 0.0
  %3420 = vmatpush1.msra.mxu0 0.0
  %3421 = vmatprep.subr.mxu0 0.0
  %3422 = vmatpush1.msra.mxu0 0.0
  %3423 = vmatprep.subr.mxu0 0.0
  %3424 = vmatpush1.msra.mxu0 0.0
  %3425 = vmatprep.subr.mxu0 0.0
  %3426 = vmatpush1.msra.mxu0 0.0
  %3427 = vmatprep.subr.mxu0 0.0
  %3428 = vmatpush1.msra.mxu0 0.0
  %3429 = vmatprep.subr.mxu0 0.0
  %3430 = vmatpush1.msra.mxu0 0.0
  %3431 = vmatprep.subr.mxu0 0.0
  %3432 = vmatpush1.msra.mxu0 0.0
  %3433 = vmatprep.subr.mxu0 0.0
  %3434 = vmatpush1.msra.mxu0 0.0
  %3435 = vmatprep.subr.mxu0 0.0
  %3436 = vmatpush1.msra.mxu0 0.0
  %3437 = vmatprep.subr.mxu0 0.0
  %3438 = vmatpush1.msra.mxu0 0.0
  %3439 = vmatprep.subr.mxu0 0.0
  %3440 = vmatpush1.msra.mxu0 0.0
  %3441 = vmatprep.subr.mxu0 0.0
  %3442 = vmatpush1.msra.mxu0 0.0
  %3443 = vmatprep.subr.mxu0 0.0
  %3444 = vmatpush1.msra.mxu0 0.0
  %3445 = vmatprep.subr.mxu0 0.0
  %3446 = vmatpush1.msra.mxu0 0.0
  %3447 = vmatprep.subr.mxu0 0.0
  %3448 = vmatpush1.msra.mxu0 0.0
  %3449 = vmatprep.subr.mxu0 0.0
  %3450 = vmatpush1.msra.mxu0 0.0
  %3451 = vmatprep.subr.mxu0 0.0
  %3452 = vmatpush1.msra.mxu0 0.0
  %3453 = vmatprep.subr.mxu0 0.0
  %3454 = vmatpush1.msra.mxu0 0.0
  %3455 = vmatprep.mubr.f32.mxu0 0.0
  %3456 = vmatmul.mubr.f32.gmra.mrb[0].mxu0 %v3389
  %v3457 = vpop.f32.mrb[0].mxu0
  %v3458 = vadd.f32 0.0, %v3457
  %v3459 = vpop.f32.mrb[0].mxu0
  %3460 = vdwg.mxu0
  %v3461 = vadd.f32 %v3376, %v3458
  %s3462 = scalar_lea.vmem %s9, 320
  %v3463 = vld [vmem:[%s3462] sm:$0xff]
  %v3464 = vld [vmem:[%s3462 + $0x8] sm:$0xff]
  %v3465 = vld [vmem:[%s3462 + $0x10] sm:$0xff]
  %v3466 = vld [vmem:[%s3462 + $0x18] sm:$0xff]
  %v3467 = vld [vmem:[%s3462 + $0x20] sm:$0xff]
  %v3468 = vld [vmem:[%s3462 + $0x28] sm:$0xff]
  %v3469 = vld [vmem:[%s3462 + $0x30] sm:$0xff]
  %v3470 = vld [vmem:[%s3462 + $0x38] sm:$0xff]
  %v3471 = vld [vmem:[%s3462 + $0x40] sm:$0xff]
  %v3472 = vld [vmem:[%s3462 + $0x48] sm:$0xff]
  %v3474 = vsel %vm2768, %v3124, 0
  %3476 = vmatprep.subr.mxu0 0.0
  %3477 = vmatpush1.msra.mxu0 %v3463
  %3478 = vmatprep.subr.mxu0 0.0
  %3479 = vmatpush1.msra.mxu0 %v3464
  %3480 = vmatprep.subr.mxu0 0.0
  %3481 = vmatpush1.msra.mxu0 %v3465
  %3482 = vmatprep.subr.mxu0 0.0
  %3483 = vmatpush1.msra.mxu0 %v3466
  %3484 = vmatprep.subr.mxu0 0.0
  %3485 = vmatpush1.msra.mxu0 %v3467
  %3486 = vmatprep.subr.mxu0 0.0
  %3487 = vmatpush1.msra.mxu0 %v3468
  %3488 = vmatprep.subr.mxu0 0.0
  %3489 = vmatpush1.msra.mxu0 %v3469
  %3490 = vmatprep.subr.mxu0 0.0
  %3491 = vmatpush1.msra.mxu0 %v3470
  %3492 = vmatprep.subr.mxu0 0.0
  %3493 = vmatpush1.msra.mxu0 %v3471
  %3494 = vmatprep.subr.mxu0 0.0
  %3495 = vmatpush1.msra.mxu0 %v3472
  %3496 = vmatprep.subr.mxu0 0.0
  %3497 = vmatpush1.msra.mxu0 0.0
  %3498 = vmatprep.subr.mxu0 0.0
  %3499 = vmatpush1.msra.mxu0 0.0
  %3500 = vmatprep.subr.mxu0 0.0
  %3501 = vmatpush1.msra.mxu0 0.0
  %3502 = vmatprep.subr.mxu0 0.0
  %3503 = vmatpush1.msra.mxu0 0.0
  %3504 = vmatprep.subr.mxu0 0.0
  %3505 = vmatpush1.msra.mxu0 0.0
  %3506 = vmatprep.subr.mxu0 0.0
  %3507 = vmatpush1.msra.mxu0 0.0
  %3508 = vmatprep.subr.mxu0 0.0
  %3509 = vmatpush1.msra.mxu0 0.0
  %3510 = vmatprep.subr.mxu0 0.0
  %3511 = vmatpush1.msra.mxu0 0.0
  %3512 = vmatprep.subr.mxu0 0.0
  %3513 = vmatpush1.msra.mxu0 0.0
  %3514 = vmatprep.subr.mxu0 0.0
  %3515 = vmatpush1.msra.mxu0 0.0
  %3516 = vmatprep.subr.mxu0 0.0
  %3517 = vmatpush1.msra.mxu0 0.0
  %3518 = vmatprep.subr.mxu0 0.0
  %3519 = vmatpush1.msra.mxu0 0.0
  %3520 = vmatprep.subr.mxu0 0.0
  %3521 = vmatpush1.msra.mxu0 0.0
  %3522 = vmatprep.subr.mxu0 0.0
  %3523 = vmatpush1.msra.mxu0 0.0
  %3524 = vmatprep.subr.mxu0 0.0
  %3525 = vmatpush1.msra.mxu0 0.0
  %3526 = vmatprep.subr.mxu0 0.0
  %3527 = vmatpush1.msra.mxu0 0.0
  %3528 = vmatprep.subr.mxu0 0.0
  %3529 = vmatpush1.msra.mxu0 0.0
  %3530 = vmatprep.subr.mxu0 0.0
  %3531 = vmatpush1.msra.mxu0 0.0
  %3532 = vmatprep.subr.mxu0 0.0
  %3533 = vmatpush1.msra.mxu0 0.0
  %3534 = vmatprep.subr.mxu0 0.0
  %3535 = vmatpush1.msra.mxu0 0.0
  %3536 = vmatprep.subr.mxu0 0.0
  %3537 = vmatpush1.msra.mxu0 0.0
  %3538 = vmatprep.subr.mxu0 0.0
  %3539 = vmatpush1.msra.mxu0 0.0
  %3540 = vmatprep.mubr.f32.mxu0 0.0
  %3541 = vmatmul.mubr.f32.gmra.mrb[0].mxu0 %v3474
  %v3542 = vpop.f32.mrb[0].mxu0
  %v3543 = vadd.f32 0.0, %v3542
  %v3544 = vpop.f32.mrb[0].mxu0
  %3545 = vdwg.mxu0
  %v3546 = vadd.f32 %v3461, %v3543
  %v3547 = vld [vmem:[%s10] sm:$0x1]
  %v3549 = vlaneseq
  %v3550 = vshrl.u32 %v3549, 7
  %v3551 = vsub.s32 0, %v3550
  %v3552 = vrot.slane %v3547, %v3551
  %v3554 = vadd.f32 %v3546, %v3552
  %v3555 = vmax.f32 %v3554, 0.0
  %v3556 = vld [vmem:[%s11] sm:$0x1]
  %v3558 = vlaneseq
  %v3559 = vshrl.u32 %v3558, 7
  %v3560 = vsub.s32 0, %v3559
  %v3561 = vrot.slane %v3556, %v3560
  %v3563 = vmul.f32 %v3555, %v3561
  %vm3564 = vcmask 975872
  %v3565 = vsel %vm3564, %v3563, 0.0
  %3566 = vadd.xlane.f32.xlu0 %v3565
  %v3567 = vpop.xlane.xlu0 %3566
  %v3568 = vld [vmem:[#allocation2] sm:$0x1]
  %v3570 = vlaneseq
  %v3571 = vshrl.u32 %v3570, 7
  %v3572 = vsub.s32 0, %v3571
  %v3573 = vrot.slane %v3568, %v3572
  %v3575 = vadd.f32 %v3567, %v3573
  %v3576 = vmax.f32 %v3575, -30.0
  %v3577 = vmin.f32 %v3576, 30.0
  %v3578 = vsub.f32 0.0, %v3577
  %v3579 = vmul.f32 %v3578, 1.442695
  %v3580 = vpow.pop %v3579
  %v3581 = vadd.f32 %v3580, 1.0
  %v3582 = vrcp.pop %v3581
  %v3583 = vmul.f32 1.0, %v3582
  %vm3584 = vcmask 1024
  %3585 = vst.msk [vmem:[%s13] sm:$0x3] %vm3584, %v3583
  // Predicated region
  $region54: #{dnn_forward.1} parent=0 // pred_check
    _
  $region55: #{dnn_forward.1} parent=0 // pred_check_branch
    %3587 = sbr.rel (0) target = $region57
  $region56: #{dnn_forward.1} parent=0 // pred_region
    _
  $region57: #{dnn_forward.1} parent=0 // pred_fallthru
    _
  // Predicated region
  $region58: #{dnn_forward.1} parent=0 // pred_check
    _
  $region59: #{dnn_forward.1} parent=0 // pred_check_branch
    %3589 = sbr.rel (0) target = $region61
  $region60: #{dnn_forward.1} parent=0 // pred_region
    _
  $region61: #{dnn_forward.1} parent=0 // pred_fallthru
    _

</llo_original>
